<compile_context>
chip_gen: v7x
topology: tpu7x:2x2x1
jax: 0.10.0
libtpu: 0.0.40
codegen_flags: <defaults>
</compile_context>

<pallas_src>
import functools

import jax
import jax.numpy as jnp
from jax import lax
from jax.experimental import pallas as pl
from jax.experimental.pallas import tpu as pltpu


# ----------------------------------------------------------------------------
# Fused conv (+bias/BN-fold +ReLU +maxpool) kernel: ONE lane-dense GEMM/stage
# ----------------------------------------------------------------------------

def _conv_pool_kernel(cols_ref, w_ref, b_ref, o_ref, *, relu, npool, m):
    """acc(Cout, P*M) = W(Cout,K) @ cols(K, P*M); out = relu(max_p acc_p + b)."""
    acc = jnp.dot(w_ref[...], cols_ref[...],
                  preferred_element_type=jnp.float32)          # (Cout, P*M)
    if npool == 1:
        out = acc
    else:
        out = acc[:, 0:m]
        for p in range(1, npool):              # max over pool-window offsets
            out = jnp.maximum(out, acc[:, p * m:(p + 1) * m])
    out = out + b_ref[...]
    if relu:
        out = jnp.maximum(out, 0.0)
    o_ref[...] = out.astype(o_ref.dtype)


def conv_pool_gemm(cols, w_t, bias, relu, npool, m):
    """cols: (K, P*M) bf16, w_t: (Cout, K) bf16, bias: (Cout,1) f32 -> (Cout, M) bf16."""
    cout = w_t.shape[0]
    kernel = functools.partial(_conv_pool_kernel, relu=relu, npool=npool, m=m)
    # No grid: M <= 512 for every stage, so a single VMEM-resident block; a
    # grid split would only add per-step overhead with nothing to amortize.
    return pl.pallas_call(
        kernel,
        out_shape=jax.ShapeDtypeStruct((cout, m), jnp.bfloat16),
    )(cols, w_t, bias)


def conv_pool(x, w, b, pad, pool, relu=True):
    """Stride-1 conv + fused maxpool on channel-first activations.

    x: (Cin, B, H, W), w: (Cout, Cin, kh, kw) f32, b: (Cout,) f32.
    Returns (Cout, B, Hp, Wp) bf16 where (Hp, Wp) is the pooled output size.
    """
    Cin, B, H, W = x.shape
    Cout, _, kh, kw = w.shape
    ph, pw = pool
    Ho, Wo = H + 2 * pad - kh + 1, W + 2 * pad - kw + 1
    Hp, Wp = Ho // ph, Wo // pw
    xp = jnp.pad(x.astype(jnp.bfloat16), ((0, 0), (0, 0), (pad, pad), (pad, pad)))
    offsets = []
    for di in range(ph):                 # one im2col per pooling-window offset
        for dj in range(pw):
            patches = [
                xp[:, :, di + i: di + i + ph * Hp: ph,
                         dj + j: dj + j + pw * Wp: pw]
                for i in range(kh) for j in range(kw)]
            offsets.append(jnp.stack(patches, axis=1))   # (Cin, kh*kw, B, Hp, Wp)
    P = ph * pw
    M = B * Hp * Wp
    cols = jnp.stack(offsets, axis=2)                    # (Cin, kh*kw, P, B, Hp, Wp)
    cols = cols.reshape(Cin * kh * kw, P * M)            # offsets along lane axis
    w_t = w.reshape(Cout, Cin * kh * kw).astype(jnp.bfloat16)
    bias = b.reshape(Cout, 1).astype(jnp.float32)
    out = conv_pool_gemm(cols, w_t, bias, relu, P, M)    # (Cout, M) bf16
    return out.reshape(Cout, B, Hp, Wp)


# ----------------------------------------------------------------------------
# Fused BidirectionalLSTM layer kernel
#   - x-projection and output Linear hoisted off the serial recurrence
#   - single transcendental pass per step (tanh via 2*sigmoid(2x) - 1)
# ----------------------------------------------------------------------------

def _bilstm_kernel(x_ref, w_ih_ref, w_hh_ref, b_ref, w_lin_ref, b_lin_ref,
                   o_ref, gx_sc, h_sc, c_sc, hf_sc, hb_sc, *, hidden, T, B):
    """x:(T*B,In) bf16   w_ih:(In,8H) bf16 [fwd|bwd]   w_hh:(2,H,4H) bf16
    b:(1,8H) f32 (= b_ih+b_hh, [fwd|bwd])   w_lin:(2,H,Out) bf16
    b_lin:(1,Out) f32   ->   o:(T*B,Out) f32.
    Gate order along the 4H lane axis: [i | f | g | o]  (PyTorch layout)."""
    H = hidden

    # (1) Input projection for BOTH directions + biases, off the serial chain:
    #     one (T*B, In) x (In, 8H) MXU op.
    gx_sc[...] = jnp.dot(x_ref[...], w_ih_ref[...],
                         preferred_element_type=jnp.float32) + b_ref[...]

    h_sc[...] = jnp.zeros_like(h_sc)
    c_sc[...] = jnp.zeros_like(c_sc)

    # tanh(x) = 2*sigmoid(2x) - 1  ->  one sigmoid pass over all 4H lanes:
    # pre-scale g lanes by 2, then rescale/shift g lanes after the sigmoid.
    lane = lax.broadcasted_iota(jnp.int32, (B, 4 * H), 1)
    is_g = (lane >= 2 * H) & (lane < 3 * H)
    scale = jnp.where(is_g, 2.0, 1.0).astype(jnp.float32)
    shift = jnp.where(is_g, 1.0, 0.0).astype(jnp.float32)

    for t in range(T):                               # static unroll (T is small)
        for d in range(2):                           # 0 = forward, 1 = backward
            idx = t if d == 0 else (T - 1) - t
            gx = gx_sc[pl.ds(idx * B, B), pl.ds(d * 4 * H, 4 * H)]
            gates = gx + jnp.dot(h_sc[d].astype(jnp.bfloat16), w_hh_ref[d],
                                 preferred_element_type=jnp.float32)  # (B, 4H)
            sig = 1.0 / (1.0 + jnp.exp(-gates * scale))   # exact sigmoid
            act = sig * scale - shift                     # i/f/o: sigmoid, g: tanh
            i_g = act[:, 0:H]
            f_g = act[:, H:2 * H]
            g_g = act[:, 2 * H:3 * H]
            o_g = act[:, 3 * H:4 * H]
            c = f_g * c_sc[d] + i_g * g_g
            h = o_g * jnp.tanh(c)
            c_sc[d] = c
            h_sc[d] = h
            hall = hf_sc if d == 0 else hb_sc
            hall[pl.ds(idx * B, B), :] = h               # stash for the Linear

    # (2) Output Linear(2H -> Out), hoisted off the recurrence: two
    #     (T*B, H) x (H, Out) MXU ops over the whole sequence.
    o_ref[...] = (jnp.dot(hf_sc[...].astype(jnp.bfloat16), w_lin_ref[0],
                          preferred_element_type=jnp.float32)
                  + jnp.dot(hb_sc[...].astype(jnp.bfloat16), w_lin_ref[1],
                            preferred_element_type=jnp.float32)
                  + b_lin_ref[...])


def bilstm_layer(x_tbi, p, hidden):
    """BidirectionalLSTM(In, hidden, Out) on a (T, B, In) sequence -> (T, B, Out)."""
    T, B, In = x_tbi.shape
    Out = p["b_lin"].shape[0]
    w_ih = jnp.concatenate([p["fwd"]["w_ih_t"], p["bwd"]["w_ih_t"]], axis=1)  # (In, 8H)
    b = jnp.concatenate([p["fwd"]["b_ih"] + p["fwd"]["b_hh"],
                         p["bwd"]["b_ih"] + p["bwd"]["b_hh"]], axis=0)[None, :]
    w_hh = jnp.stack([p["fwd"]["w_hh_t"], p["bwd"]["w_hh_t"]], axis=0)        # (2,H,4H)
    w_lin = jnp.stack([p["w_lin_t"][:hidden], p["w_lin_t"][hidden:]], axis=0)  # (2,H,Out)
    b_lin = p["b_lin"][None, :]
    x2d = x_tbi.reshape(T * B, In).astype(jnp.bfloat16)
    kernel = functools.partial(_bilstm_kernel, hidden=hidden, T=T, B=B)
    out2d = pl.pallas_call(
        kernel,
        out_shape=jax.ShapeDtypeStruct((T * B, Out), jnp.float32),
        scratch_shapes=[pltpu.VMEM((T * B, 8 * hidden), jnp.float32),  # gates_x
                        pltpu.VMEM((2, B, hidden), jnp.float32),       # h state
                        pltpu.VMEM((2, B, hidden), jnp.float32),       # c state
                        pltpu.VMEM((T * B, hidden), jnp.float32),      # h fwd (all t)
                        pltpu.VMEM((T * B, hidden), jnp.float32)],     # h bwd (all t)
    )(x2d, w_ih.astype(jnp.bfloat16), w_hh.astype(jnp.bfloat16),
      b.astype(jnp.float32), w_lin.astype(jnp.bfloat16),
      b_lin.astype(jnp.float32))
    return out2d.reshape(T, B, Out)


# ----------------------------------------------------------------------------
# Parameters (deterministic synthetic init; shapes follow the PyTorch module)
# ----------------------------------------------------------------------------

def init_params(key, input_channel=1, output_channel=32, hidden=32):
    oc = [output_channel // 8, output_channel // 4, output_channel // 2,
          output_channel]
    keys = jax.random.split(key, 64)
    kit = iter(keys)

    def nrm(shape, scale=0.05):
        return jax.random.normal(next(kit), shape, jnp.float32) * scale

    # (cin, cout, k, has_bias, has_bn); pad / pooling are static in the forward
    cfg = [(input_channel, oc[0], 3, True, False),
           (oc[0], oc[1], 3, True, False),
           (oc[1], oc[2], 3, True, False),
           (oc[2], oc[2], 3, True, False),
           (oc[2], oc[3], 3, False, True),
           (oc[3], oc[3], 3, False, True),
           (oc[3], oc[3], 2, True, False)]
    convs = []
    for cin, cout, k, has_b, has_bn in cfg:
        entry = {"w": nrm((cout, cin, k, k)),            # PyTorch (Cout,Cin,kh,kw)
                 "b": nrm((cout,)) if has_b else jnp.zeros((cout,), jnp.float32)}
        if has_bn:
            entry["bn_gamma"] = 1.0 + nrm((cout,), 0.1)
            entry["bn_beta"] = nrm((cout,), 0.1)
            entry["bn_mean"] = jnp.zeros((cout,), jnp.float32)
            entry["bn_var"] = jnp.ones((cout,), jnp.float32)
        convs.append(entry)

    def lstm_dir(in_sz, h):
        return {"w_ih_t": nrm((in_sz, 4 * h)),   # = W_ih^T
                "w_hh_t": nrm((h, 4 * h)),       # = W_hh^T
                "b_ih": nrm((4 * h,)),
                "b_hh": nrm((4 * h,))}

    def bilstm(in_sz, h, out_sz):
        return {"fwd": lstm_dir(in_sz, h), "bwd": lstm_dir(in_sz, h),
                "w_lin_t": nrm((2 * h, out_sz)), "b_lin": nrm((out_sz,))}

    return {"convs": convs,
            "bilstm1": bilstm(oc[3], hidden, hidden),
            "bilstm2": bilstm(hidden, hidden, hidden)}


# ----------------------------------------------------------------------------
# Encoder forward
# ----------------------------------------------------------------------------

_CONV_PADS = (1, 1, 1, 1, 1, 1, 0)
_CONV_POOLS = ((2, 2), (2, 2), (1, 1), (2, 1), (1, 1), (2, 1), (1, 1))


def encoder_forward(x_nchw, params, hidden=32):
    # TODO(synk): TPS_SpatialTransformerNetwork not implemented (opt.Transformation='None').
    x = jnp.transpose(x_nchw, (1, 0, 2, 3)).astype(jnp.float32)   # (Cin, B, H, W)

    # VGG_FeatureExtractor (conv + BN-fold + ReLU + fused maxpool per stage)
    for entry, pad, pool in zip(params["convs"], _CONV_PADS, _CONV_POOLS):
        w, b = entry["w"], entry["b"]
        if "bn_gamma" in entry:       # fold eval-mode BatchNorm2d into the conv
            scale = entry["bn_gamma"] / jnp.sqrt(entry["bn_var"] + 1e-5)
            w = w * scale[:, None, None, None]
            b = entry["bn_beta"] - entry["bn_mean"] * scale
        x = conv_pool(x, w, b, pad, pool, relu=True)

    # AdaptiveAvgPool2d((None, 1)) on permute(0,3,1,2) + squeeze(3)  ==  mean
    # over image height -> sequence (T=W, B, C).  (H is 1 here; trivial mean.)
    visual = jnp.transpose(jnp.mean(x.astype(jnp.float32), axis=2), (2, 1, 0))

    # SequenceModeling: two fused BidirectionalLSTM layers
    seq = bilstm_layer(visual, params["bilstm1"], hidden)          # (T, B, H)
    seq = bilstm_layer(seq, params["bilstm2"], hidden)             # (T, B, H)
    return jnp.transpose(seq, (1, 0, 2))                           # (B, T, H)


if __name__ == "__main__":
    key = jax.random.PRNGKey(0)
    kx, kp = jax.random.split(key)
    B, Cin, imgH, imgW = 2, 1, 32, 32
    output_channel, hidden = 32, 32

    x = jax.random.normal(kx, (B, Cin, imgH, imgW), jnp.float32)
    params = init_params(kp, input_channel=Cin, output_channel=output_channel,
                         hidden=hidden)

    fwd = jax.jit(functools.partial(encoder_forward, hidden=hidden))
    out = jax.block_until_ready(fwd(x, params))

    T_expected = imgW // 4 - 1   # width /4 by the 2x2 pools, then 2x2 valid conv
    assert out.shape == (B, T_expected, hidden), out.shape
    assert bool(jnp.all(jnp.isfinite(out)))
    print("KERNEL_OK")
</pallas_src>

<mosaic_0001>
module attributes {stable_mosaic.version = 11 : i64} {
  func.func @_conv_pool_kernel(%arg0: memref<9x2048xbf16, #tpu.memory_space<vmem>>, %arg1: memref<4x9xbf16, #tpu.memory_space<vmem>>, %arg2: memref<4x1xf32, #tpu.memory_space<vmem>>, %arg3: memref<4x512xbf16, #tpu.memory_space<vmem>>) attributes {dimension_semantics = [], scalar_prefetch = 0 : i64, scratch_operands = 0 : i64, tpu.core_type = #tpu.core_type<tc>} {
    %c0 = arith.constant 0 : index
    %c0_0 = arith.constant 0 : index
    %0 = vector.load %arg1[%c0, %c0_0] : memref<4x9xbf16, #tpu.memory_space<vmem>>, vector<4x9xbf16>
    %c0_1 = arith.constant 0 : index
    %c0_2 = arith.constant 0 : index
    %1 = vector.load %arg0[%c0_1, %c0_2] : memref<9x2048xbf16, #tpu.memory_space<vmem>>, vector<9x2048xbf16>
    %cst = arith.constant dense<0.000000e+00> : vector<4x2048xf32>
    %2 = tpu.matmul %0, %1, %cst {dimension_numbers = #tpu.dot_dimension_numbers<[1], [0], [0], [1], [0, 0, 1, 1], [], []>} : vector<4x9xbf16>, vector<9x2048xbf16>, vector<4x2048xf32> -> vector<4x2048xf32>
    %3 = vector.extract_strided_slice %2 {offsets = [0, 0], sizes = [4, 512], strides = [1, 1]} : vector<4x2048xf32> to vector<4x512xf32>
    %4 = vector.extract_strided_slice %2 {offsets = [0, 512], sizes = [4, 512], strides = [1, 1]} : vector<4x2048xf32> to vector<4x512xf32>
    %5 = arith.maximumf %3, %4 : vector<4x512xf32>
    %6 = vector.extract_strided_slice %2 {offsets = [0, 1024], sizes = [4, 512], strides = [1, 1]} : vector<4x2048xf32> to vector<4x512xf32>
    %7 = arith.maximumf %5, %6 : vector<4x512xf32>
    %8 = vector.extract_strided_slice %2 {offsets = [0, 1536], sizes = [4, 512], strides = [1, 1]} : vector<4x2048xf32> to vector<4x512xf32>
    %9 = arith.maximumf %7, %8 : vector<4x512xf32>
    %c0_3 = arith.constant 0 : index
    %c0_4 = arith.constant 0 : index
    %10 = vector.load %arg2[%c0_3, %c0_4] : memref<4x1xf32, #tpu.memory_space<vmem>>, vector<4x1xf32>
    %11 = vector.broadcast %10 : vector<4x1xf32> to vector<4x512xf32>
    %12 = arith.addf %9, %11 : vector<4x512xf32>
    %cst_5 = arith.constant 0.000000e+00 : f32
    %13 = vector.broadcast %cst_5 : f32 to vector<4x512xf32>
    %14 = arith.maximumf %12, %13 : vector<4x512xf32>
    %15 = arith.truncf %14 : vector<4x512xf32> to vector<4x512xbf16>
    %c0_6 = arith.constant 0 : index
    %c0_7 = arith.constant 0 : index
    %16 = vector.load %arg3[%c0_6, %c0_7] : memref<4x512xbf16, #tpu.memory_space<vmem>>, vector<4x512xbf16>
    tpu.vector_store %arg3[%c0_6, %c0_7], %15 {strides = array<i32>} : memref<4x512xbf16, #tpu.memory_space<vmem>>, vector<4x512xbf16>,
    return
  }
}

module attributes {stable_mosaic.version = 11 : i64} {
  func.func @_conv_pool_kernel(%arg0: memref<36x512xbf16, #tpu.memory_space<vmem>>, %arg1: memref<8x36xbf16, #tpu.memory_space<vmem>>, %arg2: memref<8x1xf32, #tpu.memory_space<vmem>>, %arg3: memref<8x128xbf16, #tpu.memory_space<vmem>>) attributes {dimension_semantics = [], scalar_prefetch = 0 : i64, scratch_operands = 0 : i64, tpu.core_type = #tpu.core_type<tc>} {
    %c0 = arith.constant 0 : index
    %c0_0 = arith.constant 0 : index
    %0 = vector.load %arg1[%c0, %c0_0] : memref<8x36xbf16, #tpu.memory_space<vmem>>, vector<8x36xbf16>
    %c0_1 = arith.constant 0 : index
    %c0_2 = arith.constant 0 : index
    %1 = vector.load %arg0[%c0_1, %c0_2] : memref<36x512xbf16, #tpu.memory_space<vmem>>, vector<36x512xbf16>
    %cst = arith.constant dense<0.000000e+00> : vector<8x512xf32>
    %2 = tpu.matmul %0, %1, %cst {dimension_numbers = #tpu.dot_dimension_numbers<[1], [0], [0], [1], [0, 0, 1, 1], [], []>} : vector<8x36xbf16>, vector<36x512xbf16>, vector<8x512xf32> -> vector<8x512xf32>
    %3 = vector.extract_strided_slice %2 {offsets = [0, 0], sizes = [8, 128], strides = [1, 1]} : vector<8x512xf32> to vector<8x128xf32>
    %4 = vector.extract_strided_slice %2 {offsets = [0, 128], sizes = [8, 128], strides = [1, 1]} : vector<8x512xf32> to vector<8x128xf32>
    %5 = arith.maximumf %3, %4 : vector<8x128xf32>
    %6 = vector.extract_strided_slice %2 {offsets = [0, 256], sizes = [8, 128], strides = [1, 1]} : vector<8x512xf32> to vector<8x128xf32>
    %7 = arith.maximumf %5, %6 : vector<8x128xf32>
    %8 = vector.extract_strided_slice %2 {offsets = [0, 384], sizes = [8, 128], strides = [1, 1]} : vector<8x512xf32> to vector<8x128xf32>
    %9 = arith.maximumf %7, %8 : vector<8x128xf32>
    %c0_3 = arith.constant 0 : index
    %c0_4 = arith.constant 0 : index
    %10 = vector.load %arg2[%c0_3, %c0_4] : memref<8x1xf32, #tpu.memory_space<vmem>>, vector<8x1xf32>
    %11 = vector.broadcast %10 : vector<8x1xf32> to vector<8x128xf32>
    %12 = arith.addf %9, %11 : vector<8x128xf32>
    %cst_5 = arith.constant 0.000000e+00 : f32
    %13 = vector.broadcast %cst_5 : f32 to vector<8x128xf32>
    %14 = arith.maximumf %12, %13 : vector<8x128xf32>
    %15 = arith.truncf %14 : vector<8x128xf32> to vector<8x128xbf16>
    %c0_6 = arith.constant 0 : index
    %c0_7 = arith.constant 0 : index
    %16 = vector.load %arg3[%c0_6, %c0_7] : memref<8x128xbf16, #tpu.memory_space<vmem>>, vector<8x128xbf16>
    tpu.vector_store %arg3[%c0_6, %c0_7], %15 {strides = array<i32>} : memref<8x128xbf16, #tpu.memory_space<vmem>>, vector<8x128xbf16>,
    return
  }
}

module attributes {stable_mosaic.version = 11 : i64} {
  func.func @_conv_pool_kernel(%arg0: memref<72x128xbf16, #tpu.memory_space<vmem>>, %arg1: memref<16x72xbf16, #tpu.memory_space<vmem>>, %arg2: memref<16x1xf32, #tpu.memory_space<vmem>>, %arg3: memref<16x128xbf16, #tpu.memory_space<vmem>>) attributes {dimension_semantics = [], scalar_prefetch = 0 : i64, scratch_operands = 0 : i64, tpu.core_type = #tpu.core_type<tc>} {
    %c0 = arith.constant 0 : index
    %c0_0 = arith.constant 0 : index
    %0 = vector.load %arg1[%c0, %c0_0] : memref<16x72xbf16, #tpu.memory_space<vmem>>, vector<16x72xbf16>
    %c0_1 = arith.constant 0 : index
    %c0_2 = arith.constant 0 : index
    %1 = vector.load %arg0[%c0_1, %c0_2] : memref<72x128xbf16, #tpu.memory_space<vmem>>, vector<72x128xbf16>
    %cst = arith.constant dense<0.000000e+00> : vector<16x128xf32>
    %2 = tpu.matmul %0, %1, %cst {dimension_numbers = #tpu.dot_dimension_numbers<[1], [0], [0], [1], [0, 0, 1, 1], [], []>} : vector<16x72xbf16>, vector<72x128xbf16>, vector<16x128xf32> -> vector<16x128xf32>
    %c0_3 = arith.constant 0 : index
    %c0_4 = arith.constant 0 : index
    %3 = vector.load %arg2[%c0_3, %c0_4] : memref<16x1xf32, #tpu.memory_space<vmem>>, vector<16x1xf32>
    %4 = vector.broadcast %3 : vector<16x1xf32> to vector<16x128xf32>
    %5 = arith.addf %2, %4 : vector<16x128xf32>
    %cst_5 = arith.constant 0.000000e+00 : f32
    %6 = vector.broadcast %cst_5 : f32 to vector<16x128xf32>
    %7 = arith.maximumf %5, %6 : vector<16x128xf32>
    %8 = arith.truncf %7 : vector<16x128xf32> to vector<16x128xbf16>
    %c0_6 = arith.constant 0 : index
    %c0_7 = arith.constant 0 : index
    %9 = vector.load %arg3[%c0_6, %c0_7] : memref<16x128xbf16, #tpu.memory_space<vmem>>, vector<16x128xbf16>
    tpu.vector_store %arg3[%c0_6, %c0_7], %8 {strides = array<i32>} : memref<16x128xbf16, #tpu.memory_space<vmem>>, vector<16x128xbf16>,
    return
  }
}

module attributes {stable_mosaic.version = 11 : i64} {
  func.func @_conv_pool_kernel(%arg0: memref<144x128xbf16, #tpu.memory_space<vmem>>, %arg1: memref<16x144xbf16, #tpu.memory_space<vmem>>, %arg2: memref<16x1xf32, #tpu.memory_space<vmem>>, %arg3: memref<16x64xbf16, #tpu.memory_space<vmem>>) attributes {dimension_semantics = [], scalar_prefetch = 0 : i64, scratch_operands = 0 : i64, tpu.core_type = #tpu.core_type<tc>} {
    %c0 = arith.constant 0 : index
    %c0_0 = arith.constant 0 : index
    %0 = vector.load %arg1[%c0, %c0_0] : memref<16x144xbf16, #tpu.memory_space<vmem>>, vector<16x144xbf16>
    %c0_1 = arith.constant 0 : index
    %c0_2 = arith.constant 0 : index
    %1 = vector.load %arg0[%c0_1, %c0_2] : memref<144x128xbf16, #tpu.memory_space<vmem>>, vector<144x128xbf16>
    %cst = arith.constant dense<0.000000e+00> : vector<16x128xf32>
    %2 = tpu.matmul %0, %1, %cst {dimension_numbers = #tpu.dot_dimension_numbers<[1], [0], [0], [1], [0, 0, 1, 1], [], []>} : vector<16x144xbf16>, vector<144x128xbf16>, vector<16x128xf32> -> vector<16x128xf32>
    %3 = vector.extract_strided_slice %2 {offsets = [0, 0], sizes = [16, 64], strides = [1, 1]} : vector<16x128xf32> to vector<16x64xf32>
    %4 = vector.extract_strided_slice %2 {offsets = [0, 64], sizes = [16, 64], strides = [1, 1]} : vector<16x128xf32> to vector<16x64xf32>
    %5 = arith.maximumf %3, %4 : vector<16x64xf32>
    %c0_3 = arith.constant 0 : index
    %c0_4 = arith.constant 0 : index
    %6 = vector.load %arg2[%c0_3, %c0_4] : memref<16x1xf32, #tpu.memory_space<vmem>>, vector<16x1xf32>
    %7 = vector.broadcast %6 : vector<16x1xf32> to vector<16x64xf32>
    %8 = arith.addf %5, %7 : vector<16x64xf32>
    %cst_5 = arith.constant 0.000000e+00 : f32
    %9 = vector.broadcast %cst_5 : f32 to vector<16x64xf32>
    %10 = arith.maximumf %8, %9 : vector<16x64xf32>
    %11 = arith.truncf %10 : vector<16x64xf32> to vector<16x64xbf16>
    %c0_6 = arith.constant 0 : index
    %c0_7 = arith.constant 0 : index
    %12 = vector.load %arg3[%c0_6, %c0_7] : memref<16x64xbf16, #tpu.memory_space<vmem>>, vector<16x64xbf16>
    tpu.vector_store %arg3[%c0_6, %c0_7], %11 {strides = array<i32>} : memref<16x64xbf16, #tpu.memory_space<vmem>>, vector<16x64xbf16>,
    return
  }
}

module attributes {stable_mosaic.version = 11 : i64} {
  func.func @_conv_pool_kernel(%arg0: memref<144x64xbf16, #tpu.memory_space<vmem>>, %arg1: memref<32x144xbf16, #tpu.memory_space<vmem>>, %arg2: memref<32x1xf32, #tpu.memory_space<vmem>>, %arg3: memref<32x64xbf16, #tpu.memory_space<vmem>>) attributes {dimension_semantics = [], scalar_prefetch = 0 : i64, scratch_operands = 0 : i64, tpu.core_type = #tpu.core_type<tc>} {
    %c0 = arith.constant 0 : index
    %c0_0 = arith.constant 0 : index
    %0 = vector.load %arg1[%c0, %c0_0] : memref<32x144xbf16, #tpu.memory_space<vmem>>, vector<32x144xbf16>
    %c0_1 = arith.constant 0 : index
    %c0_2 = arith.constant 0 : index
    %1 = vector.load %arg0[%c0_1, %c0_2] : memref<144x64xbf16, #tpu.memory_space<vmem>>, vector<144x64xbf16>
    %cst = arith.constant dense<0.000000e+00> : vector<32x64xf32>
    %2 = tpu.matmul %0, %1, %cst {dimension_numbers = #tpu.dot_dimension_numbers<[1], [0], [0], [1], [0, 0, 1, 1], [], []>} : vector<32x144xbf16>, vector<144x64xbf16>, vector<32x64xf32> -> vector<32x64xf32>
    %c0_3 = arith.constant 0 : index
    %c0_4 = arith.constant 0 : index
    %3 = vector.load %arg2[%c0_3, %c0_4] : memref<32x1xf32, #tpu.memory_space<vmem>>, vector<32x1xf32>
    %4 = vector.broadcast %3 : vector<32x1xf32> to vector<32x64xf32>
    %5 = arith.addf %2, %4 : vector<32x64xf32>
    %cst_5 = arith.constant 0.000000e+00 : f32
    %6 = vector.broadcast %cst_5 : f32 to vector<32x64xf32>
    %7 = arith.maximumf %5, %6 : vector<32x64xf32>
    %8 = arith.truncf %7 : vector<32x64xf32> to vector<32x64xbf16>
    %c0_6 = arith.constant 0 : index
    %c0_7 = arith.constant 0 : index
    %9 = vector.load %arg3[%c0_6, %c0_7] : memref<32x64xbf16, #tpu.memory_space<vmem>>, vector<32x64xbf16>
    tpu.vector_store %arg3[%c0_6, %c0_7], %8 {strides = array<i32>} : memref<32x64xbf16, #tpu.memory_space<vmem>>, vector<32x64xbf16>,
    return
  }
}

module attributes {stable_mosaic.version = 11 : i64} {
  func.func @_conv_pool_kernel(%arg0: memref<288x64xbf16, #tpu.memory_space<vmem>>, %arg1: memref<32x288xbf16, #tpu.memory_space<vmem>>, %arg2: memref<32x1xf32, #tpu.memory_space<vmem>>, %arg3: memref<32x32xbf16, #tpu.memory_space<vmem>>) attributes {dimension_semantics = [], scalar_prefetch = 0 : i64, scratch_operands = 0 : i64, tpu.core_type = #tpu.core_type<tc>} {
    %c0 = arith.constant 0 : index
    %c0_0 = arith.constant 0 : index
    %0 = vector.load %arg1[%c0, %c0_0] : memref<32x288xbf16, #tpu.memory_space<vmem>>, vector<32x288xbf16>
    %c0_1 = arith.constant 0 : index
    %c0_2 = arith.constant 0 : index
    %1 = vector.load %arg0[%c0_1, %c0_2] : memref<288x64xbf16, #tpu.memory_space<vmem>>, vector<288x64xbf16>
    %cst = arith.constant dense<0.000000e+00> : vector<32x64xf32>
    %2 = tpu.matmul %0, %1, %cst {dimension_numbers = #tpu.dot_dimension_numbers<[1], [0], [0], [1], [0, 0, 1, 1], [], []>} : vector<32x288xbf16>, vector<288x64xbf16>, vector<32x64xf32> -> vector<32x64xf32>
    %3 = vector.extract_strided_slice %2 {offsets = [0, 0], sizes = [32, 32], strides = [1, 1]} : vector<32x64xf32> to vector<32x32xf32>
    %4 = vector.extract_strided_slice %2 {offsets = [0, 32], sizes = [32, 32], strides = [1, 1]} : vector<32x64xf32> to vector<32x32xf32>
    %5 = arith.maximumf %3, %4 : vector<32x32xf32>
    %c0_3 = arith.constant 0 : index
    %c0_4 = arith.constant 0 : index
    %6 = vector.load %arg2[%c0_3, %c0_4] : memref<32x1xf32, #tpu.memory_space<vmem>>, vector<32x1xf32>
    %7 = vector.broadcast %6 : vector<32x1xf32> to vector<32x32xf32>
    %8 = arith.addf %5, %7 : vector<32x32xf32>
    %cst_5 = arith.constant 0.000000e+00 : f32
    %9 = vector.broadcast %cst_5 : f32 to vector<32x32xf32>
    %10 = arith.maximumf %8, %9 : vector<32x32xf32>
    %11 = arith.truncf %10 : vector<32x32xf32> to vector<32x32xbf16>
    %c0_6 = arith.constant 0 : index
    %c0_7 = arith.constant 0 : index
    %12 = vector.load %arg3[%c0_6, %c0_7] : memref<32x32xbf16, #tpu.memory_space<vmem>>, vector<32x32xbf16>
    tpu.vector_store %arg3[%c0_6, %c0_7], %11 {strides = array<i32>} : memref<32x32xbf16, #tpu.memory_space<vmem>>, vector<32x32xbf16>,
    return
  }
}

module attributes {stable_mosaic.version = 11 : i64} {
  func.func @_conv_pool_kernel(%arg0: memref<128x14xbf16, #tpu.memory_space<vmem>>, %arg1: memref<32x128xbf16, #tpu.memory_space<vmem>>, %arg2: memref<32x1xf32, #tpu.memory_space<vmem>>, %arg3: memref<32x14xbf16, #tpu.memory_space<vmem>>) attributes {dimension_semantics = [], scalar_prefetch = 0 : i64, scratch_operands = 0 : i64, tpu.core_type = #tpu.core_type<tc>} {
    %c0 = arith.constant 0 : index
    %c0_0 = arith.constant 0 : index
    %0 = vector.load %arg1[%c0, %c0_0] : memref<32x128xbf16, #tpu.memory_space<vmem>>, vector<32x128xbf16>
    %c0_1 = arith.constant 0 : index
    %c0_2 = arith.constant 0 : index
    %1 = vector.load %arg0[%c0_1, %c0_2] : memref<128x14xbf16, #tpu.memory_space<vmem>>, vector<128x14xbf16>
    %cst = arith.constant dense<0.000000e+00> : vector<32x14xf32>
    %2 = tpu.matmul %0, %1, %cst {dimension_numbers = #tpu.dot_dimension_numbers<[1], [0], [0], [1], [0, 0, 1, 1], [], []>} : vector<32x128xbf16>, vector<128x14xbf16>, vector<32x14xf32> -> vector<32x14xf32>
    %c0_3 = arith.constant 0 : index
    %c0_4 = arith.constant 0 : index
    %3 = vector.load %arg2[%c0_3, %c0_4] : memref<32x1xf32, #tpu.memory_space<vmem>>, vector<32x1xf32>
    %4 = vector.broadcast %3 : vector<32x1xf32> to vector<32x14xf32>
    %5 = arith.addf %2, %4 : vector<32x14xf32>
    %cst_5 = arith.constant 0.000000e+00 : f32
    %6 = vector.broadcast %cst_5 : f32 to vector<32x14xf32>
    %7 = arith.maximumf %5, %6 : vector<32x14xf32>
    %8 = arith.truncf %7 : vector<32x14xf32> to vector<32x14xbf16>
    %c0_6 = arith.constant 0 : index
    %c0_7 = arith.constant 0 : index
    %9 = vector.load %arg3[%c0_6, %c0_7] : memref<32x14xbf16, #tpu.memory_space<vmem>>, vector<32x14xbf16>
    tpu.vector_store %arg3[%c0_6, %c0_7], %8 {strides = array<i32>} : memref<32x14xbf16, #tpu.memory_space<vmem>>, vector<32x14xbf16>,
    return
  }
}

module attributes {stable_mosaic.version = 11 : i64} {
  func.func @_bilstm_kernel(%arg0: memref<14x32xbf16, #tpu.memory_space<vmem>>, %arg1: memref<32x256xbf16, #tpu.memory_space<vmem>>, %arg2: memref<2x32x128xbf16, #tpu.memory_space<vmem>>, %arg3: memref<1x256xf32, #tpu.memory_space<vmem>>, %arg4: memref<2x32x32xbf16, #tpu.memory_space<vmem>>, %arg5: memref<1x32xf32, #tpu.memory_space<vmem>>, %arg6: memref<14x32xf32, #tpu.memory_space<vmem>>, %arg7: memref<14x256xf32, #tpu.memory_space<vmem>>, %arg8: memref<2x2x32xf32, #tpu.memory_space<vmem>>, %arg9: memref<2x2x32xf32, #tpu.memory_space<vmem>>, %arg10: memref<14x32xf32, #tpu.memory_space<vmem>>, %arg11: memref<14x32xf32, #tpu.memory_space<vmem>>) attributes {dimension_semantics = [], scalar_prefetch = 0 : i64, scratch_operands = 5 : i64, tpu.core_type = #tpu.core_type<tc>} {
    %c0 = arith.constant 0 : index
    %c0_0 = arith.constant 0 : index
    %0 = vector.load %arg0[%c0, %c0_0] : memref<14x32xbf16, #tpu.memory_space<vmem>>, vector<14x32xbf16>
    %c0_1 = arith.constant 0 : index
    %c0_2 = arith.constant 0 : index
    %1 = vector.load %arg1[%c0_1, %c0_2] : memref<32x256xbf16, #tpu.memory_space<vmem>>, vector<32x256xbf16>
    %cst = arith.constant dense<0.000000e+00> : vector<14x256xf32>
    %2 = tpu.matmul %0, %1, %cst {dimension_numbers = #tpu.dot_dimension_numbers<[1], [0], [0], [1], [0, 0, 1, 1], [], []>} : vector<14x32xbf16>, vector<32x256xbf16>, vector<14x256xf32> -> vector<14x256xf32>
    %c0_3 = arith.constant 0 : index
    %c0_4 = arith.constant 0 : index
    %3 = vector.load %arg3[%c0_3, %c0_4] : memref<1x256xf32, #tpu.memory_space<vmem>>, vector<1x256xf32>
    %4 = vector.broadcast %3 : vector<1x256xf32> to vector<14x256xf32>
    %5 = arith.addf %2, %4 : vector<14x256xf32>
    %c0_5 = arith.constant 0 : index
    %c0_6 = arith.constant 0 : index
    %6 = vector.load %arg7[%c0_5, %c0_6] : memref<14x256xf32, #tpu.memory_space<vmem>>, vector<14x256xf32>
    tpu.vector_store %arg7[%c0_5, %c0_6], %5 {strides = array<i32>} : memref<14x256xf32, #tpu.memory_space<vmem>>, vector<14x256xf32>,
    %cst_7 = arith.constant 0.000000e+00 : f32
    %7 = vector.broadcast %cst_7 : f32 to vector<2x2x32xf32>
    %c0_8 = arith.constant 0 : index
    %c0_9 = arith.constant 0 : index
    %c0_10 = arith.constant 0 : index
    %8 = vector.load %arg8[%c0_8, %c0_9, %c0_10] : memref<2x2x32xf32, #tpu.memory_space<vmem>>, vector<2x2x32xf32>
    tpu.vector_store %arg8[%c0_8, %c0_9, %c0_10], %7 {strides = array<i32>} : memref<2x2x32xf32, #tpu.memory_space<vmem>>, vector<2x2x32xf32>,
    %cst_11 = arith.constant 0.000000e+00 : f32
    %9 = vector.broadcast %cst_11 : f32 to vector<2x2x32xf32>
    %c0_12 = arith.constant 0 : index
    %c0_13 = arith.constant 0 : index
    %c0_14 = arith.constant 0 : index
    %10 = vector.load %arg9[%c0_12, %c0_13, %c0_14] : memref<2x2x32xf32, #tpu.memory_space<vmem>>, vector<2x2x32xf32>
    tpu.vector_store %arg9[%c0_12, %c0_13, %c0_14], %9 {strides = array<i32>} : memref<2x2x32xf32, #tpu.memory_space<vmem>>, vector<2x2x32xf32>,
    %11 = tpu.iota {dimensions = array<i32: 1>} : vector<2x128xi32>
    %c64_i32 = arith.constant 64 : i32
    %12 = vector.broadcast %c64_i32 : i32 to vector<2x128xi32>
    %13 = arith.cmpi sge, %11, %12 : vector<2x128xi32>
    %c96_i32 = arith.constant 96 : i32
    %14 = vector.broadcast %c96_i32 : i32 to vector<2x128xi32>
    %15 = arith.cmpi slt, %11, %14 : vector<2x128xi32>
    %16 = arith.andi %13, %15 : vector<2x128xi1>
    %cst_15 = arith.constant 2.000000e+00 : f32
    %cst_16 = arith.constant 1.000000e+00 : f32
    %17 = vector.broadcast %cst_15 : f32 to vector<2x128xf32>
    %18 = vector.broadcast %cst_16 : f32 to vector<2x128xf32>
    %19 = arith.select %16, %17, %18 : vector<2x128xi1>, vector<2x128xf32>
    %cst_17 = arith.constant 1.000000e+00 : f32
    %cst_18 = arith.constant 0.000000e+00 : f32
    %20 = vector.broadcast %cst_17 : f32 to vector<2x128xf32>
    %21 = vector.broadcast %cst_18 : f32 to vector<2x128xf32>
    %22 = arith.select %16, %20, %21 : vector<2x128xi1>, vector<2x128xf32>
    %c0_19 = arith.constant 0 : index
    %c0_20 = arith.constant 0 : index
    %23 = vector.load %arg7[%c0_19, %c0_20] : memref<14x256xf32, #tpu.memory_space<vmem>>, vector<2x128xf32>
    %c0_21 = arith.constant 0 : index
    %c0_22 = arith.constant 0 : index
    %c0_23 = arith.constant 0 : index
    %24 = vector.load %arg8[%c0_21, %c0_22, %c0_23] : memref<2x2x32xf32, #tpu.memory_space<vmem>>, vector<1x2x32xf32>
    %25 = vector.shape_cast %24 : vector<1x2x32xf32> to vector<2x32xf32>
    %26 = arith.truncf %25 : vector<2x32xf32> to vector<2x32xbf16>
    %c0_24 = arith.constant 0 : index
    %c0_25 = arith.constant 0 : index
    %c0_26 = arith.constant 0 : index
    %27 = vector.load %arg2[%c0_24, %c0_25, %c0_26] : memref<2x32x128xbf16, #tpu.memory_space<vmem>>, vector<1x32x128xbf16>
    %28 = vector.shape_cast %27 : vector<1x32x128xbf16> to vector<32x128xbf16>
    %cst_27 = arith.constant dense<0.000000e+00> : vector<2x128xf32>
    %29 = tpu.matmul %26, %28, %cst_27 {dimension_numbers = #tpu.dot_dimension_numbers<[1], [0], [0], [1], [0, 0, 1, 1], [], []>} : vector<2x32xbf16>, vector<32x128xbf16>, vector<2x128xf32> -> vector<2x128xf32>
    %30 = arith.addf %23, %29 : vector<2x128xf32>
    %cst_28 = arith.constant 0.000000e+00 : f32
    %31 = vector.broadcast %cst_28 : f32 to vector<2x128xf32>
    %32 = arith.subf %31, %30 : vector<2x128xf32>
    %33 = arith.mulf %32, %19 : vector<2x128xf32>
    %34 = math.exp %33 : vector<2x128xf32>
    %cst_29 = arith.constant 1.000000e+00 : f32
    %35 = vector.broadcast %cst_29 : f32 to vector<2x128xf32>
    %36 = arith.addf %35, %34 : vector<2x128xf32>
    %cst_30 = arith.constant 1.000000e+00 : f32
    %37 = vector.broadcast %cst_30 : f32 to vector<2x128xf32>
    %38 = arith.divf %37, %36 : vector<2x128xf32>
    %39 = arith.mulf %38, %19 : vector<2x128xf32>
    %40 = arith.subf %39, %22 : vector<2x128xf32>
    %41 = vector.extract_strided_slice %40 {offsets = [0, 0], sizes = [2, 32], strides = [1, 1]} : vector<2x128xf32> to vector<2x32xf32>
    %42 = vector.extract_strided_slice %40 {offsets = [0, 32], sizes = [2, 32], strides = [1, 1]} : vector<2x128xf32> to vector<2x32xf32>
    %43 = vector.extract_strided_slice %40 {offsets = [0, 64], sizes = [2, 32], strides = [1, 1]} : vector<2x128xf32> to vector<2x32xf32>
    %44 = vector.extract_strided_slice %40 {offsets = [0, 96], sizes = [2, 32], strides = [1, 1]} : vector<2x128xf32> to vector<2x32xf32>
    %c0_31 = arith.constant 0 : index
    %c0_32 = arith.constant 0 : index
    %c0_33 = arith.constant 0 : index
    %45 = vector.load %arg9[%c0_31, %c0_32, %c0_33] : memref<2x2x32xf32, #tpu.memory_space<vmem>>, vector<1x2x32xf32>
    %46 = vector.shape_cast %45 : vector<1x2x32xf32> to vector<2x32xf32>
    %47 = arith.mulf %42, %46 : vector<2x32xf32>
    %48 = arith.mulf %41, %43 : vector<2x32xf32>
    %49 = arith.addf %47, %48 : vector<2x32xf32>
    %50 = math.tanh %49 : vector<2x32xf32>
    %51 = arith.mulf %44, %50 : vector<2x32xf32>
    %c0_34 = arith.constant 0 : index
    %c0_35 = arith.constant 0 : index
    %c0_36 = arith.constant 0 : index
    %52 = vector.load %arg9[%c0_34, %c0_35, %c0_36] : memref<2x2x32xf32, #tpu.memory_space<vmem>>, vector<1x2x32xf32>
    %53 = vector.shape_cast %52 : vector<1x2x32xf32> to vector<2x32xf32>
    %54 = vector.shape_cast %49 : vector<2x32xf32> to vector<1x2x32xf32>
    tpu.vector_store %arg9[%c0_34, %c0_35, %c0_36], %54 {strides = array<i32>} : memref<2x2x32xf32, #tpu.memory_space<vmem>>, vector<1x2x32xf32>,
    %c0_37 = arith.constant 0 : index
    %c0_38 = arith.constant 0 : index
    %c0_39 = arith.constant 0 : index
    %55 = vector.load %arg8[%c0_37, %c0_38, %c0_39] : memref<2x2x32xf32, #tpu.memory_space<vmem>>, vector<1x2x32xf32>
    %56 = vector.shape_cast %55 : vector<1x2x32xf32> to vector<2x32xf32>
    %57 = vector.shape_cast %51 : vector<2x32xf32> to vector<1x2x32xf32>
    tpu.vector_store %arg8[%c0_37, %c0_38, %c0_39], %57 {strides = array<i32>} : memref<2x2x32xf32, #tpu.memory_space<vmem>>, vector<1x2x32xf32>,
    %c0_40 = arith.constant 0 : index
    %c0_41 = arith.constant 0 : index
    %58 = vector.load %arg10[%c0_40, %c0_41] : memref<14x32xf32, #tpu.memory_space<vmem>>, vector<2x32xf32>
    tpu.vector_store %arg10[%c0_40, %c0_41], %51 {strides = array<i32>} : memref<14x32xf32, #tpu.memory_space<vmem>>, vector<2x32xf32>,
    %c12 = arith.constant 12 : index
    %c128 = arith.constant 128 : index
    %59 = vector.load %arg7[%c12, %c128] : memref<14x256xf32, #tpu.memory_space<vmem>>, vector<2x128xf32>
    %c1 = arith.constant 1 : index
    %c0_42 = arith.constant 0 : index
    %c0_43 = arith.constant 0 : index
    %60 = vector.load %arg8[%c1, %c0_42, %c0_43] : memref<2x2x32xf32, #tpu.memory_space<vmem>>, vector<1x2x32xf32>
    %61 = vector.shape_cast %60 : vector<1x2x32xf32> to vector<2x32xf32>
    %62 = arith.truncf %61 : vector<2x32xf32> to vector<2x32xbf16>
    %c1_44 = arith.constant 1 : index
    %c0_45 = arith.constant 0 : index
    %c0_46 = arith.constant 0 : index
    %63 = vector.load %arg2[%c1_44, %c0_45, %c0_46] : memref<2x32x128xbf16, #tpu.memory_space<vmem>>, vector<1x32x128xbf16>
    %64 = vector.shape_cast %63 : vector<1x32x128xbf16> to vector<32x128xbf16>
    %cst_47 = arith.constant dense<0.000000e+00> : vector<2x128xf32>
    %65 = tpu.matmul %62, %64, %cst_47 {dimension_numbers = #tpu.dot_dimension_numbers<[1], [0], [0], [1], [0, 0, 1, 1], [], []>} : vector<2x32xbf16>, vector<32x128xbf16>, vector<2x128xf32> -> vector<2x128xf32>
    %66 = arith.addf %59, %65 : vector<2x128xf32>
    %cst_48 = arith.constant 0.000000e+00 : f32
    %67 = vector.broadcast %cst_48 : f32 to vector<2x128xf32>
    %68 = arith.subf %67, %66 : vector<2x128xf32>
    %69 = arith.mulf %68, %19 : vector<2x128xf32>
    %70 = math.exp %69 : vector<2x128xf32>
    %cst_49 = arith.constant 1.000000e+00 : f32
    %71 = vector.broadcast %cst_49 : f32 to vector<2x128xf32>
    %72 = arith.addf %71, %70 : vector<2x128xf32>
    %cst_50 = arith.constant 1.000000e+00 : f32
    %73 = vector.broadcast %cst_50 : f32 to vector<2x128xf32>
    %74 = arith.divf %73, %72 : vector<2x128xf32>
    %75 = arith.mulf %74, %19 : vector<2x128xf32>
    %76 = arith.subf %75, %22 : vector<2x128xf32>
    %77 = vector.extract_strided_slice %76 {offsets = [0, 0], sizes = [2, 32], strides = [1, 1]} : vector<2x128xf32> to vector<2x32xf32>
    %78 = vector.extract_strided_slice %76 {offsets = [0, 32], sizes = [2, 32], strides = [1, 1]} : vector<2x128xf32> to vector<2x32xf32>
    %79 = vector.extract_strided_slice %76 {offsets = [0, 64], sizes = [2, 32], strides = [1, 1]} : vector<2x128xf32> to vector<2x32xf32>
    %80 = vector.extract_strided_slice %76 {offsets = [0, 96], sizes = [2, 32], strides = [1, 1]} : vector<2x128xf32> to vector<2x32xf32>
    %c1_51 = arith.constant 1 : index
    %c0_52 = arith.constant 0 : index
    %c0_53 = arith.constant 0 : index
    %81 = vector.load %arg9[%c1_51, %c0_52, %c0_53] : memref<2x2x32xf32, #tpu.memory_space<vmem>>, vector<1x2x32xf32>
    %82 = vector.shape_cast %81 : vector<1x2x32xf32> to vector<2x32xf32>
    %83 = arith.mulf %78, %82 : vector<2x32xf32>
    %84 = arith.mulf %77, %79 : vector<2x32xf32>
    %85 = arith.addf %83, %84 : vector<2x32xf32>
    %86 = math.tanh %85 : vector<2x32xf32>
    %87 = arith.mulf %80, %86 : vector<2x32xf32>
    %c1_54 = arith.constant 1 : index
    %c0_55 = arith.constant 0 : index
    %c0_56 = arith.constant 0 : index
    %88 = vector.load %arg9[%c1_54, %c0_55, %c0_56] : memref<2x2x32xf32, #tpu.memory_space<vmem>>, vector<1x2x32xf32>
    %89 = vector.shape_cast %88 : vector<1x2x32xf32> to vector<2x32xf32>
    %90 = vector.shape_cast %85 : vector<2x32xf32> to vector<1x2x32xf32>
    tpu.vector_store %arg9[%c1_54, %c0_55, %c0_56], %90 {strides = array<i32>} : memref<2x2x32xf32, #tpu.memory_space<vmem>>, vector<1x2x32xf32>,
    %c1_57 = arith.constant 1 : index
    %c0_58 = arith.constant 0 : index
    %c0_59 = arith.constant 0 : index
    %91 = vector.load %arg8[%c1_57, %c0_58, %c0_59] : memref<2x2x32xf32, #tpu.memory_space<vmem>>, vector<1x2x32xf32>
    %92 = vector.shape_cast %91 : vector<1x2x32xf32> to vector<2x32xf32>
    %93 = vector.shape_cast %87 : vector<2x32xf32> to vector<1x2x32xf32>
    tpu.vector_store %arg8[%c1_57, %c0_58, %c0_59], %93 {strides = array<i32>} : memref<2x2x32xf32, #tpu.memory_space<vmem>>, vector<1x2x32xf32>,
    %c12_60 = arith.constant 12 : index
    %c0_61 = arith.constant 0 : index
    %94 = vector.load %arg11[%c12_60, %c0_61] : memref<14x32xf32, #tpu.memory_space<vmem>>, vector<2x32xf32>
    tpu.vector_store %arg11[%c12_60, %c0_61], %87 {strides = array<i32>} : memref<14x32xf32, #tpu.memory_space<vmem>>, vector<2x32xf32>,
    %c2 = arith.constant 2 : index
    %c0_62 = arith.constant 0 : index
    %95 = vector.load %arg7[%c2, %c0_62] : memref<14x256xf32, #tpu.memory_space<vmem>>, vector<2x128xf32>
    %c0_63 = arith.constant 0 : index
    %c0_64 = arith.constant 0 : index
    %c0_65 = arith.constant 0 : index
    %96 = vector.load %arg8[%c0_63, %c0_64, %c0_65] : memref<2x2x32xf32, #tpu.memory_space<vmem>>, vector<1x2x32xf32>
    %97 = vector.shape_cast %96 : vector<1x2x32xf32> to vector<2x32xf32>
    %98 = arith.truncf %97 : vector<2x32xf32> to vector<2x32xbf16>
    %c0_66 = arith.constant 0 : index
    %c0_67 = arith.constant 0 : index
    %c0_68 = arith.constant 0 : index
    %99 = vector.load %arg2[%c0_66, %c0_67, %c0_68] : memref<2x32x128xbf16, #tpu.memory_space<vmem>>, vector<1x32x128xbf16>
    %100 = vector.shape_cast %99 : vector<1x32x128xbf16> to vector<32x128xbf16>
    %cst_69 = arith.constant dense<0.000000e+00> : vector<2x128xf32>
    %101 = tpu.matmul %98, %100, %cst_69 {dimension_numbers = #tpu.dot_dimension_numbers<[1], [0], [0], [1], [0, 0, 1, 1], [], []>} : vector<2x32xbf16>, vector<32x128xbf16>, vector<2x128xf32> -> vector<2x128xf32>
    %102 = arith.addf %95, %101 : vector<2x128xf32>
    %cst_70 = arith.constant 0.000000e+00 : f32
    %103 = vector.broadcast %cst_70 : f32 to vector<2x128xf32>
    %104 = arith.subf %103, %102 : vector<2x128xf32>
    %105 = arith.mulf %104, %19 : vector<2x128xf32>
    %106 = math.exp %105 : vector<2x128xf32>
    %cst_71 = arith.constant 1.000000e+00 : f32
    %107 = vector.broadcast %cst_71 : f32 to vector<2x128xf32>
    %108 = arith.addf %107, %106 : vector<2x128xf32>
    %cst_72 = arith.constant 1.000000e+00 : f32
    %109 = vector.broadcast %cst_72 : f32 to vector<2x128xf32>
    %110 = arith.divf %109, %108 : vector<2x128xf32>
    %111 = arith.mulf %110, %19 : vector<2x128xf32>
    %112 = arith.subf %111, %22 : vector<2x128xf32>
    %113 = vector.extract_strided_slice %112 {offsets = [0, 0], sizes = [2, 32], strides = [1, 1]} : vector<2x128xf32> to vector<2x32xf32>
    %114 = vector.extract_strided_slice %112 {offsets = [0, 32], sizes = [2, 32], strides = [1, 1]} : vector<2x128xf32> to vector<2x32xf32>
    %115 = vector.extract_strided_slice %112 {offsets = [0, 64], sizes = [2, 32], strides = [1, 1]} : vector<2x128xf32> to vector<2x32xf32>
    %116 = vector.extract_strided_slice %112 {offsets = [0, 96], sizes = [2, 32], strides = [1, 1]} : vector<2x128xf32> to vector<2x32xf32>
    %c0_73 = arith.constant 0 : index
    %c0_74 = arith.constant 0 : index
    %c0_75 = arith.constant 0 : index
    %117 = vector.load %arg9[%c0_73, %c0_74, %c0_75] : memref<2x2x32xf32, #tpu.memory_space<vmem>>, vector<1x2x32xf32>
    %118 = vector.shape_cast %117 : vector<1x2x32xf32> to vector<2x32xf32>
    %119 = arith.mulf %114, %118 : vector<2x32xf32>
    %120 = arith.mulf %113, %115 : vector<2x32xf32>
    %121 = arith.addf %119, %120 : vector<2x32xf32>
    %122 = math.tanh %121 : vector<2x32xf32>
    %123 = arith.mulf %116, %122 : vector<2x32xf32>
    %c0_76 = arith.constant 0 : index
    %c0_77 = arith.constant 0 : index
    %c0_78 = arith.constant 0 : index
    %124 = vector.load %arg9[%c0_76, %c0_77, %c0_78] : memref<2x2x32xf32, #tpu.memory_space<vmem>>, vector<1x2x32xf32>
    %125 = vector.shape_cast %124 : vector<1x2x32xf32> to vector<2x32xf32>
    %126 = vector.shape_cast %121 : vector<2x32xf32> to vector<1x2x32xf32>
    tpu.vector_store %arg9[%c0_76, %c0_77, %c0_78], %126 {strides = array<i32>} : memref<2x2x32xf32, #tpu.memory_space<vmem>>, vector<1x2x32xf32>,
    %c0_79 = arith.constant 0 : index
    %c0_80 = arith.constant 0 : index
    %c0_81 = arith.constant 0 : index
    %127 = vector.load %arg8[%c0_79, %c0_80, %c0_81] : memref<2x2x32xf32, #tpu.memory_space<vmem>>, vector<1x2x32xf32>
    %128 = vector.shape_cast %127 : vector<1x2x32xf32> to vector<2x32xf32>
    %129 = vector.shape_cast %123 : vector<2x32xf32> to vector<1x2x32xf32>
    tpu.vector_store %arg8[%c0_79, %c0_80, %c0_81], %129 {strides = array<i32>} : memref<2x2x32xf32, #tpu.memory_space<vmem>>, vector<1x2x32xf32>,
    %c2_82 = arith.constant 2 : index
    %c0_83 = arith.constant 0 : index
    %130 = vector.load %arg10[%c2_82, %c0_83] : memref<14x32xf32, #tpu.memory_space<vmem>>, vector<2x32xf32>
    tpu.vector_store %arg10[%c2_82, %c0_83], %123 {strides = array<i32>} : memref<14x32xf32, #tpu.memory_space<vmem>>, vector<2x32xf32>,
    %c10 = arith.constant 10 : index
    %c128_84 = arith.constant 128 : index
    %131 = vector.load %arg7[%c10, %c128_84] : memref<14x256xf32, #tpu.memory_space<vmem>>, vector<2x128xf32>
    %c1_85 = arith.constant 1 : index
    %c0_86 = arith.constant 0 : index
    %c0_87 = arith.constant 0 : index
    %132 = vector.load %arg8[%c1_85, %c0_86, %c0_87] : memref<2x2x32xf32, #tpu.memory_space<vmem>>, vector<1x2x32xf32>
    %133 = vector.shape_cast %132 : vector<1x2x32xf32> to vector<2x32xf32>
    %134 = arith.truncf %133 : vector<2x32xf32> to vector<2x32xbf16>
    %c1_88 = arith.constant 1 : index
    %c0_89 = arith.constant 0 : index
    %c0_90 = arith.constant 0 : index
    %135 = vector.load %arg2[%c1_88, %c0_89, %c0_90] : memref<2x32x128xbf16, #tpu.memory_space<vmem>>, vector<1x32x128xbf16>
    %136 = vector.shape_cast %135 : vector<1x32x128xbf16> to vector<32x128xbf16>
    %cst_91 = arith.constant dense<0.000000e+00> : vector<2x128xf32>
    %137 = tpu.matmul %134, %136, %cst_91 {dimension_numbers = #tpu.dot_dimension_numbers<[1], [0], [0], [1], [0, 0, 1, 1], [], []>} : vector<2x32xbf16>, vector<32x128xbf16>, vector<2x128xf32> -> vector<2x128xf32>
    %138 = arith.addf %131, %137 : vector<2x128xf32>
    %cst_92 = arith.constant 0.000000e+00 : f32
    %139 = vector.broadcast %cst_92 : f32 to vector<2x128xf32>
    %140 = arith.subf %139, %138 : vector<2x128xf32>
    %141 = arith.mulf %140, %19 : vector<2x128xf32>
    %142 = math.exp %141 : vector<2x128xf32>
    %cst_93 = arith.constant 1.000000e+00 : f32
    %143 = vector.broadcast %cst_93 : f32 to vector<2x128xf32>
    %144 = arith.addf %143, %142 : vector<2x128xf32>
    %cst_94 = arith.constant 1.000000e+00 : f32
    %145 = vector.broadcast %cst_94 : f32 to vector<2x128xf32>
    %146 = arith.divf %145, %144 : vector<2x128xf32>
    %147 = arith.mulf %146, %19 : vector<2x128xf32>
    %148 = arith.subf %147, %22 : vector<2x128xf32>
    %149 = vector.extract_strided_slice %148 {offsets = [0, 0], sizes = [2, 32], strides = [1, 1]} : vector<2x128xf32> to vector<2x32xf32>
    %150 = vector.extract_strided_slice %148 {offsets = [0, 32], sizes = [2, 32], strides = [1, 1]} : vector<2x128xf32> to vector<2x32xf32>
    %151 = vector.extract_strided_slice %148 {offsets = [0, 64], sizes = [2, 32], strides = [1, 1]} : vector<2x128xf32> to vector<2x32xf32>
    %152 = vector.extract_strided_slice %148 {offsets = [0, 96], sizes = [2, 32], strides = [1, 1]} : vector<2x128xf32> to vector<2x32xf32>
    %c1_95 = arith.constant 1 : index
    %c0_96 = arith.constant 0 : index
    %c0_97 = arith.constant 0 : index
    %153 = vector.load %arg9[%c1_95, %c0_96, %c0_97] : memref<2x2x32xf32, #tpu.memory_space<vmem>>, vector<1x2x32xf32>
    %154 = vector.shape_cast %153 : vector<1x2x32xf32> to vector<2x32xf32>
    %155 = arith.mulf %150, %154 : vector<2x32xf32>
    %156 = arith.mulf %149, %151 : vector<2x32xf32>
    %157 = arith.addf %155, %156 : vector<2x32xf32>
    %158 = math.tanh %157 : vector<2x32xf32>
    %159 = arith.mulf %152, %158 : vector<2x32xf32>
    %c1_98 = arith.constant 1 : index
    %c0_99 = arith.constant 0 : index
    %c0_100 = arith.constant 0 : index
    %160 = vector.load %arg9[%c1_98, %c0_99, %c0_100] : memref<2x2x32xf32, #tpu.memory_space<vmem>>, vector<1x2x32xf32>
    %161 = vector.shape_cast %160 : vector<1x2x32xf32> to vector<2x32xf32>
    %162 = vector.shape_cast %157 : vector<2x32xf32> to vector<1x2x32xf32>
    tpu.vector_store %arg9[%c1_98, %c0_99, %c0_100], %162 {strides = array<i32>} : memref<2x2x32xf32, #tpu.memory_space<vmem>>, vector<1x2x32xf32>,
    %c1_101 = arith.constant 1 : index
    %c0_102 = arith.constant 0 : index
    %c0_103 = arith.constant 0 : index
    %163 = vector.load %arg8[%c1_101, %c0_102, %c0_103] : memref<2x2x32xf32, #tpu.memory_space<vmem>>, vector<1x2x32xf32>
    %164 = vector.shape_cast %163 : vector<1x2x32xf32> to vector<2x32xf32>
    %165 = vector.shape_cast %159 : vector<2x32xf32> to vector<1x2x32xf32>
    tpu.vector_store %arg8[%c1_101, %c0_102, %c0_103], %165 {strides = array<i32>} : memref<2x2x32xf32, #tpu.memory_space<vmem>>, vector<1x2x32xf32>,
    %c10_104 = arith.constant 10 : index
    %c0_105 = arith.constant 0 : index
    %166 = vector.load %arg11[%c10_104, %c0_105] : memref<14x32xf32, #tpu.memory_space<vmem>>, vector<2x32xf32>
    tpu.vector_store %arg11[%c10_104, %c0_105], %159 {strides = array<i32>} : memref<14x32xf32, #tpu.memory_space<vmem>>, vector<2x32xf32>,
    %c4 = arith.constant 4 : index
    %c0_106 = arith.constant 0 : index
    %167 = vector.load %arg7[%c4, %c0_106] : memref<14x256xf32, #tpu.memory_space<vmem>>, vector<2x128xf32>
    %c0_107 = arith.constant 0 : index
    %c0_108 = arith.constant 0 : index
    %c0_109 = arith.constant 0 : index
    %168 = vector.load %arg8[%c0_107, %c0_108, %c0_109] : memref<2x2x32xf32, #tpu.memory_space<vmem>>, vector<1x2x32xf32>
    %169 = vector.shape_cast %168 : vector<1x2x32xf32> to vector<2x32xf32>
    %170 = arith.truncf %169 : vector<2x32xf32> to vector<2x32xbf16>
    %c0_110 = arith.constant 0 : index
    %c0_111 = arith.constant 0 : index
    %c0_112 = arith.constant 0 : index
    %171 = vector.load %arg2[%c0_110, %c0_111, %c0_112] : memref<2x32x128xbf16, #tpu.memory_space<vmem>>, vector<1x32x128xbf16>
    %172 = vector.shape_cast %171 : vector<1x32x128xbf16> to vector<32x128xbf16>
    %cst_113 = arith.constant dense<0.000000e+00> : vector<2x128xf32>
    %173 = tpu.matmul %170, %172, %cst_113 {dimension_numbers = #tpu.dot_dimension_numbers<[1], [0], [0], [1], [0, 0, 1, 1], [], []>} : vector<2x32xbf16>, vector<32x128xbf16>, vector<2x128xf32> -> vector<2x128xf32>
    %174 = arith.addf %167, %173 : vector<2x128xf32>
    %cst_114 = arith.constant 0.000000e+00 : f32
    %175 = vector.broadcast %cst_114 : f32 to vector<2x128xf32>
    %176 = arith.subf %175, %174 : vector<2x128xf32>
    %177 = arith.mulf %176, %19 : vector<2x128xf32>
    %178 = math.exp %177 : vector<2x128xf32>
    %cst_115 = arith.constant 1.000000e+00 : f32
    %179 = vector.broadcast %cst_115 : f32 to vector<2x128xf32>
    %180 = arith.addf %179, %178 : vector<2x128xf32>
    %cst_116 = arith.constant 1.000000e+00 : f32
    %181 = vector.broadcast %cst_116 : f32 to vector<2x128xf32>
    %182 = arith.divf %181, %180 : vector<2x128xf32>
    %183 = arith.mulf %182, %19 : vector<2x128xf32>
    %184 = arith.subf %183, %22 : vector<2x128xf32>
    %185 = vector.extract_strided_slice %184 {offsets = [0, 0], sizes = [2, 32], strides = [1, 1]} : vector<2x128xf32> to vector<2x32xf32>
    %186 = vector.extract_strided_slice %184 {offsets = [0, 32], sizes = [2, 32], strides = [1, 1]} : vector<2x128xf32> to vector<2x32xf32>
    %187 = vector.extract_strided_slice %184 {offsets = [0, 64], sizes = [2, 32], strides = [1, 1]} : vector<2x128xf32> to vector<2x32xf32>
    %188 = vector.extract_strided_slice %184 {offsets = [0, 96], sizes = [2, 32], strides = [1, 1]} : vector<2x128xf32> to vector<2x32xf32>
    %c0_117 = arith.constant 0 : index
    %c0_118 = arith.constant 0 : index
    %c0_119 = arith.constant 0 : index
    %189 = vector.load %arg9[%c0_117, %c0_118, %c0_119] : memref<2x2x32xf32, #tpu.memory_space<vmem>>, vector<1x2x32xf32>
    %190 = vector.shape_cast %189 : vector<1x2x32xf32> to vector<2x32xf32>
    %191 = arith.mulf %186, %190 : vector<2x32xf32>
    %192 = arith.mulf %185, %187 : vector<2x32xf32>
    %193 = arith.addf %191, %192 : vector<2x32xf32>
    %194 = math.tanh %193 : vector<2x32xf32>
    %195 = arith.mulf %188, %194 : vector<2x32xf32>
    %c0_120 = arith.constant 0 : index
    %c0_121 = arith.constant 0 : index
    %c0_122 = arith.constant 0 : index
    %196 = vector.load %arg9[%c0_120, %c0_121, %c0_122] : memref<2x2x32xf32, #tpu.memory_space<vmem>>, vector<1x2x32xf32>
    %197 = vector.shape_cast %196 : vector<1x2x32xf32> to vector<2x32xf32>
    %198 = vector.shape_cast %193 : vector<2x32xf32> to vector<1x2x32xf32>
    tpu.vector_store %arg9[%c0_120, %c0_121, %c0_122], %198 {strides = array<i32>} : memref<2x2x32xf32, #tpu.memory_space<vmem>>, vector<1x2x32xf32>,
    %c0_123 = arith.constant 0 : index
    %c0_124 = arith.constant 0 : index
    %c0_125 = arith.constant 0 : index
    %199 = vector.load %arg8[%c0_123, %c0_124, %c0_125] : memref<2x2x32xf32, #tpu.memory_space<vmem>>, vector<1x2x32xf32>
    %200 = vector.shape_cast %199 : vector<1x2x32xf32> to vector<2x32xf32>
    %201 = vector.shape_cast %195 : vector<2x32xf32> to vector<1x2x32xf32>
    tpu.vector_store %arg8[%c0_123, %c0_124, %c0_125], %201 {strides = array<i32>} : memref<2x2x32xf32, #tpu.memory_space<vmem>>, vector<1x2x32xf32>,
    %c4_126 = arith.constant 4 : index
    %c0_127 = arith.constant 0 : index
    %202 = vector.load %arg10[%c4_126, %c0_127] : memref<14x32xf32, #tpu.memory_space<vmem>>, vector<2x32xf32>
    tpu.vector_store %arg10[%c4_126, %c0_127], %195 {strides = array<i32>} : memref<14x32xf32, #tpu.memory_space<vmem>>, vector<2x32xf32>,
    %c8 = arith.constant 8 : index
    %c128_128 = arith.constant 128 : index
    %203 = vector.load %arg7[%c8, %c128_128] : memref<14x256xf32, #tpu.memory_space<vmem>>, vector<2x128xf32>
    %c1_129 = arith.constant 1 : index
    %c0_130 = arith.constant 0 : index
    %c0_131 = arith.constant 0 : index
    %204 = vector.load %arg8[%c1_129, %c0_130, %c0_131] : memref<2x2x32xf32, #tpu.memory_space<vmem>>, vector<1x2x32xf32>
    %205 = vector.shape_cast %204 : vector<1x2x32xf32> to vector<2x32xf32>
    %206 = arith.truncf %205 : vector<2x32xf32> to vector<2x32xbf16>
    %c1_132 = arith.constant 1 : index
    %c0_133 = arith.constant 0 : index
    %c0_134 = arith.constant 0 : index
    %207 = vector.load %arg2[%c1_132, %c0_133, %c0_134] : memref<2x32x128xbf16, #tpu.memory_space<vmem>>, vector<1x32x128xbf16>
    %208 = vector.shape_cast %207 : vector<1x32x128xbf16> to vector<32x128xbf16>
    %cst_135 = arith.constant dense<0.000000e+00> : vector<2x128xf32>
    %209 = tpu.matmul %206, %208, %cst_135 {dimension_numbers = #tpu.dot_dimension_numbers<[1], [0], [0], [1], [0, 0, 1, 1], [], []>} : vector<2x32xbf16>, vector<32x128xbf16>, vector<2x128xf32> -> vector<2x128xf32>
    %210 = arith.addf %203, %209 : vector<2x128xf32>
    %cst_136 = arith.constant 0.000000e+00 : f32
    %211 = vector.broadcast %cst_136 : f32 to vector<2x128xf32>
    %212 = arith.subf %211, %210 : vector<2x128xf32>
    %213 = arith.mulf %212, %19 : vector<2x128xf32>
    %214 = math.exp %213 : vector<2x128xf32>
    %cst_137 = arith.constant 1.000000e+00 : f32
    %215 = vector.broadcast %cst_137 : f32 to vector<2x128xf32>
    %216 = arith.addf %215, %214 : vector<2x128xf32>
    %cst_138 = arith.constant 1.000000e+00 : f32
    %217 = vector.broadcast %cst_138 : f32 to vector<2x128xf32>
    %218 = arith.divf %217, %216 : vector<2x128xf32>
    %219 = arith.mulf %218, %19 : vector<2x128xf32>
    %220 = arith.subf %219, %22 : vector<2x128xf32>
    %221 = vector.extract_strided_slice %220 {offsets = [0, 0], sizes = [2, 32], strides = [1, 1]} : vector<2x128xf32> to vector<2x32xf32>
    %222 = vector.extract_strided_slice %220 {offsets = [0, 32], sizes = [2, 32], strides = [1, 1]} : vector<2x128xf32> to vector<2x32xf32>
    %223 = vector.extract_strided_slice %220 {offsets = [0, 64], sizes = [2, 32], strides = [1, 1]} : vector<2x128xf32> to vector<2x32xf32>
    %224 = vector.extract_strided_slice %220 {offsets = [0, 96], sizes = [2, 32], strides = [1, 1]} : vector<2x128xf32> to vector<2x32xf32>
    %c1_139 = arith.constant 1 : index
    %c0_140 = arith.constant 0 : index
    %c0_141 = arith.constant 0 : index
    %225 = vector.load %arg9[%c1_139, %c0_140, %c0_141] : memref<2x2x32xf32, #tpu.memory_space<vmem>>, vector<1x2x32xf32>
    %226 = vector.shape_cast %225 : vector<1x2x32xf32> to vector<2x32xf32>
    %227 = arith.mulf %222, %226 : vector<2x32xf32>
    %228 = arith.mulf %221, %223 : vector<2x32xf32>
    %229 = arith.addf %227, %228 : vector<2x32xf32>
    %230 = math.tanh %229 : vector<2x32xf32>
    %231 = arith.mulf %224, %230 : vector<2x32xf32>
    %c1_142 = arith.constant 1 : index
    %c0_143 = arith.constant 0 : index
    %c0_144 = arith.constant 0 : index
    %232 = vector.load %arg9[%c1_142, %c0_143, %c0_144] : memref<2x2x32xf32, #tpu.memory_space<vmem>>, vector<1x2x32xf32>
    %233 = vector.shape_cast %232 : vector<1x2x32xf32> to vector<2x32xf32>
    %234 = vector.shape_cast %229 : vector<2x32xf32> to vector<1x2x32xf32>
    tpu.vector_store %arg9[%c1_142, %c0_143, %c0_144], %234 {strides = array<i32>} : memref<2x2x32xf32, #tpu.memory_space<vmem>>, vector<1x2x32xf32>,
    %c1_145 = arith.constant 1 : index
    %c0_146 = arith.constant 0 : index
    %c0_147 = arith.constant 0 : index
    %235 = vector.load %arg8[%c1_145, %c0_146, %c0_147] : memref<2x2x32xf32, #tpu.memory_space<vmem>>, vector<1x2x32xf32>
    %236 = vector.shape_cast %235 : vector<1x2x32xf32> to vector<2x32xf32>
    %237 = vector.shape_cast %231 : vector<2x32xf32> to vector<1x2x32xf32>
    tpu.vector_store %arg8[%c1_145, %c0_146, %c0_147], %237 {strides = array<i32>} : memref<2x2x32xf32, #tpu.memory_space<vmem>>, vector<1x2x32xf32>,
    %c8_148 = arith.constant 8 : index
    %c0_149 = arith.constant 0 : index
    %238 = vector.load %arg11[%c8_148, %c0_149] : memref<14x32xf32, #tpu.memory_space<vmem>>, vector<2x32xf32>
    tpu.vector_store %arg11[%c8_148, %c0_149], %231 {strides = array<i32>} : memref<14x32xf32, #tpu.memory_space<vmem>>, vector<2x32xf32>,
    %c6 = arith.constant 6 : index
    %c0_150 = arith.constant 0 : index
    %239 = vector.load %arg7[%c6, %c0_150] : memref<14x256xf32, #tpu.memory_space<vmem>>, vector<2x128xf32>
    %c0_151 = arith.constant 0 : index
    %c0_152 = arith.constant 0 : index
    %c0_153 = arith.constant 0 : index
    %240 = vector.load %arg8[%c0_151, %c0_152, %c0_153] : memref<2x2x32xf32, #tpu.memory_space<vmem>>, vector<1x2x32xf32>
    %241 = vector.shape_cast %240 : vector<1x2x32xf32> to vector<2x32xf32>
    %242 = arith.truncf %241 : vector<2x32xf32> to vector<2x32xbf16>
    %c0_154 = arith.constant 0 : index
    %c0_155 = arith.constant 0 : index
    %c0_156 = arith.constant 0 : index
    %243 = vector.load %arg2[%c0_154, %c0_155, %c0_156] : memref<2x32x128xbf16, #tpu.memory_space<vmem>>, vector<1x32x128xbf16>
    %244 = vector.shape_cast %243 : vector<1x32x128xbf16> to vector<32x128xbf16>
    %cst_157 = arith.constant dense<0.000000e+00> : vector<2x128xf32>
    %245 = tpu.matmul %242, %244, %cst_157 {dimension_numbers = #tpu.dot_dimension_numbers<[1], [0], [0], [1], [0, 0, 1, 1], [], []>} : vector<2x32xbf16>, vector<32x128xbf16>, vector<2x128xf32> -> vector<2x128xf32>
    %246 = arith.addf %239, %245 : vector<2x128xf32>
    %cst_158 = arith.constant 0.000000e+00 : f32
    %247 = vector.broadcast %cst_158 : f32 to vector<2x128xf32>
    %248 = arith.subf %247, %246 : vector<2x128xf32>
    %249 = arith.mulf %248, %19 : vector<2x128xf32>
    %250 = math.exp %249 : vector<2x128xf32>
    %cst_159 = arith.constant 1.000000e+00 : f32
    %251 = vector.broadcast %cst_159 : f32 to vector<2x128xf32>
    %252 = arith.addf %251, %250 : vector<2x128xf32>
    %cst_160 = arith.constant 1.000000e+00 : f32
    %253 = vector.broadcast %cst_160 : f32 to vector<2x128xf32>
    %254 = arith.divf %253, %252 : vector<2x128xf32>
    %255 = arith.mulf %254, %19 : vector<2x128xf32>
    %256 = arith.subf %255, %22 : vector<2x128xf32>
    %257 = vector.extract_strided_slice %256 {offsets = [0, 0], sizes = [2, 32], strides = [1, 1]} : vector<2x128xf32> to vector<2x32xf32>
    %258 = vector.extract_strided_slice %256 {offsets = [0, 32], sizes = [2, 32], strides = [1, 1]} : vector<2x128xf32> to vector<2x32xf32>
    %259 = vector.extract_strided_slice %256 {offsets = [0, 64], sizes = [2, 32], strides = [1, 1]} : vector<2x128xf32> to vector<2x32xf32>
    %260 = vector.extract_strided_slice %256 {offsets = [0, 96], sizes = [2, 32], strides = [1, 1]} : vector<2x128xf32> to vector<2x32xf32>
    %c0_161 = arith.constant 0 : index
    %c0_162 = arith.constant 0 : index
    %c0_163 = arith.constant 0 : index
    %261 = vector.load %arg9[%c0_161, %c0_162, %c0_163] : memref<2x2x32xf32, #tpu.memory_space<vmem>>, vector<1x2x32xf32>
    %262 = vector.shape_cast %261 : vector<1x2x32xf32> to vector<2x32xf32>
    %263 = arith.mulf %258, %262 : vector<2x32xf32>
    %264 = arith.mulf %257, %259 : vector<2x32xf32>
    %265 = arith.addf %263, %264 : vector<2x32xf32>
    %266 = math.tanh %265 : vector<2x32xf32>
    %267 = arith.mulf %260, %266 : vector<2x32xf32>
    %c0_164 = arith.constant 0 : index
    %c0_165 = arith.constant 0 : index
    %c0_166 = arith.constant 0 : index
    %268 = vector.load %arg9[%c0_164, %c0_165, %c0_166] : memref<2x2x32xf32, #tpu.memory_space<vmem>>, vector<1x2x32xf32>
    %269 = vector.shape_cast %268 : vector<1x2x32xf32> to vector<2x32xf32>
    %270 = vector.shape_cast %265 : vector<2x32xf32> to vector<1x2x32xf32>
    tpu.vector_store %arg9[%c0_164, %c0_165, %c0_166], %270 {strides = array<i32>} : memref<2x2x32xf32, #tpu.memory_space<vmem>>, vector<1x2x32xf32>,
    %c0_167 = arith.constant 0 : index
    %c0_168 = arith.constant 0 : index
    %c0_169 = arith.constant 0 : index
    %271 = vector.load %arg8[%c0_167, %c0_168, %c0_169] : memref<2x2x32xf32, #tpu.memory_space<vmem>>, vector<1x2x32xf32>
    %272 = vector.shape_cast %271 : vector<1x2x32xf32> to vector<2x32xf32>
    %273 = vector.shape_cast %267 : vector<2x32xf32> to vector<1x2x32xf32>
    tpu.vector_store %arg8[%c0_167, %c0_168, %c0_169], %273 {strides = array<i32>} : memref<2x2x32xf32, #tpu.memory_space<vmem>>, vector<1x2x32xf32>,
    %c6_170 = arith.constant 6 : index
    %c0_171 = arith.constant 0 : index
    %274 = vector.load %arg10[%c6_170, %c0_171] : memref<14x32xf32, #tpu.memory_space<vmem>>, vector<2x32xf32>
    tpu.vector_store %arg10[%c6_170, %c0_171], %267 {strides = array<i32>} : memref<14x32xf32, #tpu.memory_space<vmem>>, vector<2x32xf32>,
    %c6_172 = arith.constant 6 : index
    %c128_173 = arith.constant 128 : index
    %275 = vector.load %arg7[%c6_172, %c128_173] : memref<14x256xf32, #tpu.memory_space<vmem>>, vector<2x128xf32>
    %c1_174 = arith.constant 1 : index
    %c0_175 = arith.constant 0 : index
    %c0_176 = arith.constant 0 : index
    %276 = vector.load %arg8[%c1_174, %c0_175, %c0_176] : memref<2x2x32xf32, #tpu.memory_space<vmem>>, vector<1x2x32xf32>
    %277 = vector.shape_cast %276 : vector<1x2x32xf32> to vector<2x32xf32>
    %278 = arith.truncf %277 : vector<2x32xf32> to vector<2x32xbf16>
    %c1_177 = arith.constant 1 : index
    %c0_178 = arith.constant 0 : index
    %c0_179 = arith.constant 0 : index
    %279 = vector.load %arg2[%c1_177, %c0_178, %c0_179] : memref<2x32x128xbf16, #tpu.memory_space<vmem>>, vector<1x32x128xbf16>
    %280 = vector.shape_cast %279 : vector<1x32x128xbf16> to vector<32x128xbf16>
    %cst_180 = arith.constant dense<0.000000e+00> : vector<2x128xf32>
    %281 = tpu.matmul %278, %280, %cst_180 {dimension_numbers = #tpu.dot_dimension_numbers<[1], [0], [0], [1], [0, 0, 1, 1], [], []>} : vector<2x32xbf16>, vector<32x128xbf16>, vector<2x128xf32> -> vector<2x128xf32>
    %282 = arith.addf %275, %281 : vector<2x128xf32>
    %cst_181 = arith.constant 0.000000e+00 : f32
    %283 = vector.broadcast %cst_181 : f32 to vector<2x128xf32>
    %284 = arith.subf %283, %282 : vector<2x128xf32>
    %285 = arith.mulf %284, %19 : vector<2x128xf32>
    %286 = math.exp %285 : vector<2x128xf32>
    %cst_182 = arith.constant 1.000000e+00 : f32
    %287 = vector.broadcast %cst_182 : f32 to vector<2x128xf32>
    %288 = arith.addf %287, %286 : vector<2x128xf32>
    %cst_183 = arith.constant 1.000000e+00 : f32
    %289 = vector.broadcast %cst_183 : f32 to vector<2x128xf32>
    %290 = arith.divf %289, %288 : vector<2x128xf32>
    %291 = arith.mulf %290, %19 : vector<2x128xf32>
    %292 = arith.subf %291, %22 : vector<2x128xf32>
    %293 = vector.extract_strided_slice %292 {offsets = [0, 0], sizes = [2, 32], strides = [1, 1]} : vector<2x128xf32> to vector<2x32xf32>
    %294 = vector.extract_strided_slice %292 {offsets = [0, 32], sizes = [2, 32], strides = [1, 1]} : vector<2x128xf32> to vector<2x32xf32>
    %295 = vector.extract_strided_slice %292 {offsets = [0, 64], sizes = [2, 32], strides = [1, 1]} : vector<2x128xf32> to vector<2x32xf32>
    %296 = vector.extract_strided_slice %292 {offsets = [0, 96], sizes = [2, 32], strides = [1, 1]} : vector<2x128xf32> to vector<2x32xf32>
    %c1_184 = arith.constant 1 : index
    %c0_185 = arith.constant 0 : index
    %c0_186 = arith.constant 0 : index
    %297 = vector.load %arg9[%c1_184, %c0_185, %c0_186] : memref<2x2x32xf32, #tpu.memory_space<vmem>>, vector<1x2x32xf32>
    %298 = vector.shape_cast %297 : vector<1x2x32xf32> to vector<2x32xf32>
    %299 = arith.mulf %294, %298 : vector<2x32xf32>
    %300 = arith.mulf %293, %295 : vector<2x32xf32>
    %301 = arith.addf %299, %300 : vector<2x32xf32>
    %302 = math.tanh %301 : vector<2x32xf32>
    %303 = arith.mulf %296, %302 : vector<2x32xf32>
    %c1_187 = arith.constant 1 : index
    %c0_188 = arith.constant 0 : index
    %c0_189 = arith.constant 0 : index
    %304 = vector.load %arg9[%c1_187, %c0_188, %c0_189] : memref<2x2x32xf32, #tpu.memory_space<vmem>>, vector<1x2x32xf32>
    %305 = vector.shape_cast %304 : vector<1x2x32xf32> to vector<2x32xf32>
    %306 = vector.shape_cast %301 : vector<2x32xf32> to vector<1x2x32xf32>
    tpu.vector_store %arg9[%c1_187, %c0_188, %c0_189], %306 {strides = array<i32>} : memref<2x2x32xf32, #tpu.memory_space<vmem>>, vector<1x2x32xf32>,
    %c1_190 = arith.constant 1 : index
    %c0_191 = arith.constant 0 : index
    %c0_192 = arith.constant 0 : index
    %307 = vector.load %arg8[%c1_190, %c0_191, %c0_192] : memref<2x2x32xf32, #tpu.memory_space<vmem>>, vector<1x2x32xf32>
    %308 = vector.shape_cast %307 : vector<1x2x32xf32> to vector<2x32xf32>
    %309 = vector.shape_cast %303 : vector<2x32xf32> to vector<1x2x32xf32>
    tpu.vector_store %arg8[%c1_190, %c0_191, %c0_192], %309 {strides = array<i32>} : memref<2x2x32xf32, #tpu.memory_space<vmem>>, vector<1x2x32xf32>,
    %c6_193 = arith.constant 6 : index
    %c0_194 = arith.constant 0 : index
    %310 = vector.load %arg11[%c6_193, %c0_194] : memref<14x32xf32, #tpu.memory_space<vmem>>, vector<2x32xf32>
    tpu.vector_store %arg11[%c6_193, %c0_194], %303 {strides = array<i32>} : memref<14x32xf32, #tpu.memory_space<vmem>>, vector<2x32xf32>,
    %c8_195 = arith.constant 8 : index
    %c0_196 = arith.constant 0 : index
    %311 = vector.load %arg7[%c8_195, %c0_196] : memref<14x256xf32, #tpu.memory_space<vmem>>, vector<2x128xf32>
    %c0_197 = arith.constant 0 : index
    %c0_198 = arith.constant 0 : index
    %c0_199 = arith.constant 0 : index
    %312 = vector.load %arg8[%c0_197, %c0_198, %c0_199] : memref<2x2x32xf32, #tpu.memory_space<vmem>>, vector<1x2x32xf32>
    %313 = vector.shape_cast %312 : vector<1x2x32xf32> to vector<2x32xf32>
    %314 = arith.truncf %313 : vector<2x32xf32> to vector<2x32xbf16>
    %c0_200 = arith.constant 0 : index
    %c0_201 = arith.constant 0 : index
    %c0_202 = arith.constant 0 : index
    %315 = vector.load %arg2[%c0_200, %c0_201, %c0_202] : memref<2x32x128xbf16, #tpu.memory_space<vmem>>, vector<1x32x128xbf16>
    %316 = vector.shape_cast %315 : vector<1x32x128xbf16> to vector<32x128xbf16>
    %cst_203 = arith.constant dense<0.000000e+00> : vector<2x128xf32>
    %317 = tpu.matmul %314, %316, %cst_203 {dimension_numbers = #tpu.dot_dimension_numbers<[1], [0], [0], [1], [0, 0, 1, 1], [], []>} : vector<2x32xbf16>, vector<32x128xbf16>, vector<2x128xf32> -> vector<2x128xf32>
    %318 = arith.addf %311, %317 : vector<2x128xf32>
    %cst_204 = arith.constant 0.000000e+00 : f32
    %319 = vector.broadcast %cst_204 : f32 to vector<2x128xf32>
    %320 = arith.subf %319, %318 : vector<2x128xf32>
    %321 = arith.mulf %320, %19 : vector<2x128xf32>
    %322 = math.exp %321 : vector<2x128xf32>
    %cst_205 = arith.constant 1.000000e+00 : f32
    %323 = vector.broadcast %cst_205 : f32 to vector<2x128xf32>
    %324 = arith.addf %323, %322 : vector<2x128xf32>
    %cst_206 = arith.constant 1.000000e+00 : f32
    %325 = vector.broadcast %cst_206 : f32 to vector<2x128xf32>
    %326 = arith.divf %325, %324 : vector<2x128xf32>
    %327 = arith.mulf %326, %19 : vector<2x128xf32>
    %328 = arith.subf %327, %22 : vector<2x128xf32>
    %329 = vector.extract_strided_slice %328 {offsets = [0, 0], sizes = [2, 32], strides = [1, 1]} : vector<2x128xf32> to vector<2x32xf32>
    %330 = vector.extract_strided_slice %328 {offsets = [0, 32], sizes = [2, 32], strides = [1, 1]} : vector<2x128xf32> to vector<2x32xf32>
    %331 = vector.extract_strided_slice %328 {offsets = [0, 64], sizes = [2, 32], strides = [1, 1]} : vector<2x128xf32> to vector<2x32xf32>
    %332 = vector.extract_strided_slice %328 {offsets = [0, 96], sizes = [2, 32], strides = [1, 1]} : vector<2x128xf32> to vector<2x32xf32>
    %c0_207 = arith.constant 0 : index
    %c0_208 = arith.constant 0 : index
    %c0_209 = arith.constant 0 : index
    %333 = vector.load %arg9[%c0_207, %c0_208, %c0_209] : memref<2x2x32xf32, #tpu.memory_space<vmem>>, vector<1x2x32xf32>
    %334 = vector.shape_cast %333 : vector<1x2x32xf32> to vector<2x32xf32>
    %335 = arith.mulf %330, %334 : vector<2x32xf32>
    %336 = arith.mulf %329, %331 : vector<2x32xf32>
    %337 = arith.addf %335, %336 : vector<2x32xf32>
    %338 = math.tanh %337 : vector<2x32xf32>
    %339 = arith.mulf %332, %338 : vector<2x32xf32>
    %c0_210 = arith.constant 0 : index
    %c0_211 = arith.constant 0 : index
    %c0_212 = arith.constant 0 : index
    %340 = vector.load %arg9[%c0_210, %c0_211, %c0_212] : memref<2x2x32xf32, #tpu.memory_space<vmem>>, vector<1x2x32xf32>
    %341 = vector.shape_cast %340 : vector<1x2x32xf32> to vector<2x32xf32>
    %342 = vector.shape_cast %337 : vector<2x32xf32> to vector<1x2x32xf32>
    tpu.vector_store %arg9[%c0_210, %c0_211, %c0_212], %342 {strides = array<i32>} : memref<2x2x32xf32, #tpu.memory_space<vmem>>, vector<1x2x32xf32>,
    %c0_213 = arith.constant 0 : index
    %c0_214 = arith.constant 0 : index
    %c0_215 = arith.constant 0 : index
    %343 = vector.load %arg8[%c0_213, %c0_214, %c0_215] : memref<2x2x32xf32, #tpu.memory_space<vmem>>, vector<1x2x32xf32>
    %344 = vector.shape_cast %343 : vector<1x2x32xf32> to vector<2x32xf32>
    %345 = vector.shape_cast %339 : vector<2x32xf32> to vector<1x2x32xf32>
    tpu.vector_store %arg8[%c0_213, %c0_214, %c0_215], %345 {strides = array<i32>} : memref<2x2x32xf32, #tpu.memory_space<vmem>>, vector<1x2x32xf32>,
    %c8_216 = arith.constant 8 : index
    %c0_217 = arith.constant 0 : index
    %346 = vector.load %arg10[%c8_216, %c0_217] : memref<14x32xf32, #tpu.memory_space<vmem>>, vector<2x32xf32>
    tpu.vector_store %arg10[%c8_216, %c0_217], %339 {strides = array<i32>} : memref<14x32xf32, #tpu.memory_space<vmem>>, vector<2x32xf32>,
    %c4_218 = arith.constant 4 : index
    %c128_219 = arith.constant 128 : index
    %347 = vector.load %arg7[%c4_218, %c128_219] : memref<14x256xf32, #tpu.memory_space<vmem>>, vector<2x128xf32>
    %c1_220 = arith.constant 1 : index
    %c0_221 = arith.constant 0 : index
    %c0_222 = arith.constant 0 : index
    %348 = vector.load %arg8[%c1_220, %c0_221, %c0_222] : memref<2x2x32xf32, #tpu.memory_space<vmem>>, vector<1x2x32xf32>
    %349 = vector.shape_cast %348 : vector<1x2x32xf32> to vector<2x32xf32>
    %350 = arith.truncf %349 : vector<2x32xf32> to vector<2x32xbf16>
    %c1_223 = arith.constant 1 : index
    %c0_224 = arith.constant 0 : index
    %c0_225 = arith.constant 0 : index
    %351 = vector.load %arg2[%c1_223, %c0_224, %c0_225] : memref<2x32x128xbf16, #tpu.memory_space<vmem>>, vector<1x32x128xbf16>
    %352 = vector.shape_cast %351 : vector<1x32x128xbf16> to vector<32x128xbf16>
    %cst_226 = arith.constant dense<0.000000e+00> : vector<2x128xf32>
    %353 = tpu.matmul %350, %352, %cst_226 {dimension_numbers = #tpu.dot_dimension_numbers<[1], [0], [0], [1], [0, 0, 1, 1], [], []>} : vector<2x32xbf16>, vector<32x128xbf16>, vector<2x128xf32> -> vector<2x128xf32>
    %354 = arith.addf %347, %353 : vector<2x128xf32>
    %cst_227 = arith.constant 0.000000e+00 : f32
    %355 = vector.broadcast %cst_227 : f32 to vector<2x128xf32>
    %356 = arith.subf %355, %354 : vector<2x128xf32>
    %357 = arith.mulf %356, %19 : vector<2x128xf32>
    %358 = math.exp %357 : vector<2x128xf32>
    %cst_228 = arith.constant 1.000000e+00 : f32
    %359 = vector.broadcast %cst_228 : f32 to vector<2x128xf32>
    %360 = arith.addf %359, %358 : vector<2x128xf32>
    %cst_229 = arith.constant 1.000000e+00 : f32
    %361 = vector.broadcast %cst_229 : f32 to vector<2x128xf32>
    %362 = arith.divf %361, %360 : vector<2x128xf32>
    %363 = arith.mulf %362, %19 : vector<2x128xf32>
    %364 = arith.subf %363, %22 : vector<2x128xf32>
    %365 = vector.extract_strided_slice %364 {offsets = [0, 0], sizes = [2, 32], strides = [1, 1]} : vector<2x128xf32> to vector<2x32xf32>
    %366 = vector.extract_strided_slice %364 {offsets = [0, 32], sizes = [2, 32], strides = [1, 1]} : vector<2x128xf32> to vector<2x32xf32>
    %367 = vector.extract_strided_slice %364 {offsets = [0, 64], sizes = [2, 32], strides = [1, 1]} : vector<2x128xf32> to vector<2x32xf32>
    %368 = vector.extract_strided_slice %364 {offsets = [0, 96], sizes = [2, 32], strides = [1, 1]} : vector<2x128xf32> to vector<2x32xf32>
    %c1_230 = arith.constant 1 : index
    %c0_231 = arith.constant 0 : index
    %c0_232 = arith.constant 0 : index
    %369 = vector.load %arg9[%c1_230, %c0_231, %c0_232] : memref<2x2x32xf32, #tpu.memory_space<vmem>>, vector<1x2x32xf32>
    %370 = vector.shape_cast %369 : vector<1x2x32xf32> to vector<2x32xf32>
    %371 = arith.mulf %366, %370 : vector<2x32xf32>
    %372 = arith.mulf %365, %367 : vector<2x32xf32>
    %373 = arith.addf %371, %372 : vector<2x32xf32>
    %374 = math.tanh %373 : vector<2x32xf32>
    %375 = arith.mulf %368, %374 : vector<2x32xf32>
    %c1_233 = arith.constant 1 : index
    %c0_234 = arith.constant 0 : index
    %c0_235 = arith.constant 0 : index
    %376 = vector.load %arg9[%c1_233, %c0_234, %c0_235] : memref<2x2x32xf32, #tpu.memory_space<vmem>>, vector<1x2x32xf32>
    %377 = vector.shape_cast %376 : vector<1x2x32xf32> to vector<2x32xf32>
    %378 = vector.shape_cast %373 : vector<2x32xf32> to vector<1x2x32xf32>
    tpu.vector_store %arg9[%c1_233, %c0_234, %c0_235], %378 {strides = array<i32>} : memref<2x2x32xf32, #tpu.memory_space<vmem>>, vector<1x2x32xf32>,
    %c1_236 = arith.constant 1 : index
    %c0_237 = arith.constant 0 : index
    %c0_238 = arith.constant 0 : index
    %379 = vector.load %arg8[%c1_236, %c0_237, %c0_238] : memref<2x2x32xf32, #tpu.memory_space<vmem>>, vector<1x2x32xf32>
    %380 = vector.shape_cast %379 : vector<1x2x32xf32> to vector<2x32xf32>
    %381 = vector.shape_cast %375 : vector<2x32xf32> to vector<1x2x32xf32>
    tpu.vector_store %arg8[%c1_236, %c0_237, %c0_238], %381 {strides = array<i32>} : memref<2x2x32xf32, #tpu.memory_space<vmem>>, vector<1x2x32xf32>,
    %c4_239 = arith.constant 4 : index
    %c0_240 = arith.constant 0 : index
    %382 = vector.load %arg11[%c4_239, %c0_240] : memref<14x32xf32, #tpu.memory_space<vmem>>, vector<2x32xf32>
    tpu.vector_store %arg11[%c4_239, %c0_240], %375 {strides = array<i32>} : memref<14x32xf32, #tpu.memory_space<vmem>>, vector<2x32xf32>,
    %c10_241 = arith.constant 10 : index
    %c0_242 = arith.constant 0 : index
    %383 = vector.load %arg7[%c10_241, %c0_242] : memref<14x256xf32, #tpu.memory_space<vmem>>, vector<2x128xf32>
    %c0_243 = arith.constant 0 : index
    %c0_244 = arith.constant 0 : index
    %c0_245 = arith.constant 0 : index
    %384 = vector.load %arg8[%c0_243, %c0_244, %c0_245] : memref<2x2x32xf32, #tpu.memory_space<vmem>>, vector<1x2x32xf32>
    %385 = vector.shape_cast %384 : vector<1x2x32xf32> to vector<2x32xf32>
    %386 = arith.truncf %385 : vector<2x32xf32> to vector<2x32xbf16>
    %c0_246 = arith.constant 0 : index
    %c0_247 = arith.constant 0 : index
    %c0_248 = arith.constant 0 : index
    %387 = vector.load %arg2[%c0_246, %c0_247, %c0_248] : memref<2x32x128xbf16, #tpu.memory_space<vmem>>, vector<1x32x128xbf16>
    %388 = vector.shape_cast %387 : vector<1x32x128xbf16> to vector<32x128xbf16>
    %cst_249 = arith.constant dense<0.000000e+00> : vector<2x128xf32>
    %389 = tpu.matmul %386, %388, %cst_249 {dimension_numbers = #tpu.dot_dimension_numbers<[1], [0], [0], [1], [0, 0, 1, 1], [], []>} : vector<2x32xbf16>, vector<32x128xbf16>, vector<2x128xf32> -> vector<2x128xf32>
    %390 = arith.addf %383, %389 : vector<2x128xf32>
    %cst_250 = arith.constant 0.000000e+00 : f32
    %391 = vector.broadcast %cst_250 : f32 to vector<2x128xf32>
    %392 = arith.subf %391, %390 : vector<2x128xf32>
    %393 = arith.mulf %392, %19 : vector<2x128xf32>
    %394 = math.exp %393 : vector<2x128xf32>
    %cst_251 = arith.constant 1.000000e+00 : f32
    %395 = vector.broadcast %cst_251 : f32 to vector<2x128xf32>
    %396 = arith.addf %395, %394 : vector<2x128xf32>
    %cst_252 = arith.constant 1.000000e+00 : f32
    %397 = vector.broadcast %cst_252 : f32 to vector<2x128xf32>
    %398 = arith.divf %397, %396 : vector<2x128xf32>
    %399 = arith.mulf %398, %19 : vector<2x128xf32>
    %400 = arith.subf %399, %22 : vector<2x128xf32>
    %401 = vector.extract_strided_slice %400 {offsets = [0, 0], sizes = [2, 32], strides = [1, 1]} : vector<2x128xf32> to vector<2x32xf32>
    %402 = vector.extract_strided_slice %400 {offsets = [0, 32], sizes = [2, 32], strides = [1, 1]} : vector<2x128xf32> to vector<2x32xf32>
    %403 = vector.extract_strided_slice %400 {offsets = [0, 64], sizes = [2, 32], strides = [1, 1]} : vector<2x128xf32> to vector<2x32xf32>
    %404 = vector.extract_strided_slice %400 {offsets = [0, 96], sizes = [2, 32], strides = [1, 1]} : vector<2x128xf32> to vector<2x32xf32>
    %c0_253 = arith.constant 0 : index
    %c0_254 = arith.constant 0 : index
    %c0_255 = arith.constant 0 : index
    %405 = vector.load %arg9[%c0_253, %c0_254, %c0_255] : memref<2x2x32xf32, #tpu.memory_space<vmem>>, vector<1x2x32xf32>
    %406 = vector.shape_cast %405 : vector<1x2x32xf32> to vector<2x32xf32>
    %407 = arith.mulf %402, %406 : vector<2x32xf32>
    %408 = arith.mulf %401, %403 : vector<2x32xf32>
    %409 = arith.addf %407, %408 : vector<2x32xf32>
    %410 = math.tanh %409 : vector<2x32xf32>
    %411 = arith.mulf %404, %410 : vector<2x32xf32>
    %c0_256 = arith.constant 0 : index
    %c0_257 = arith.constant 0 : index
    %c0_258 = arith.constant 0 : index
    %412 = vector.load %arg9[%c0_256, %c0_257, %c0_258] : memref<2x2x32xf32, #tpu.memory_space<vmem>>, vector<1x2x32xf32>
    %413 = vector.shape_cast %412 : vector<1x2x32xf32> to vector<2x32xf32>
    %414 = vector.shape_cast %409 : vector<2x32xf32> to vector<1x2x32xf32>
    tpu.vector_store %arg9[%c0_256, %c0_257, %c0_258], %414 {strides = array<i32>} : memref<2x2x32xf32, #tpu.memory_space<vmem>>, vector<1x2x32xf32>,
    %c0_259 = arith.constant 0 : index
    %c0_260 = arith.constant 0 : index
    %c0_261 = arith.constant 0 : index
    %415 = vector.load %arg8[%c0_259, %c0_260, %c0_261] : memref<2x2x32xf32, #tpu.memory_space<vmem>>, vector<1x2x32xf32>
    %416 = vector.shape_cast %415 : vector<1x2x32xf32> to vector<2x32xf32>
    %417 = vector.shape_cast %411 : vector<2x32xf32> to vector<1x2x32xf32>
    tpu.vector_store %arg8[%c0_259, %c0_260, %c0_261], %417 {strides = array<i32>} : memref<2x2x32xf32, #tpu.memory_space<vmem>>, vector<1x2x32xf32>,
    %c10_262 = arith.constant 10 : index
    %c0_263 = arith.constant 0 : index
    %418 = vector.load %arg10[%c10_262, %c0_263] : memref<14x32xf32, #tpu.memory_space<vmem>>, vector<2x32xf32>
    tpu.vector_store %arg10[%c10_262, %c0_263], %411 {strides = array<i32>} : memref<14x32xf32, #tpu.memory_space<vmem>>, vector<2x32xf32>,
    %c2_264 = arith.constant 2 : index
    %c128_265 = arith.constant 128 : index
    %419 = vector.load %arg7[%c2_264, %c128_265] : memref<14x256xf32, #tpu.memory_space<vmem>>, vector<2x128xf32>
    %c1_266 = arith.constant 1 : index
    %c0_267 = arith.constant 0 : index
    %c0_268 = arith.constant 0 : index
    %420 = vector.load %arg8[%c1_266, %c0_267, %c0_268] : memref<2x2x32xf32, #tpu.memory_space<vmem>>, vector<1x2x32xf32>
    %421 = vector.shape_cast %420 : vector<1x2x32xf32> to vector<2x32xf32>
    %422 = arith.truncf %421 : vector<2x32xf32> to vector<2x32xbf16>
    %c1_269 = arith.constant 1 : index
    %c0_270 = arith.constant 0 : index
    %c0_271 = arith.constant 0 : index
    %423 = vector.load %arg2[%c1_269, %c0_270, %c0_271] : memref<2x32x128xbf16, #tpu.memory_space<vmem>>, vector<1x32x128xbf16>
    %424 = vector.shape_cast %423 : vector<1x32x128xbf16> to vector<32x128xbf16>
    %cst_272 = arith.constant dense<0.000000e+00> : vector<2x128xf32>
    %425 = tpu.matmul %422, %424, %cst_272 {dimension_numbers = #tpu.dot_dimension_numbers<[1], [0], [0], [1], [0, 0, 1, 1], [], []>} : vector<2x32xbf16>, vector<32x128xbf16>, vector<2x128xf32> -> vector<2x128xf32>
    %426 = arith.addf %419, %425 : vector<2x128xf32>
    %cst_273 = arith.constant 0.000000e+00 : f32
    %427 = vector.broadcast %cst_273 : f32 to vector<2x128xf32>
    %428 = arith.subf %427, %426 : vector<2x128xf32>
    %429 = arith.mulf %428, %19 : vector<2x128xf32>
    %430 = math.exp %429 : vector<2x128xf32>
    %cst_274 = arith.constant 1.000000e+00 : f32
    %431 = vector.broadcast %cst_274 : f32 to vector<2x128xf32>
    %432 = arith.addf %431, %430 : vector<2x128xf32>
    %cst_275 = arith.constant 1.000000e+00 : f32
    %433 = vector.broadcast %cst_275 : f32 to vector<2x128xf32>
    %434 = arith.divf %433, %432 : vector<2x128xf32>
    %435 = arith.mulf %434, %19 : vector<2x128xf32>
    %436 = arith.subf %435, %22 : vector<2x128xf32>
    %437 = vector.extract_strided_slice %436 {offsets = [0, 0], sizes = [2, 32], strides = [1, 1]} : vector<2x128xf32> to vector<2x32xf32>
    %438 = vector.extract_strided_slice %436 {offsets = [0, 32], sizes = [2, 32], strides = [1, 1]} : vector<2x128xf32> to vector<2x32xf32>
    %439 = vector.extract_strided_slice %436 {offsets = [0, 64], sizes = [2, 32], strides = [1, 1]} : vector<2x128xf32> to vector<2x32xf32>
    %440 = vector.extract_strided_slice %436 {offsets = [0, 96], sizes = [2, 32], strides = [1, 1]} : vector<2x128xf32> to vector<2x32xf32>
    %c1_276 = arith.constant 1 : index
    %c0_277 = arith.constant 0 : index
    %c0_278 = arith.constant 0 : index
    %441 = vector.load %arg9[%c1_276, %c0_277, %c0_278] : memref<2x2x32xf32, #tpu.memory_space<vmem>>, vector<1x2x32xf32>
    %442 = vector.shape_cast %441 : vector<1x2x32xf32> to vector<2x32xf32>
    %443 = arith.mulf %438, %442 : vector<2x32xf32>
    %444 = arith.mulf %437, %439 : vector<2x32xf32>
    %445 = arith.addf %443, %444 : vector<2x32xf32>
    %446 = math.tanh %445 : vector<2x32xf32>
    %447 = arith.mulf %440, %446 : vector<2x32xf32>
    %c1_279 = arith.constant 1 : index
    %c0_280 = arith.constant 0 : index
    %c0_281 = arith.constant 0 : index
    %448 = vector.load %arg9[%c1_279, %c0_280, %c0_281] : memref<2x2x32xf32, #tpu.memory_space<vmem>>, vector<1x2x32xf32>
    %449 = vector.shape_cast %448 : vector<1x2x32xf32> to vector<2x32xf32>
    %450 = vector.shape_cast %445 : vector<2x32xf32> to vector<1x2x32xf32>
    tpu.vector_store %arg9[%c1_279, %c0_280, %c0_281], %450 {strides = array<i32>} : memref<2x2x32xf32, #tpu.memory_space<vmem>>, vector<1x2x32xf32>,
    %c1_282 = arith.constant 1 : index
    %c0_283 = arith.constant 0 : index
    %c0_284 = arith.constant 0 : index
    %451 = vector.load %arg8[%c1_282, %c0_283, %c0_284] : memref<2x2x32xf32, #tpu.memory_space<vmem>>, vector<1x2x32xf32>
    %452 = vector.shape_cast %451 : vector<1x2x32xf32> to vector<2x32xf32>
    %453 = vector.shape_cast %447 : vector<2x32xf32> to vector<1x2x32xf32>
    tpu.vector_store %arg8[%c1_282, %c0_283, %c0_284], %453 {strides = array<i32>} : memref<2x2x32xf32, #tpu.memory_space<vmem>>, vector<1x2x32xf32>,
    %c2_285 = arith.constant 2 : index
    %c0_286 = arith.constant 0 : index
    %454 = vector.load %arg11[%c2_285, %c0_286] : memref<14x32xf32, #tpu.memory_space<vmem>>, vector<2x32xf32>
    tpu.vector_store %arg11[%c2_285, %c0_286], %447 {strides = array<i32>} : memref<14x32xf32, #tpu.memory_space<vmem>>, vector<2x32xf32>,
    %c12_287 = arith.constant 12 : index
    %c0_288 = arith.constant 0 : index
    %455 = vector.load %arg7[%c12_287, %c0_288] : memref<14x256xf32, #tpu.memory_space<vmem>>, vector<2x128xf32>
    %c0_289 = arith.constant 0 : index
    %c0_290 = arith.constant 0 : index
    %c0_291 = arith.constant 0 : index
    %456 = vector.load %arg8[%c0_289, %c0_290, %c0_291] : memref<2x2x32xf32, #tpu.memory_space<vmem>>, vector<1x2x32xf32>
    %457 = vector.shape_cast %456 : vector<1x2x32xf32> to vector<2x32xf32>
    %458 = arith.truncf %457 : vector<2x32xf32> to vector<2x32xbf16>
    %c0_292 = arith.constant 0 : index
    %c0_293 = arith.constant 0 : index
    %c0_294 = arith.constant 0 : index
    %459 = vector.load %arg2[%c0_292, %c0_293, %c0_294] : memref<2x32x128xbf16, #tpu.memory_space<vmem>>, vector<1x32x128xbf16>
    %460 = vector.shape_cast %459 : vector<1x32x128xbf16> to vector<32x128xbf16>
    %cst_295 = arith.constant dense<0.000000e+00> : vector<2x128xf32>
    %461 = tpu.matmul %458, %460, %cst_295 {dimension_numbers = #tpu.dot_dimension_numbers<[1], [0], [0], [1], [0, 0, 1, 1], [], []>} : vector<2x32xbf16>, vector<32x128xbf16>, vector<2x128xf32> -> vector<2x128xf32>
    %462 = arith.addf %455, %461 : vector<2x128xf32>
    %cst_296 = arith.constant 0.000000e+00 : f32
    %463 = vector.broadcast %cst_296 : f32 to vector<2x128xf32>
    %464 = arith.subf %463, %462 : vector<2x128xf32>
    %465 = arith.mulf %464, %19 : vector<2x128xf32>
    %466 = math.exp %465 : vector<2x128xf32>
    %cst_297 = arith.constant 1.000000e+00 : f32
    %467 = vector.broadcast %cst_297 : f32 to vector<2x128xf32>
    %468 = arith.addf %467, %466 : vector<2x128xf32>
    %cst_298 = arith.constant 1.000000e+00 : f32
    %469 = vector.broadcast %cst_298 : f32 to vector<2x128xf32>
    %470 = arith.divf %469, %468 : vector<2x128xf32>
    %471 = arith.mulf %470, %19 : vector<2x128xf32>
    %472 = arith.subf %471, %22 : vector<2x128xf32>
    %473 = vector.extract_strided_slice %472 {offsets = [0, 0], sizes = [2, 32], strides = [1, 1]} : vector<2x128xf32> to vector<2x32xf32>
    %474 = vector.extract_strided_slice %472 {offsets = [0, 32], sizes = [2, 32], strides = [1, 1]} : vector<2x128xf32> to vector<2x32xf32>
    %475 = vector.extract_strided_slice %472 {offsets = [0, 64], sizes = [2, 32], strides = [1, 1]} : vector<2x128xf32> to vector<2x32xf32>
    %476 = vector.extract_strided_slice %472 {offsets = [0, 96], sizes = [2, 32], strides = [1, 1]} : vector<2x128xf32> to vector<2x32xf32>
    %c0_299 = arith.constant 0 : index
    %c0_300 = arith.constant 0 : index
    %c0_301 = arith.constant 0 : index
    %477 = vector.load %arg9[%c0_299, %c0_300, %c0_301] : memref<2x2x32xf32, #tpu.memory_space<vmem>>, vector<1x2x32xf32>
    %478 = vector.shape_cast %477 : vector<1x2x32xf32> to vector<2x32xf32>
    %479 = arith.mulf %474, %478 : vector<2x32xf32>
    %480 = arith.mulf %473, %475 : vector<2x32xf32>
    %481 = arith.addf %479, %480 : vector<2x32xf32>
    %482 = math.tanh %481 : vector<2x32xf32>
    %483 = arith.mulf %476, %482 : vector<2x32xf32>
    %c0_302 = arith.constant 0 : index
    %c0_303 = arith.constant 0 : index
    %c0_304 = arith.constant 0 : index
    %484 = vector.load %arg9[%c0_302, %c0_303, %c0_304] : memref<2x2x32xf32, #tpu.memory_space<vmem>>, vector<1x2x32xf32>
    %485 = vector.shape_cast %484 : vector<1x2x32xf32> to vector<2x32xf32>
    %486 = vector.shape_cast %481 : vector<2x32xf32> to vector<1x2x32xf32>
    tpu.vector_store %arg9[%c0_302, %c0_303, %c0_304], %486 {strides = array<i32>} : memref<2x2x32xf32, #tpu.memory_space<vmem>>, vector<1x2x32xf32>,
    %c0_305 = arith.constant 0 : index
    %c0_306 = arith.constant 0 : index
    %c0_307 = arith.constant 0 : index
    %487 = vector.load %arg8[%c0_305, %c0_306, %c0_307] : memref<2x2x32xf32, #tpu.memory_space<vmem>>, vector<1x2x32xf32>
    %488 = vector.shape_cast %487 : vector<1x2x32xf32> to vector<2x32xf32>
    %489 = vector.shape_cast %483 : vector<2x32xf32> to vector<1x2x32xf32>
    tpu.vector_store %arg8[%c0_305, %c0_306, %c0_307], %489 {strides = array<i32>} : memref<2x2x32xf32, #tpu.memory_space<vmem>>, vector<1x2x32xf32>,
    %c12_308 = arith.constant 12 : index
    %c0_309 = arith.constant 0 : index
    %490 = vector.load %arg10[%c12_308, %c0_309] : memref<14x32xf32, #tpu.memory_space<vmem>>, vector<2x32xf32>
    tpu.vector_store %arg10[%c12_308, %c0_309], %483 {strides = array<i32>} : memref<14x32xf32, #tpu.memory_space<vmem>>, vector<2x32xf32>,
    %c0_310 = arith.constant 0 : index
    %c128_311 = arith.constant 128 : index
    %491 = vector.load %arg7[%c0_310, %c128_311] : memref<14x256xf32, #tpu.memory_space<vmem>>, vector<2x128xf32>
    %c1_312 = arith.constant 1 : index
    %c0_313 = arith.constant 0 : index
    %c0_314 = arith.constant 0 : index
    %492 = vector.load %arg8[%c1_312, %c0_313, %c0_314] : memref<2x2x32xf32, #tpu.memory_space<vmem>>, vector<1x2x32xf32>
    %493 = vector.shape_cast %492 : vector<1x2x32xf32> to vector<2x32xf32>
    %494 = arith.truncf %493 : vector<2x32xf32> to vector<2x32xbf16>
    %c1_315 = arith.constant 1 : index
    %c0_316 = arith.constant 0 : index
    %c0_317 = arith.constant 0 : index
    %495 = vector.load %arg2[%c1_315, %c0_316, %c0_317] : memref<2x32x128xbf16, #tpu.memory_space<vmem>>, vector<1x32x128xbf16>
    %496 = vector.shape_cast %495 : vector<1x32x128xbf16> to vector<32x128xbf16>
    %cst_318 = arith.constant dense<0.000000e+00> : vector<2x128xf32>
    %497 = tpu.matmul %494, %496, %cst_318 {dimension_numbers = #tpu.dot_dimension_numbers<[1], [0], [0], [1], [0, 0, 1, 1], [], []>} : vector<2x32xbf16>, vector<32x128xbf16>, vector<2x128xf32> -> vector<2x128xf32>
    %498 = arith.addf %491, %497 : vector<2x128xf32>
    %cst_319 = arith.constant 0.000000e+00 : f32
    %499 = vector.broadcast %cst_319 : f32 to vector<2x128xf32>
    %500 = arith.subf %499, %498 : vector<2x128xf32>
    %501 = arith.mulf %500, %19 : vector<2x128xf32>
    %502 = math.exp %501 : vector<2x128xf32>
    %cst_320 = arith.constant 1.000000e+00 : f32
    %503 = vector.broadcast %cst_320 : f32 to vector<2x128xf32>
    %504 = arith.addf %503, %502 : vector<2x128xf32>
    %cst_321 = arith.constant 1.000000e+00 : f32
    %505 = vector.broadcast %cst_321 : f32 to vector<2x128xf32>
    %506 = arith.divf %505, %504 : vector<2x128xf32>
    %507 = arith.mulf %506, %19 : vector<2x128xf32>
    %508 = arith.subf %507, %22 : vector<2x128xf32>
    %509 = vector.extract_strided_slice %508 {offsets = [0, 0], sizes = [2, 32], strides = [1, 1]} : vector<2x128xf32> to vector<2x32xf32>
    %510 = vector.extract_strided_slice %508 {offsets = [0, 32], sizes = [2, 32], strides = [1, 1]} : vector<2x128xf32> to vector<2x32xf32>
    %511 = vector.extract_strided_slice %508 {offsets = [0, 64], sizes = [2, 32], strides = [1, 1]} : vector<2x128xf32> to vector<2x32xf32>
    %512 = vector.extract_strided_slice %508 {offsets = [0, 96], sizes = [2, 32], strides = [1, 1]} : vector<2x128xf32> to vector<2x32xf32>
    %c1_322 = arith.constant 1 : index
    %c0_323 = arith.constant 0 : index
    %c0_324 = arith.constant 0 : index
    %513 = vector.load %arg9[%c1_322, %c0_323, %c0_324] : memref<2x2x32xf32, #tpu.memory_space<vmem>>, vector<1x2x32xf32>
    %514 = vector.shape_cast %513 : vector<1x2x32xf32> to vector<2x32xf32>
    %515 = arith.mulf %510, %514 : vector<2x32xf32>
    %516 = arith.mulf %509, %511 : vector<2x32xf32>
    %517 = arith.addf %515, %516 : vector<2x32xf32>
    %518 = math.tanh %517 : vector<2x32xf32>
    %519 = arith.mulf %512, %518 : vector<2x32xf32>
    %c1_325 = arith.constant 1 : index
    %c0_326 = arith.constant 0 : index
    %c0_327 = arith.constant 0 : index
    %520 = vector.load %arg9[%c1_325, %c0_326, %c0_327] : memref<2x2x32xf32, #tpu.memory_space<vmem>>, vector<1x2x32xf32>
    %521 = vector.shape_cast %520 : vector<1x2x32xf32> to vector<2x32xf32>
    %522 = vector.shape_cast %517 : vector<2x32xf32> to vector<1x2x32xf32>
    tpu.vector_store %arg9[%c1_325, %c0_326, %c0_327], %522 {strides = array<i32>} : memref<2x2x32xf32, #tpu.memory_space<vmem>>, vector<1x2x32xf32>,
    %c1_328 = arith.constant 1 : index
    %c0_329 = arith.constant 0 : index
    %c0_330 = arith.constant 0 : index
    %523 = vector.load %arg8[%c1_328, %c0_329, %c0_330] : memref<2x2x32xf32, #tpu.memory_space<vmem>>, vector<1x2x32xf32>
    %524 = vector.shape_cast %523 : vector<1x2x32xf32> to vector<2x32xf32>
    %525 = vector.shape_cast %519 : vector<2x32xf32> to vector<1x2x32xf32>
    tpu.vector_store %arg8[%c1_328, %c0_329, %c0_330], %525 {strides = array<i32>} : memref<2x2x32xf32, #tpu.memory_space<vmem>>, vector<1x2x32xf32>,
    %c0_331 = arith.constant 0 : index
    %c0_332 = arith.constant 0 : index
    %526 = vector.load %arg11[%c0_331, %c0_332] : memref<14x32xf32, #tpu.memory_space<vmem>>, vector<2x32xf32>
    tpu.vector_store %arg11[%c0_331, %c0_332], %519 {strides = array<i32>} : memref<14x32xf32, #tpu.memory_space<vmem>>, vector<2x32xf32>,
    %c0_333 = arith.constant 0 : index
    %c0_334 = arith.constant 0 : index
    %527 = vector.load %arg10[%c0_333, %c0_334] : memref<14x32xf32, #tpu.memory_space<vmem>>, vector<14x32xf32>
    %528 = arith.truncf %527 : vector<14x32xf32> to vector<14x32xbf16>
    %c0_335 = arith.constant 0 : index
    %c0_336 = arith.constant 0 : index
    %c0_337 = arith.constant 0 : index
    %529 = vector.load %arg4[%c0_335, %c0_336, %c0_337] : memref<2x32x32xbf16, #tpu.memory_space<vmem>>, vector<1x32x32xbf16>
    %530 = vector.shape_cast %529 : vector<1x32x32xbf16> to vector<32x32xbf16>
    %cst_338 = arith.constant dense<0.000000e+00> : vector<14x32xf32>
    %531 = tpu.matmul %528, %530, %cst_338 {dimension_numbers = #tpu.dot_dimension_numbers<[1], [0], [0], [1], [0, 0, 1, 1], [], []>} : vector<14x32xbf16>, vector<32x32xbf16>, vector<14x32xf32> -> vector<14x32xf32>
    %c0_339 = arith.constant 0 : index
    %c0_340 = arith.constant 0 : index
    %532 = vector.load %arg11[%c0_339, %c0_340] : memref<14x32xf32, #tpu.memory_space<vmem>>, vector<14x32xf32>
    %533 = arith.truncf %532 : vector<14x32xf32> to vector<14x32xbf16>
    %c1_341 = arith.constant 1 : index
    %c0_342 = arith.constant 0 : index
    %c0_343 = arith.constant 0 : index
    %534 = vector.load %arg4[%c1_341, %c0_342, %c0_343] : memref<2x32x32xbf16, #tpu.memory_space<vmem>>, vector<1x32x32xbf16>
    %535 = vector.shape_cast %534 : vector<1x32x32xbf16> to vector<32x32xbf16>
    %cst_344 = arith.constant dense<0.000000e+00> : vector<14x32xf32>
    %536 = tpu.matmul %533, %535, %cst_344 {dimension_numbers = #tpu.dot_dimension_numbers<[1], [0], [0], [1], [0, 0, 1, 1], [], []>} : vector<14x32xbf16>, vector<32x32xbf16>, vector<14x32xf32> -> vector<14x32xf32>
    %537 = arith.addf %531, %536 : vector<14x32xf32>
    %c0_345 = arith.constant 0 : index
    %c0_346 = arith.constant 0 : index
    %538 = vector.load %arg5[%c0_345, %c0_346] : memref<1x32xf32, #tpu.memory_space<vmem>>, vector<1x32xf32>
    %539 = vector.broadcast %538 : vector<1x32xf32> to vector<14x32xf32>
    %540 = arith.addf %537, %539 : vector<14x32xf32>
    %c0_347 = arith.constant 0 : index
    %c0_348 = arith.constant 0 : index
    %541 = vector.load %arg6[%c0_347, %c0_348] : memref<14x32xf32, #tpu.memory_space<vmem>>, vector<14x32xf32>
    tpu.vector_store %arg6[%c0_347, %c0_348], %540 {strides = array<i32>} : memref<14x32xf32, #tpu.memory_space<vmem>>, vector<14x32xf32>,
    return
  }
}

</mosaic_0001>

<llo_original>
// kernel: encoder_forward.9
$region0: #{encoder_forward.9}
  #allocation0 [shape = 'u32[]', space=smem, size = 0x4, offset = 0x4, fixed_abs, tag = 'smem constant byte address 0x4 - core index']
  #allocation1 [shape = 'u32[144,128]{1,0:T(1,128)}', space=vmem, size = 0x12000, scoped, tag = 'internal scratch']
  %s0 = inlined_call_operand.vmem [shape: bf16[9,2048], index: 0, kind: input, shape index: {}]
  %s1 = inlined_call_operand.vmem [shape: bf16[4,9], index: 1, kind: input, shape index: {}]
  %s2 = inlined_call_operand.vmem [shape: f32[4,1], index: 2, kind: input, shape index: {}]
  %s3 = inlined_call_operand.vmem [shape: bf16[4,512], index: 3, kind: output, shape index: {}]
  %s4 = sld [smem:[#allocation0]]
  $region22: #{encoder_forward.9} parent=0
    _
  %s6 = ssub.s32 1, %s4
  %s7 = scalar_select 0, %s6, %s4
  // Predicated region
  $region2: #{encoder_forward.9} parent=0 // pred_check
    _
  $region3: #{encoder_forward.9} parent=0 // pred_check_branch
    %9 = sbr.rel (0) target = $region5
  $region4: #{encoder_forward.9} parent=0 // pred_region
    _
  $region5: #{encoder_forward.9} parent=0 // pred_fallthru
    _
  // Predicated region
  $region6: #{encoder_forward.9} parent=0 // pred_check
    _
  $region7: #{encoder_forward.9} parent=0 // pred_check_branch
    %11 = sbr.rel (0) target = $region9
  $region8: #{encoder_forward.9} parent=0 // pred_region
    _
  $region9: #{encoder_forward.9} parent=0 // pred_fallthru
    _
  // Predicated region
  $region10: #{encoder_forward.9} parent=0 // pred_check
    _
  $region11: #{encoder_forward.9} parent=0 // pred_check_branch
    %13 = sbr.rel (0) target = $region13
  $region12: #{encoder_forward.9} parent=0 // pred_region
    _
  $region13: #{encoder_forward.9} parent=0 // pred_fallthru
    _
  %v15 = vld [vmem:[%s1] sm:$0x3]
  %v16 = vld [vmem:[%s0] sm:$0xff]
  %v17 = vld [vmem:[%s0 + $0x8] sm:$0xff]
  %v18 = vld [vmem:[%s0 + $0x10] sm:$0xff]
  %v19 = vld [vmem:[%s0 + $0x18] sm:$0xff]
  %v20 = vld [vmem:[%s0 + $0x20] sm:$0xff]
  %v21 = vld [vmem:[%s0 + $0x28] sm:$0xff]
  %v22 = vld [vmem:[%s0 + $0x30] sm:$0xff]
  %v23 = vld [vmem:[%s0 + $0x38] sm:$0xff]
  %v24 = vld [vmem:[%s0 + $0x40] sm:$0x11]
  %v25 = vld [vmem:[%s0 + $0x48] sm:$0x11]
  %v26 = vld [vmem:[%s0 + $0x50] sm:$0x11]
  %v27 = vld [vmem:[%s0 + $0x58] sm:$0x11]
  %v28 = vld [vmem:[%s0 + $0x60] sm:$0x11]
  %v29 = vld [vmem:[%s0 + $0x68] sm:$0x11]
  %v30 = vld [vmem:[%s0 + $0x70] sm:$0x11]
  %v31 = vld [vmem:[%s0 + $0x78] sm:$0x11]
  %v48 = vunpack.c.l.b16 %v16
  %v49 = vunpack.c.h.b16 %v16
  %v50 = vunpack.c.l.b16 %v17
  %v51 = vunpack.c.h.b16 %v17
  %v52 = vunpack.c.l.b16 %v18
  %v53 = vunpack.c.h.b16 %v18
  %v54 = vunpack.c.l.b16 %v19
  %v55 = vunpack.c.h.b16 %v19
  %v56 = vunpack.c.l.b16 %v20
  %v57 = vunpack.c.h.b16 %v20
  %v58 = vunpack.c.l.b16 %v21
  %v59 = vunpack.c.h.b16 %v21
  %v60 = vunpack.c.l.b16 %v22
  %v61 = vunpack.c.h.b16 %v22
  %v62 = vunpack.c.l.b16 %v23
  %v63 = vunpack.c.h.b16 %v23
  %v64 = vunpack.c.l.b16 %v24
  %v65 = vunpack.c.h.b16 %v24
  %v66 = vunpack.c.l.b16 %v25
  %v67 = vunpack.c.h.b16 %v25
  %v68 = vunpack.c.l.b16 %v26
  %v69 = vunpack.c.h.b16 %v26
  %v70 = vunpack.c.l.b16 %v27
  %v71 = vunpack.c.h.b16 %v27
  %v72 = vunpack.c.l.b16 %v28
  %v73 = vunpack.c.h.b16 %v28
  %v74 = vunpack.c.l.b16 %v29
  %v75 = vunpack.c.h.b16 %v29
  %v76 = vunpack.c.l.b16 %v30
  %v77 = vunpack.c.h.b16 %v30
  %v78 = vunpack.c.l.b16 %v31
  %v79 = vunpack.c.h.b16 %v31
  %v80 = vpack.c.b16 %v64, %v48
  %v81 = vpack.c.b16 %v65, %v49
  %v82 = vpack.c.b16 %v66, %v50
  %v83 = vpack.c.b16 %v67, %v51
  %v84 = vpack.c.b16 %v68, %v52
  %v85 = vpack.c.b16 %v69, %v53
  %v86 = vpack.c.b16 %v70, %v54
  %v87 = vpack.c.b16 %v71, %v55
  %v88 = vpack.c.b16 %v72, %v56
  %v89 = vpack.c.b16 %v73, %v57
  %v90 = vpack.c.b16 %v74, %v58
  %v91 = vpack.c.b16 %v75, %v59
  %v92 = vpack.c.b16 %v76, %v60
  %v93 = vpack.c.b16 %v77, %v61
  %v94 = vpack.c.b16 %v78, %v62
  %v95 = vpack.c.b16 %v79, %v63
  %vm96 = vcmask 72704
  %v98 = vsel %vm96, %v15, 0
  %vm100 = vcmask 1043456
  %vm101 = vcmask 1044480
  %v102 = vsel %vm100, 4294967295, 65535
  %v103 = vsel %vm101, %v102, 0
  %v105 = vand.u32 %v80, %v103
  %v108 = vand.u32 %v81, %v103
  %v111 = vand.u32 %v82, %v103
  %v114 = vand.u32 %v83, %v103
  %v117 = vand.u32 %v84, %v103
  %v120 = vand.u32 %v85, %v103
  %v123 = vand.u32 %v86, %v103
  %v126 = vand.u32 %v87, %v103
  %v129 = vand.u32 %v88, %v103
  %v132 = vand.u32 %v89, %v103
  %v135 = vand.u32 %v90, %v103
  %v138 = vand.u32 %v91, %v103
  %v141 = vand.u32 %v92, %v103
  %v144 = vand.u32 %v93, %v103
  %v147 = vand.u32 %v94, %v103
  %v150 = vand.u32 %v95, %v103
  %152 = vmatprep.subr.bf16.mxu0 %v108
  %153 = vmatpush1.bf16.msra.mxu0 %v105
  %154 = vmatprep.subr.bf16.mxu0 0
  %155 = vmatpush1.bf16.msra.mxu0 0
  %156 = vmatprep.subr.bf16.mxu0 0
  %157 = vmatpush1.bf16.msra.mxu0 0
  %158 = vmatprep.subr.bf16.mxu0 0
  %159 = vmatpush1.bf16.msra.mxu0 0
  %160 = vmatprep.subr.bf16.mxu0 0
  %161 = vmatpush1.bf16.msra.mxu0 0
  %162 = vmatprep.subr.bf16.mxu0 0
  %163 = vmatpush1.bf16.msra.mxu0 0
  %164 = vmatprep.subr.bf16.mxu0 0
  %165 = vmatpush1.bf16.msra.mxu0 0
  %166 = vmatprep.subr.bf16.mxu0 0
  %167 = vmatpush1.bf16.msra.mxu0 0
  %168 = vmatprep.subr.bf16.mxu0 0
  %169 = vmatpush1.bf16.msra.mxu0 0
  %170 = vmatprep.subr.bf16.mxu0 0
  %171 = vmatpush1.bf16.msra.mxu0 0
  %172 = vmatprep.subr.bf16.mxu0 0
  %173 = vmatpush1.bf16.msra.mxu0 0
  %174 = vmatprep.subr.bf16.mxu0 0
  %175 = vmatpush1.bf16.msra.mxu0 0
  %176 = vmatprep.subr.bf16.mxu0 0
  %177 = vmatpush1.bf16.msra.mxu0 0
  %178 = vmatprep.subr.bf16.mxu0 0
  %179 = vmatpush1.bf16.msra.mxu0 0
  %180 = vmatprep.subr.bf16.mxu0 0
  %181 = vmatpush1.bf16.msra.mxu0 0
  %182 = vmatprep.subr.bf16.mxu0 0
  %183 = vmatpush1.bf16.msra.mxu0 0
  %184 = vmatprep.mubr.bf16.mxu0 0
  %185 = vmatmul.mubr.bf16.gmra.mrb[0].mxu0 %v98
  %v186 = vpop.f32.mrb[0].mxu0
  %v187 = vadd.f32 0.0, %v186
  %v188 = vpop.f32.mrb[0].mxu0
  %v189 = vadd.f32 0.0, %v188
  %v190 = vpop.f32.mrb[0].mxu0
  %v191 = vpop.f32.mrb[0].mxu0
  %192 = vdwg.mxu0
  %193 = vmatprep.subr.bf16.mxu0 %v114
  %194 = vmatpush1.bf16.msra.mxu0 %v111
  %195 = vmatprep.subr.bf16.mxu0 0
  %196 = vmatpush1.bf16.msra.mxu0 0
  %197 = vmatprep.subr.bf16.mxu0 0
  %198 = vmatpush1.bf16.msra.mxu0 0
  %199 = vmatprep.subr.bf16.mxu0 0
  %200 = vmatpush1.bf16.msra.mxu0 0
  %201 = vmatprep.subr.bf16.mxu0 0
  %202 = vmatpush1.bf16.msra.mxu0 0
  %203 = vmatprep.subr.bf16.mxu0 0
  %204 = vmatpush1.bf16.msra.mxu0 0
  %205 = vmatprep.subr.bf16.mxu0 0
  %206 = vmatpush1.bf16.msra.mxu0 0
  %207 = vmatprep.subr.bf16.mxu0 0
  %208 = vmatpush1.bf16.msra.mxu0 0
  %209 = vmatprep.subr.bf16.mxu0 0
  %210 = vmatpush1.bf16.msra.mxu0 0
  %211 = vmatprep.subr.bf16.mxu0 0
  %212 = vmatpush1.bf16.msra.mxu0 0
  %213 = vmatprep.subr.bf16.mxu0 0
  %214 = vmatpush1.bf16.msra.mxu0 0
  %215 = vmatprep.subr.bf16.mxu0 0
  %216 = vmatpush1.bf16.msra.mxu0 0
  %217 = vmatprep.subr.bf16.mxu0 0
  %218 = vmatpush1.bf16.msra.mxu0 0
  %219 = vmatprep.subr.bf16.mxu0 0
  %220 = vmatpush1.bf16.msra.mxu0 0
  %221 = vmatprep.subr.bf16.mxu0 0
  %222 = vmatpush1.bf16.msra.mxu0 0
  %223 = vmatprep.subr.bf16.mxu0 0
  %224 = vmatpush1.bf16.msra.mxu0 0
  %225 = vmatprep.mubr.bf16.mxu0 0
  %226 = vmatmul.mubr.bf16.gmra.mrb[0].mxu0 %v98
  %v227 = vpop.f32.mrb[0].mxu0
  %v228 = vadd.f32 0.0, %v227
  %v229 = vpop.f32.mrb[0].mxu0
  %v230 = vadd.f32 0.0, %v229
  %v231 = vpop.f32.mrb[0].mxu0
  %v232 = vpop.f32.mrb[0].mxu0
  %233 = vdwg.mxu0
  %234 = vmatprep.subr.bf16.mxu0 %v120
  %235 = vmatpush1.bf16.msra.mxu0 %v117
  %236 = vmatprep.subr.bf16.mxu0 0
  %237 = vmatpush1.bf16.msra.mxu0 0
  %238 = vmatprep.subr.bf16.mxu0 0
  %239 = vmatpush1.bf16.msra.mxu0 0
  %240 = vmatprep.subr.bf16.mxu0 0
  %241 = vmatpush1.bf16.msra.mxu0 0
  %242 = vmatprep.subr.bf16.mxu0 0
  %243 = vmatpush1.bf16.msra.mxu0 0
  %244 = vmatprep.subr.bf16.mxu0 0
  %245 = vmatpush1.bf16.msra.mxu0 0
  %246 = vmatprep.subr.bf16.mxu0 0
  %247 = vmatpush1.bf16.msra.mxu0 0
  %248 = vmatprep.subr.bf16.mxu0 0
  %249 = vmatpush1.bf16.msra.mxu0 0
  %250 = vmatprep.subr.bf16.mxu0 0
  %251 = vmatpush1.bf16.msra.mxu0 0
  %252 = vmatprep.subr.bf16.mxu0 0
  %253 = vmatpush1.bf16.msra.mxu0 0
  %254 = vmatprep.subr.bf16.mxu0 0
  %255 = vmatpush1.bf16.msra.mxu0 0
  %256 = vmatprep.subr.bf16.mxu0 0
  %257 = vmatpush1.bf16.msra.mxu0 0
  %258 = vmatprep.subr.bf16.mxu0 0
  %259 = vmatpush1.bf16.msra.mxu0 0
  %260 = vmatprep.subr.bf16.mxu0 0
  %261 = vmatpush1.bf16.msra.mxu0 0
  %262 = vmatprep.subr.bf16.mxu0 0
  %263 = vmatpush1.bf16.msra.mxu0 0
  %264 = vmatprep.subr.bf16.mxu0 0
  %265 = vmatpush1.bf16.msra.mxu0 0
  %266 = vmatprep.mubr.bf16.mxu0 0
  %267 = vmatmul.mubr.bf16.gmra.mrb[0].mxu0 %v98
  %v268 = vpop.f32.mrb[0].mxu0
  %v269 = vadd.f32 0.0, %v268
  %v270 = vpop.f32.mrb[0].mxu0
  %v271 = vadd.f32 0.0, %v270
  %v272 = vpop.f32.mrb[0].mxu0
  %v273 = vpop.f32.mrb[0].mxu0
  %274 = vdwg.mxu0
  %275 = vmatprep.subr.bf16.mxu0 %v126
  %276 = vmatpush1.bf16.msra.mxu0 %v123
  %277 = vmatprep.subr.bf16.mxu0 0
  %278 = vmatpush1.bf16.msra.mxu0 0
  %279 = vmatprep.subr.bf16.mxu0 0
  %280 = vmatpush1.bf16.msra.mxu0 0
  %281 = vmatprep.subr.bf16.mxu0 0
  %282 = vmatpush1.bf16.msra.mxu0 0
  %283 = vmatprep.subr.bf16.mxu0 0
  %284 = vmatpush1.bf16.msra.mxu0 0
  %285 = vmatprep.subr.bf16.mxu0 0
  %286 = vmatpush1.bf16.msra.mxu0 0
  %287 = vmatprep.subr.bf16.mxu0 0
  %288 = vmatpush1.bf16.msra.mxu0 0
  %289 = vmatprep.subr.bf16.mxu0 0
  %290 = vmatpush1.bf16.msra.mxu0 0
  %291 = vmatprep.subr.bf16.mxu0 0
  %292 = vmatpush1.bf16.msra.mxu0 0
  %293 = vmatprep.subr.bf16.mxu0 0
  %294 = vmatpush1.bf16.msra.mxu0 0
  %295 = vmatprep.subr.bf16.mxu0 0
  %296 = vmatpush1.bf16.msra.mxu0 0
  %297 = vmatprep.subr.bf16.mxu0 0
  %298 = vmatpush1.bf16.msra.mxu0 0
  %299 = vmatprep.subr.bf16.mxu0 0
  %300 = vmatpush1.bf16.msra.mxu0 0
  %301 = vmatprep.subr.bf16.mxu0 0
  %302 = vmatpush1.bf16.msra.mxu0 0
  %303 = vmatprep.subr.bf16.mxu0 0
  %304 = vmatpush1.bf16.msra.mxu0 0
  %305 = vmatprep.subr.bf16.mxu0 0
  %306 = vmatpush1.bf16.msra.mxu0 0
  %307 = vmatprep.mubr.bf16.mxu0 0
  %308 = vmatmul.mubr.bf16.gmra.mrb[0].mxu0 %v98
  %v309 = vpop.f32.mrb[0].mxu0
  %v310 = vadd.f32 0.0, %v309
  %v311 = vpop.f32.mrb[0].mxu0
  %v312 = vadd.f32 0.0, %v311
  %v313 = vpop.f32.mrb[0].mxu0
  %v314 = vpop.f32.mrb[0].mxu0
  %315 = vdwg.mxu0
  %316 = vmatprep.subr.bf16.mxu0 %v132
  %317 = vmatpush1.bf16.msra.mxu0 %v129
  %318 = vmatprep.subr.bf16.mxu0 0
  %319 = vmatpush1.bf16.msra.mxu0 0
  %320 = vmatprep.subr.bf16.mxu0 0
  %321 = vmatpush1.bf16.msra.mxu0 0
  %322 = vmatprep.subr.bf16.mxu0 0
  %323 = vmatpush1.bf16.msra.mxu0 0
  %324 = vmatprep.subr.bf16.mxu0 0
  %325 = vmatpush1.bf16.msra.mxu0 0
  %326 = vmatprep.subr.bf16.mxu0 0
  %327 = vmatpush1.bf16.msra.mxu0 0
  %328 = vmatprep.subr.bf16.mxu0 0
  %329 = vmatpush1.bf16.msra.mxu0 0
  %330 = vmatprep.subr.bf16.mxu0 0
  %331 = vmatpush1.bf16.msra.mxu0 0
  %332 = vmatprep.subr.bf16.mxu0 0
  %333 = vmatpush1.bf16.msra.mxu0 0
  %334 = vmatprep.subr.bf16.mxu0 0
  %335 = vmatpush1.bf16.msra.mxu0 0
  %336 = vmatprep.subr.bf16.mxu0 0
  %337 = vmatpush1.bf16.msra.mxu0 0
  %338 = vmatprep.subr.bf16.mxu0 0
  %339 = vmatpush1.bf16.msra.mxu0 0
  %340 = vmatprep.subr.bf16.mxu0 0
  %341 = vmatpush1.bf16.msra.mxu0 0
  %342 = vmatprep.subr.bf16.mxu0 0
  %343 = vmatpush1.bf16.msra.mxu0 0
  %344 = vmatprep.subr.bf16.mxu0 0
  %345 = vmatpush1.bf16.msra.mxu0 0
  %346 = vmatprep.subr.bf16.mxu0 0
  %347 = vmatpush1.bf16.msra.mxu0 0
  %348 = vmatprep.mubr.bf16.mxu0 0
  %349 = vmatmul.mubr.bf16.gmra.mrb[0].mxu0 %v98
  %v350 = vpop.f32.mrb[0].mxu0
  %v351 = vadd.f32 0.0, %v350
  %v352 = vpop.f32.mrb[0].mxu0
  %v353 = vadd.f32 0.0, %v352
  %v354 = vpop.f32.mrb[0].mxu0
  %v355 = vpop.f32.mrb[0].mxu0
  %356 = vdwg.mxu0
  %357 = vmatprep.subr.bf16.mxu0 %v138
  %358 = vmatpush1.bf16.msra.mxu0 %v135
  %359 = vmatprep.subr.bf16.mxu0 0
  %360 = vmatpush1.bf16.msra.mxu0 0
  %361 = vmatprep.subr.bf16.mxu0 0
  %362 = vmatpush1.bf16.msra.mxu0 0
  %363 = vmatprep.subr.bf16.mxu0 0
  %364 = vmatpush1.bf16.msra.mxu0 0
  %365 = vmatprep.subr.bf16.mxu0 0
  %366 = vmatpush1.bf16.msra.mxu0 0
  %367 = vmatprep.subr.bf16.mxu0 0
  %368 = vmatpush1.bf16.msra.mxu0 0
  %369 = vmatprep.subr.bf16.mxu0 0
  %370 = vmatpush1.bf16.msra.mxu0 0
  %371 = vmatprep.subr.bf16.mxu0 0
  %372 = vmatpush1.bf16.msra.mxu0 0
  %373 = vmatprep.subr.bf16.mxu0 0
  %374 = vmatpush1.bf16.msra.mxu0 0
  %375 = vmatprep.subr.bf16.mxu0 0
  %376 = vmatpush1.bf16.msra.mxu0 0
  %377 = vmatprep.subr.bf16.mxu0 0
  %378 = vmatpush1.bf16.msra.mxu0 0
  %379 = vmatprep.subr.bf16.mxu0 0
  %380 = vmatpush1.bf16.msra.mxu0 0
  %381 = vmatprep.subr.bf16.mxu0 0
  %382 = vmatpush1.bf16.msra.mxu0 0
  %383 = vmatprep.subr.bf16.mxu0 0
  %384 = vmatpush1.bf16.msra.mxu0 0
  %385 = vmatprep.subr.bf16.mxu0 0
  %386 = vmatpush1.bf16.msra.mxu0 0
  %387 = vmatprep.subr.bf16.mxu0 0
  %388 = vmatpush1.bf16.msra.mxu0 0
  %389 = vmatprep.mubr.bf16.mxu0 0
  %390 = vmatmul.mubr.bf16.gmra.mrb[0].mxu0 %v98
  %v391 = vpop.f32.mrb[0].mxu0
  %v392 = vadd.f32 0.0, %v391
  %v393 = vpop.f32.mrb[0].mxu0
  %v394 = vadd.f32 0.0, %v393
  %v395 = vpop.f32.mrb[0].mxu0
  %v396 = vpop.f32.mrb[0].mxu0
  %397 = vdwg.mxu0
  %398 = vmatprep.subr.bf16.mxu0 %v144
  %399 = vmatpush1.bf16.msra.mxu0 %v141
  %400 = vmatprep.subr.bf16.mxu0 0
  %401 = vmatpush1.bf16.msra.mxu0 0
  %402 = vmatprep.subr.bf16.mxu0 0
  %403 = vmatpush1.bf16.msra.mxu0 0
  %404 = vmatprep.subr.bf16.mxu0 0
  %405 = vmatpush1.bf16.msra.mxu0 0
  %406 = vmatprep.subr.bf16.mxu0 0
  %407 = vmatpush1.bf16.msra.mxu0 0
  %408 = vmatprep.subr.bf16.mxu0 0
  %409 = vmatpush1.bf16.msra.mxu0 0
  %410 = vmatprep.subr.bf16.mxu0 0
  %411 = vmatpush1.bf16.msra.mxu0 0
  %412 = vmatprep.subr.bf16.mxu0 0
  %413 = vmatpush1.bf16.msra.mxu0 0
  %414 = vmatprep.subr.bf16.mxu0 0
  %415 = vmatpush1.bf16.msra.mxu0 0
  %416 = vmatprep.subr.bf16.mxu0 0
  %417 = vmatpush1.bf16.msra.mxu0 0
  %418 = vmatprep.subr.bf16.mxu0 0
  %419 = vmatpush1.bf16.msra.mxu0 0
  %420 = vmatprep.subr.bf16.mxu0 0
  %421 = vmatpush1.bf16.msra.mxu0 0
  %422 = vmatprep.subr.bf16.mxu0 0
  %423 = vmatpush1.bf16.msra.mxu0 0
  %424 = vmatprep.subr.bf16.mxu0 0
  %425 = vmatpush1.bf16.msra.mxu0 0
  %426 = vmatprep.subr.bf16.mxu0 0
  %427 = vmatpush1.bf16.msra.mxu0 0
  %428 = vmatprep.subr.bf16.mxu0 0
  %429 = vmatpush1.bf16.msra.mxu0 0
  %430 = vmatprep.mubr.bf16.mxu0 0
  %431 = vmatmul.mubr.bf16.gmra.mrb[0].mxu0 %v98
  %v432 = vpop.f32.mrb[0].mxu0
  %v433 = vadd.f32 0.0, %v432
  %v434 = vpop.f32.mrb[0].mxu0
  %v435 = vadd.f32 0.0, %v434
  %v436 = vpop.f32.mrb[0].mxu0
  %v437 = vpop.f32.mrb[0].mxu0
  %438 = vdwg.mxu0
  %439 = vmatprep.subr.bf16.mxu0 %v150
  %440 = vmatpush1.bf16.msra.mxu0 %v147
  %441 = vmatprep.subr.bf16.mxu0 0
  %442 = vmatpush1.bf16.msra.mxu0 0
  %443 = vmatprep.subr.bf16.mxu0 0
  %444 = vmatpush1.bf16.msra.mxu0 0
  %445 = vmatprep.subr.bf16.mxu0 0
  %446 = vmatpush1.bf16.msra.mxu0 0
  %447 = vmatprep.subr.bf16.mxu0 0
  %448 = vmatpush1.bf16.msra.mxu0 0
  %449 = vmatprep.subr.bf16.mxu0 0
  %450 = vmatpush1.bf16.msra.mxu0 0
  %451 = vmatprep.subr.bf16.mxu0 0
  %452 = vmatpush1.bf16.msra.mxu0 0
  %453 = vmatprep.subr.bf16.mxu0 0
  %454 = vmatpush1.bf16.msra.mxu0 0
  %455 = vmatprep.subr.bf16.mxu0 0
  %456 = vmatpush1.bf16.msra.mxu0 0
  %457 = vmatprep.subr.bf16.mxu0 0
  %458 = vmatpush1.bf16.msra.mxu0 0
  %459 = vmatprep.subr.bf16.mxu0 0
  %460 = vmatpush1.bf16.msra.mxu0 0
  %461 = vmatprep.subr.bf16.mxu0 0
  %462 = vmatpush1.bf16.msra.mxu0 0
  %463 = vmatprep.subr.bf16.mxu0 0
  %464 = vmatpush1.bf16.msra.mxu0 0
  %465 = vmatprep.subr.bf16.mxu0 0
  %466 = vmatpush1.bf16.msra.mxu0 0
  %467 = vmatprep.subr.bf16.mxu0 0
  %468 = vmatpush1.bf16.msra.mxu0 0
  %469 = vmatprep.subr.bf16.mxu0 0
  %470 = vmatpush1.bf16.msra.mxu0 0
  %471 = vmatprep.mubr.bf16.mxu0 0
  %472 = vmatmul.mubr.bf16.gmra.mrb[0].mxu0 %v98
  %v473 = vpop.f32.mrb[0].mxu0
  %v474 = vadd.f32 0.0, %v473
  %v475 = vpop.f32.mrb[0].mxu0
  %v476 = vadd.f32 0.0, %v475
  %v477 = vpop.f32.mrb[0].mxu0
  %v478 = vpop.f32.mrb[0].mxu0
  %479 = vdwg.mxu0
  %v480 = vmax.f32 %v187, %v269
  %v481 = vmax.f32 %v189, %v271
  %v482 = vmax.f32 %v228, %v310
  %v483 = vmax.f32 %v230, %v312
  %v484 = vmax.f32 %v480, %v351
  %v485 = vmax.f32 %v481, %v353
  %v486 = vmax.f32 %v482, %v392
  %v487 = vmax.f32 %v483, %v394
  %v488 = vmax.f32 %v484, %v433
  %v489 = vmax.f32 %v485, %v435
  %v490 = vmax.f32 %v486, %v474
  %v491 = vmax.f32 %v487, %v476
  %v492 = vld [vmem:[%s2] sm:$0xf]
  %494 = vset.pattern.permute.xlu0 0
  %495 = vperm.xlu0 %494, %v492
  %v496 = vpop.permute.xlu0 %495
  %v498 = vadd.f32 %v488, %v496
  %v499 = vadd.f32 %v489, %v496
  %v500 = vadd.f32 %v490, %v496
  %v501 = vadd.f32 %v491, %v496
  %v502 = vmax.f32 %v498, 0.0
  %v503 = vmax.f32 %v499, 0.0
  %v504 = vmax.f32 %v500, 0.0
  %v505 = vmax.f32 %v501, 0.0
  %v506 = vpack.c.bf16 %v502, %v502
  %v507 = vpack.c.bf16 %v503, %v503
  %v508 = vpack.c.bf16 %v504, %v504
  %v509 = vpack.c.bf16 %v505, %v505
  %v514 = vcombine.low %v506, %v507
  %v515 = vcombine.low %v508, %v509
  %v517 = vunpack.c.l.s4 1983009808
  %v518 = vunpack.c.0.s8 %v517
  %v519 = vlaneseq
  %v520 = vshrl.u32 %v519, 7
  %v521 = vsub.s32 %v518, %v520
  %v522 = vrot.slane %v514, %v521
  %v524 = vunpack.c.l.s4 1983009808
  %v525 = vunpack.c.0.s8 %v524
  %v526 = vlaneseq
  %v527 = vshrl.u32 %v526, 7
  %v528 = vsub.s32 %v525, %v527
  %v529 = vrot.slane %v515, %v528
  %v530 = vcombine.low %v522, %v529
  %532 = vst [vmem:[%s3] sm:$0xff] %v530
  // Predicated region
  $region14: #{encoder_forward.9} parent=0 // pred_check
    _
  $region15: #{encoder_forward.9} parent=0 // pred_check_branch
    %534 = sbr.rel (0) target = $region17
  $region16: #{encoder_forward.9} parent=0 // pred_region
    _
  $region17: #{encoder_forward.9} parent=0 // pred_fallthru
    _
  // Predicated region
  $region18: #{encoder_forward.9} parent=0 // pred_check
    _
  $region19: #{encoder_forward.9} parent=0 // pred_check_branch
    %536 = sbr.rel (0) target = $region21
  $region20: #{encoder_forward.9} parent=0 // pred_region
    _
  $region21: #{encoder_forward.9} parent=0 // pred_fallthru
    _

// kernel: encoder_forward.10
$region0: #{encoder_forward.10}
  #allocation0 [shape = 'u32[]', space=smem, size = 0x4, offset = 0x4, fixed_abs, tag = 'smem constant byte address 0x4 - core index']
  #allocation1 [shape = 'u32[144,128]{1,0:T(1,128)}', space=vmem, size = 0x12000, scoped, tag = 'internal scratch']
  %s0 = inlined_call_operand.vmem [shape: bf16[36,512], index: 0, kind: input, shape index: {}]
  %s1 = inlined_call_operand.vmem [shape: bf16[8,36], index: 1, kind: input, shape index: {}]
  %s2 = inlined_call_operand.vmem [shape: f32[8,1], index: 2, kind: input, shape index: {}]
  %s3 = inlined_call_operand.vmem [shape: bf16[8,128], index: 3, kind: output, shape index: {}]
  %s4 = sld [smem:[#allocation0]]
  $region22: #{encoder_forward.10} parent=0
    _
  %s6 = ssub.s32 1, %s4
  %s7 = scalar_select 0, %s6, %s4
  // Predicated region
  $region2: #{encoder_forward.10} parent=0 // pred_check
    _
  $region3: #{encoder_forward.10} parent=0 // pred_check_branch
    %9 = sbr.rel (0) target = $region5
  $region4: #{encoder_forward.10} parent=0 // pred_region
    _
  $region5: #{encoder_forward.10} parent=0 // pred_fallthru
    _
  // Predicated region
  $region6: #{encoder_forward.10} parent=0 // pred_check
    _
  $region7: #{encoder_forward.10} parent=0 // pred_check_branch
    %11 = sbr.rel (0) target = $region9
  $region8: #{encoder_forward.10} parent=0 // pred_region
    _
  $region9: #{encoder_forward.10} parent=0 // pred_fallthru
    _
  // Predicated region
  $region10: #{encoder_forward.10} parent=0 // pred_check
    _
  $region11: #{encoder_forward.10} parent=0 // pred_check_branch
    %13 = sbr.rel (0) target = $region13
  $region12: #{encoder_forward.10} parent=0 // pred_region
    _
  $region13: #{encoder_forward.10} parent=0 // pred_fallthru
    _
  %v15 = vld [vmem:[%s1] sm:$0xf]
  %v16 = vld [vmem:[%s0] sm:$0xff]
  %v17 = vld [vmem:[%s0 + $0x8] sm:$0xff]
  %v18 = vld [vmem:[%s0 + $0x10] sm:$0xff]
  %v19 = vld [vmem:[%s0 + $0x18] sm:$0xff]
  %v20 = vld [vmem:[%s0 + $0x20] sm:$0xff]
  %v21 = vld [vmem:[%s0 + $0x28] sm:$0xff]
  %v22 = vld [vmem:[%s0 + $0x30] sm:$0xff]
  %v23 = vld [vmem:[%s0 + $0x38] sm:$0xff]
  %v24 = vld [vmem:[%s0 + $0x40] sm:$0x33]
  %v25 = vld [vmem:[%s0 + $0x48] sm:$0x33]
  %v36 = vunpack.c.l.b16 %v16
  %v37 = vunpack.c.h.b16 %v16
  %v38 = vunpack.c.l.b16 %v17
  %v39 = vunpack.c.h.b16 %v17
  %v40 = vunpack.c.l.b16 %v18
  %v41 = vunpack.c.h.b16 %v18
  %v42 = vunpack.c.l.b16 %v19
  %v43 = vunpack.c.h.b16 %v19
  %v44 = vunpack.c.l.b16 %v20
  %v45 = vunpack.c.h.b16 %v20
  %v46 = vunpack.c.l.b16 %v21
  %v47 = vunpack.c.h.b16 %v21
  %v48 = vunpack.c.l.b16 %v22
  %v49 = vunpack.c.h.b16 %v22
  %v50 = vunpack.c.l.b16 %v23
  %v51 = vunpack.c.h.b16 %v23
  %v52 = vunpack.c.l.b16 %v24
  %v53 = vunpack.c.h.b16 %v24
  %v54 = vunpack.c.l.b16 %v25
  %v55 = vunpack.c.h.b16 %v25
  %v56 = vpack.c.b16 %v40, %v36
  %v57 = vpack.c.b16 %v41, %v37
  %v58 = vpack.c.b16 %v42, %v38
  %v59 = vpack.c.b16 %v43, %v39
  %v60 = vpack.c.b16 %v48, %v44
  %v61 = vpack.c.b16 %v49, %v45
  %v62 = vpack.c.b16 %v50, %v46
  %v63 = vpack.c.b16 %v51, %v47
  %v64 = vpack.c.b16 %v52, %v52
  %v65 = vpack.c.b16 %v53, %v53
  %v66 = vpack.c.b16 %v54, %v54
  %v67 = vpack.c.b16 %v55, %v55
  %vm76 = vcmask 293888
  %v78 = vsel %vm76, %v15, 0
  %vm80 = vcmask 1041408
  %v82 = vsel %vm80, %v64, 0
  %v85 = vsel %vm80, %v65, 0
  %v88 = vsel %vm80, %v66, 0
  %v91 = vsel %vm80, %v67, 0
  %93 = vmatprep.subr.bf16.mxu0 %v57
  %94 = vmatpush1.bf16.msra.mxu0 %v56
  %95 = vmatprep.subr.bf16.mxu0 %v61
  %96 = vmatpush1.bf16.msra.mxu0 %v60
  %97 = vmatprep.subr.bf16.mxu0 %v85
  %98 = vmatpush1.bf16.msra.mxu0 %v82
  %99 = vmatprep.subr.bf16.mxu0 0
  %100 = vmatpush1.bf16.msra.mxu0 0
  %101 = vmatprep.subr.bf16.mxu0 0
  %102 = vmatpush1.bf16.msra.mxu0 0
  %103 = vmatprep.subr.bf16.mxu0 0
  %104 = vmatpush1.bf16.msra.mxu0 0
  %105 = vmatprep.subr.bf16.mxu0 0
  %106 = vmatpush1.bf16.msra.mxu0 0
  %107 = vmatprep.subr.bf16.mxu0 0
  %108 = vmatpush1.bf16.msra.mxu0 0
  %109 = vmatprep.subr.bf16.mxu0 0
  %110 = vmatpush1.bf16.msra.mxu0 0
  %111 = vmatprep.subr.bf16.mxu0 0
  %112 = vmatpush1.bf16.msra.mxu0 0
  %113 = vmatprep.subr.bf16.mxu0 0
  %114 = vmatpush1.bf16.msra.mxu0 0
  %115 = vmatprep.subr.bf16.mxu0 0
  %116 = vmatpush1.bf16.msra.mxu0 0
  %117 = vmatprep.subr.bf16.mxu0 0
  %118 = vmatpush1.bf16.msra.mxu0 0
  %119 = vmatprep.subr.bf16.mxu0 0
  %120 = vmatpush1.bf16.msra.mxu0 0
  %121 = vmatprep.subr.bf16.mxu0 0
  %122 = vmatpush1.bf16.msra.mxu0 0
  %123 = vmatprep.subr.bf16.mxu0 0
  %124 = vmatpush1.bf16.msra.mxu0 0
  %125 = vmatprep.mubr.bf16.mxu0 0
  %126 = vmatmul.mubr.bf16.gmra.mrb[0].mxu0 %v78
  %v127 = vpop.f32.mrb[0].mxu0
  %v128 = vadd.f32 0.0, %v127
  %v129 = vpop.f32.mrb[0].mxu0
  %v130 = vadd.f32 0.0, %v129
  %v131 = vpop.f32.mrb[0].mxu0
  %v132 = vpop.f32.mrb[0].mxu0
  %133 = vdwg.mxu0
  %134 = vmatprep.subr.bf16.mxu0 %v59
  %135 = vmatpush1.bf16.msra.mxu0 %v58
  %136 = vmatprep.subr.bf16.mxu0 %v63
  %137 = vmatpush1.bf16.msra.mxu0 %v62
  %138 = vmatprep.subr.bf16.mxu0 %v91
  %139 = vmatpush1.bf16.msra.mxu0 %v88
  %140 = vmatprep.subr.bf16.mxu0 0
  %141 = vmatpush1.bf16.msra.mxu0 0
  %142 = vmatprep.subr.bf16.mxu0 0
  %143 = vmatpush1.bf16.msra.mxu0 0
  %144 = vmatprep.subr.bf16.mxu0 0
  %145 = vmatpush1.bf16.msra.mxu0 0
  %146 = vmatprep.subr.bf16.mxu0 0
  %147 = vmatpush1.bf16.msra.mxu0 0
  %148 = vmatprep.subr.bf16.mxu0 0
  %149 = vmatpush1.bf16.msra.mxu0 0
  %150 = vmatprep.subr.bf16.mxu0 0
  %151 = vmatpush1.bf16.msra.mxu0 0
  %152 = vmatprep.subr.bf16.mxu0 0
  %153 = vmatpush1.bf16.msra.mxu0 0
  %154 = vmatprep.subr.bf16.mxu0 0
  %155 = vmatpush1.bf16.msra.mxu0 0
  %156 = vmatprep.subr.bf16.mxu0 0
  %157 = vmatpush1.bf16.msra.mxu0 0
  %158 = vmatprep.subr.bf16.mxu0 0
  %159 = vmatpush1.bf16.msra.mxu0 0
  %160 = vmatprep.subr.bf16.mxu0 0
  %161 = vmatpush1.bf16.msra.mxu0 0
  %162 = vmatprep.subr.bf16.mxu0 0
  %163 = vmatpush1.bf16.msra.mxu0 0
  %164 = vmatprep.subr.bf16.mxu0 0
  %165 = vmatpush1.bf16.msra.mxu0 0
  %166 = vmatprep.mubr.bf16.mxu0 0
  %167 = vmatmul.mubr.bf16.gmra.mrb[0].mxu0 %v78
  %v168 = vpop.f32.mrb[0].mxu0
  %v169 = vadd.f32 0.0, %v168
  %v170 = vpop.f32.mrb[0].mxu0
  %v171 = vadd.f32 0.0, %v170
  %v172 = vpop.f32.mrb[0].mxu0
  %v173 = vpop.f32.mrb[0].mxu0
  %174 = vdwg.mxu0
  %v175 = vmax.f32 %v128, %v130
  %v176 = vmax.f32 %v175, %v169
  %v177 = vmax.f32 %v176, %v171
  %v178 = vld [vmem:[%s2] sm:$0xff]
  %180 = vset.pattern.permute.xlu0 0
  %181 = vperm.xlu0 %180, %v178
  %v182 = vpop.permute.xlu0 %181
  %v184 = vadd.f32 %v177, %v182
  %v185 = vmax.f32 %v184, 0.0
  %v186 = vpack.c.bf16 %v185, %v185
  %187 = vst [vmem:[%s3] sm:$0xf] %v186
  // Predicated region
  $region14: #{encoder_forward.10} parent=0 // pred_check
    _
  $region15: #{encoder_forward.10} parent=0 // pred_check_branch
    %189 = sbr.rel (0) target = $region17
  $region16: #{encoder_forward.10} parent=0 // pred_region
    _
  $region17: #{encoder_forward.10} parent=0 // pred_fallthru
    _
  // Predicated region
  $region18: #{encoder_forward.10} parent=0 // pred_check
    _
  $region19: #{encoder_forward.10} parent=0 // pred_check_branch
    %191 = sbr.rel (0) target = $region21
  $region20: #{encoder_forward.10} parent=0 // pred_region
    _
  $region21: #{encoder_forward.10} parent=0 // pred_fallthru
    _

// kernel: encoder_forward.11
$region0: #{encoder_forward.11}
  #allocation0 [shape = 'u32[]', space=smem, size = 0x4, offset = 0x4, fixed_abs, tag = 'smem constant byte address 0x4 - core index']
  #allocation1 [shape = 'u32[144,128]{1,0:T(1,128)}', space=vmem, size = 0x12000, scoped, tag = 'internal scratch']
  %s0 = inlined_call_operand.vmem [shape: bf16[72,128], index: 0, kind: input, shape index: {}]
  %s1 = inlined_call_operand.vmem [shape: bf16[16,72], index: 1, kind: input, shape index: {}]
  %s2 = inlined_call_operand.vmem [shape: f32[16,1], index: 2, kind: input, shape index: {}]
  %s3 = inlined_call_operand.vmem [shape: bf16[16,128], index: 3, kind: output, shape index: {}]
  %s4 = sld [smem:[#allocation0]]
  $region22: #{encoder_forward.11} parent=0
    _
  %s6 = ssub.s32 1, %s4
  %s7 = scalar_select 0, %s6, %s4
  // Predicated region
  $region2: #{encoder_forward.11} parent=0 // pred_check
    _
  $region3: #{encoder_forward.11} parent=0 // pred_check_branch
    %9 = sbr.rel (0) target = $region5
  $region4: #{encoder_forward.11} parent=0 // pred_region
    _
  $region5: #{encoder_forward.11} parent=0 // pred_fallthru
    _
  // Predicated region
  $region6: #{encoder_forward.11} parent=0 // pred_check
    _
  $region7: #{encoder_forward.11} parent=0 // pred_check_branch
    %11 = sbr.rel (0) target = $region9
  $region8: #{encoder_forward.11} parent=0 // pred_region
    _
  $region9: #{encoder_forward.11} parent=0 // pred_fallthru
    _
  // Predicated region
  $region10: #{encoder_forward.11} parent=0 // pred_check
    _
  $region11: #{encoder_forward.11} parent=0 // pred_check_branch
    %13 = sbr.rel (0) target = $region13
  $region12: #{encoder_forward.11} parent=0 // pred_region
    _
  $region13: #{encoder_forward.11} parent=0 // pred_fallthru
    _
  %v15 = vld [vmem:[%s1] sm:$0xf]
  %v16 = vld [vmem:[%s1 + $0x4] sm:$0xf]
  %v17 = vld [vmem:[%s0] sm:$0xf]
  %v18 = vld [vmem:[%s0 + $0x4] sm:$0xf]
  %v19 = vld [vmem:[%s0 + $0x8] sm:$0xf]
  %v20 = vld [vmem:[%s0 + $0xc] sm:$0xf]
  %v21 = vld [vmem:[%s0 + $0x10] sm:$0xf]
  %v22 = vld [vmem:[%s0 + $0x14] sm:$0xf]
  %v23 = vld [vmem:[%s0 + $0x18] sm:$0xf]
  %v24 = vld [vmem:[%s0 + $0x1c] sm:$0xf]
  %v25 = vld [vmem:[%s0 + $0x20] sm:$0xf]
  %v26 = vld [vmem:[%s2] sm:$0xff]
  %v27 = vld [vmem:[%s2 + $0x8] sm:$0xff]
  %29 = vset.pattern.permute.xlu0 0
  %30 = vperm.xlu0 %29, %v26
  %v31 = vpop.permute.xlu0 %30
  %34 = vset.pattern.permute.xlu0 0
  %35 = vperm.xlu0 %34, %v27
  %v36 = vpop.permute.xlu0 %35
  %v40 = vunpack.c.l.b16 %v15
  %v41 = vunpack.c.l.b16 %v16
  %v42 = vpack.c.b16 %v41, %v40
  %v52 = vunpack.c.l.b16 %v17
  %v53 = vunpack.c.l.b16 %v18
  %v54 = vunpack.c.l.b16 %v19
  %v55 = vunpack.c.l.b16 %v20
  %v56 = vunpack.c.l.b16 %v21
  %v57 = vunpack.c.l.b16 %v22
  %v58 = vunpack.c.l.b16 %v23
  %v59 = vunpack.c.l.b16 %v24
  %v60 = vunpack.c.l.b16 %v25
  %v61 = vpack.c.b16 %v53, %v52
  %v62 = vpack.c.b16 %v55, %v54
  %v63 = vpack.c.b16 %v57, %v56
  %v64 = vpack.c.b16 %v59, %v58
  %v65 = vpack.c.b16 %v60, %v60
  %vm70 = vcmask 588800
  %v72 = vsel %vm70, %v42, 0
  %vm74 = vcmask 1043456
  %v76 = vsel %vm74, %v65, 0
  %78 = vmatprep.subr.bf16.mxu0 0
  %79 = vmatpush1.bf16.msra.mxu0 %v61
  %80 = vmatprep.subr.bf16.mxu0 0
  %81 = vmatpush1.bf16.msra.mxu0 %v62
  %82 = vmatprep.subr.bf16.mxu0 0
  %83 = vmatpush1.bf16.msra.mxu0 %v63
  %84 = vmatprep.subr.bf16.mxu0 0
  %85 = vmatpush1.bf16.msra.mxu0 %v64
  %86 = vmatprep.subr.bf16.mxu0 0
  %87 = vmatpush1.bf16.msra.mxu0 %v76
  %88 = vmatprep.subr.bf16.mxu0 0
  %89 = vmatpush1.bf16.msra.mxu0 0
  %90 = vmatprep.subr.bf16.mxu0 0
  %91 = vmatpush1.bf16.msra.mxu0 0
  %92 = vmatprep.subr.bf16.mxu0 0
  %93 = vmatpush1.bf16.msra.mxu0 0
  %94 = vmatprep.subr.bf16.mxu0 0
  %95 = vmatpush1.bf16.msra.mxu0 0
  %96 = vmatprep.subr.bf16.mxu0 0
  %97 = vmatpush1.bf16.msra.mxu0 0
  %98 = vmatprep.subr.bf16.mxu0 0
  %99 = vmatpush1.bf16.msra.mxu0 0
  %100 = vmatprep.subr.bf16.mxu0 0
  %101 = vmatpush1.bf16.msra.mxu0 0
  %102 = vmatprep.subr.bf16.mxu0 0
  %103 = vmatpush1.bf16.msra.mxu0 0
  %104 = vmatprep.subr.bf16.mxu0 0
  %105 = vmatpush1.bf16.msra.mxu0 0
  %106 = vmatprep.subr.bf16.mxu0 0
  %107 = vmatpush1.bf16.msra.mxu0 0
  %108 = vmatprep.subr.bf16.mxu0 0
  %109 = vmatpush1.bf16.msra.mxu0 0
  %110 = vmatprep.mubr.bf16.mxu0 0
  %111 = vmatmul.mubr.bf16.gmra.mrb[0].mxu0 %v72
  %v112 = vpop.f32.mrb[0].mxu0
  %v113 = vadd.f32 %v31, %v112
  %v114 = vpop.f32.mrb[0].mxu0
  %v115 = vpop.f32.mrb[0].mxu0
  %v116 = vadd.f32 %v36, %v115
  %v117 = vpop.f32.mrb[0].mxu0
  %118 = vdwg.mxu0
  %v119 = vmax.f32 %v113, 0.0
  %v120 = vmax.f32 %v116, 0.0
  %v121 = vpack.c.bf16 %v120, %v119
  %v123 = vunpack.c.l.b16 %v121
  %v124 = vunpack.c.h.b16 %v121
  %v125 = vpack.c.b16 %v123, %v123
  %v126 = vpack.c.b16 %v124, %v124
  %129 = vst [vmem:[%s3] sm:$0xf] %v125
  %130 = vst [vmem:[%s3 + $0x4] sm:$0xf] %v126
  // Predicated region
  $region14: #{encoder_forward.11} parent=0 // pred_check
    _
  $region15: #{encoder_forward.11} parent=0 // pred_check_branch
    %132 = sbr.rel (0) target = $region17
  $region16: #{encoder_forward.11} parent=0 // pred_region
    _
  $region17: #{encoder_forward.11} parent=0 // pred_fallthru
    _
  // Predicated region
  $region18: #{encoder_forward.11} parent=0 // pred_check
    _
  $region19: #{encoder_forward.11} parent=0 // pred_check_branch
    %134 = sbr.rel (0) target = $region21
  $region20: #{encoder_forward.11} parent=0 // pred_region
    _
  $region21: #{encoder_forward.11} parent=0 // pred_fallthru
    _

// kernel: encoder_forward.12
$region0: #{encoder_forward.12}
  #allocation0 [shape = 'u32[]', space=smem, size = 0x4, offset = 0x4, fixed_abs, tag = 'smem constant byte address 0x4 - core index']
  #allocation1 [shape = 'u32[144,128]{1,0:T(1,128)}', space=vmem, size = 0x12000, scoped, tag = 'internal scratch']
  %s0 = inlined_call_operand.vmem [shape: bf16[144,128], index: 0, kind: input, shape index: {}]
  %s1 = inlined_call_operand.vmem [shape: bf16[16,144], index: 1, kind: input, shape index: {}]
  %s2 = inlined_call_operand.vmem [shape: f32[16,1], index: 2, kind: input, shape index: {}]
  %s3 = inlined_call_operand.vmem [shape: bf16[16,64], index: 3, kind: output, shape index: {}]
  %s4 = sld [smem:[#allocation0]]
  $region22: #{encoder_forward.12} parent=0
    _
  %s6 = ssub.s32 1, %s4
  %s7 = scalar_select 0, %s6, %s4
  // Predicated region
  $region2: #{encoder_forward.12} parent=0 // pred_check
    _
  $region3: #{encoder_forward.12} parent=0 // pred_check_branch
    %9 = sbr.rel (0) target = $region5
  $region4: #{encoder_forward.12} parent=0 // pred_region
    _
  $region5: #{encoder_forward.12} parent=0 // pred_fallthru
    _
  // Predicated region
  $region6: #{encoder_forward.12} parent=0 // pred_check
    _
  $region7: #{encoder_forward.12} parent=0 // pred_check_branch
    %11 = sbr.rel (0) target = $region9
  $region8: #{encoder_forward.12} parent=0 // pred_region
    _
  $region9: #{encoder_forward.12} parent=0 // pred_fallthru
    _
  // Predicated region
  $region10: #{encoder_forward.12} parent=0 // pred_check
    _
  $region11: #{encoder_forward.12} parent=0 // pred_check_branch
    %13 = sbr.rel (0) target = $region13
  $region12: #{encoder_forward.12} parent=0 // pred_region
    _
  $region13: #{encoder_forward.12} parent=0 // pred_fallthru
    _
  %v15 = vld [vmem:[%s1] sm:$0xff]
  %v16 = vld [vmem:[%s1 + $0x8] sm:$0xff]
  %v17 = vld [vmem:[%s0] sm:$0xf]
  %v18 = vld [vmem:[%s0 + $0x4] sm:$0xf]
  %v19 = vld [vmem:[%s0 + $0x8] sm:$0xf]
  %v20 = vld [vmem:[%s0 + $0xc] sm:$0xf]
  %v21 = vld [vmem:[%s0 + $0x10] sm:$0xf]
  %v22 = vld [vmem:[%s0 + $0x14] sm:$0xf]
  %v23 = vld [vmem:[%s0 + $0x18] sm:$0xf]
  %v24 = vld [vmem:[%s0 + $0x1c] sm:$0xf]
  %v25 = vld [vmem:[%s0 + $0x20] sm:$0xf]
  %v26 = vld [vmem:[%s0 + $0x24] sm:$0xf]
  %v27 = vld [vmem:[%s0 + $0x28] sm:$0xf]
  %v28 = vld [vmem:[%s0 + $0x2c] sm:$0xf]
  %v29 = vld [vmem:[%s0 + $0x30] sm:$0xf]
  %v30 = vld [vmem:[%s0 + $0x34] sm:$0xf]
  %v31 = vld [vmem:[%s0 + $0x38] sm:$0xf]
  %v32 = vld [vmem:[%s0 + $0x3c] sm:$0xf]
  %v33 = vld [vmem:[%s0 + $0x40] sm:$0xf]
  %v34 = vld [vmem:[%s0 + $0x44] sm:$0xf]
  %v37 = vunpack.c.l.b16 %v15
  %v38 = vunpack.c.h.b16 %v15
  %v39 = vunpack.c.l.b16 %v16
  %v40 = vunpack.c.h.b16 %v16
  %v41 = vpack.c.b16 %v39, %v37
  %v42 = vpack.c.b16 %v40, %v38
  %v62 = vunpack.c.l.b16 %v17
  %v63 = vunpack.c.l.b16 %v18
  %v64 = vunpack.c.l.b16 %v19
  %v65 = vunpack.c.l.b16 %v20
  %v66 = vunpack.c.l.b16 %v21
  %v67 = vunpack.c.l.b16 %v22
  %v68 = vunpack.c.l.b16 %v23
  %v69 = vunpack.c.l.b16 %v24
  %v70 = vunpack.c.l.b16 %v25
  %v71 = vunpack.c.l.b16 %v26
  %v72 = vunpack.c.l.b16 %v27
  %v73 = vunpack.c.l.b16 %v28
  %v74 = vunpack.c.l.b16 %v29
  %v75 = vunpack.c.l.b16 %v30
  %v76 = vunpack.c.l.b16 %v31
  %v77 = vunpack.c.l.b16 %v32
  %v78 = vunpack.c.l.b16 %v33
  %v79 = vunpack.c.l.b16 %v34
  %v80 = vpack.c.b16 %v63, %v62
  %v81 = vpack.c.b16 %v65, %v64
  %v82 = vpack.c.b16 %v67, %v66
  %v83 = vpack.c.b16 %v69, %v68
  %v84 = vpack.c.b16 %v71, %v70
  %v85 = vpack.c.b16 %v73, %v72
  %v86 = vpack.c.b16 %v75, %v74
  %v87 = vpack.c.b16 %v77, %v76
  %v88 = vpack.c.b16 %v79, %v78
  %vm98 = vcmask 130048
  %v100 = vsel %vm98, %v42, 0
  %102 = vmatprep.subr.bf16.mxu0 0
  %103 = vmatpush1.bf16.msra.mxu0 %v80
  %104 = vmatprep.subr.bf16.mxu0 0
  %105 = vmatpush1.bf16.msra.mxu0 %v81
  %106 = vmatprep.subr.bf16.mxu0 0
  %107 = vmatpush1.bf16.msra.mxu0 %v82
  %108 = vmatprep.subr.bf16.mxu0 0
  %109 = vmatpush1.bf16.msra.mxu0 %v83
  %110 = vmatprep.subr.bf16.mxu0 0
  %111 = vmatpush1.bf16.msra.mxu0 %v84
  %112 = vmatprep.subr.bf16.mxu0 0
  %113 = vmatpush1.bf16.msra.mxu0 %v85
  %114 = vmatprep.subr.bf16.mxu0 0
  %115 = vmatpush1.bf16.msra.mxu0 %v86
  %116 = vmatprep.subr.bf16.mxu0 0
  %117 = vmatpush1.bf16.msra.mxu0 %v87
  %118 = vmatprep.subr.bf16.mxu0 0
  %119 = vmatpush1.bf16.msra.mxu0 %v88
  %120 = vmatprep.subr.bf16.mxu0 0
  %121 = vmatpush1.bf16.msra.mxu0 0
  %122 = vmatprep.subr.bf16.mxu0 0
  %123 = vmatpush1.bf16.msra.mxu0 0
  %124 = vmatprep.subr.bf16.mxu0 0
  %125 = vmatpush1.bf16.msra.mxu0 0
  %126 = vmatprep.subr.bf16.mxu0 0
  %127 = vmatpush1.bf16.msra.mxu0 0
  %128 = vmatprep.subr.bf16.mxu0 0
  %129 = vmatpush1.bf16.msra.mxu0 0
  %130 = vmatprep.subr.bf16.mxu0 0
  %131 = vmatpush1.bf16.msra.mxu0 0
  %132 = vmatprep.subr.bf16.mxu0 0
  %133 = vmatpush1.bf16.msra.mxu0 0
  %134 = vmatprep.mubr.bf16.mxu0 %v100
  %135 = vmatmul.mubr.bf16.gmra.mrb[0].mxu0 %v41
  %v136 = vpop.f32.mrb[0].mxu0
  %v137 = vadd.f32 0.0, %v136
  %v138 = vpop.f32.mrb[0].mxu0
  %v139 = vpop.f32.mrb[0].mxu0
  %v140 = vadd.f32 0.0, %v139
  %v141 = vpop.f32.mrb[0].mxu0
  %142 = vdwg.mxu0
  %145 = vrot.lane.b32.xlu0 %v137, 64
  %v146 = vpop.permute.xlu0 %145
  %147 = vrot.lane.b32.xlu0 %v140, 64
  %v148 = vpop.permute.xlu0 %147
  %v151 = vmax.f32 %v137, %v146
  %v152 = vmax.f32 %v140, %v148
  %v153 = vld [vmem:[%s2] sm:$0xff]
  %v154 = vld [vmem:[%s2 + $0x8] sm:$0xff]
  %156 = vset.pattern.permute.xlu0 0
  %157 = vperm.xlu0 %156, %v153
  %v158 = vpop.permute.xlu0 %157
  %161 = vset.pattern.permute.xlu0 0
  %162 = vperm.xlu0 %161, %v154
  %v163 = vpop.permute.xlu0 %162
  %v165 = vadd.f32 %v151, %v158
  %v166 = vadd.f32 %v152, %v163
  %v167 = vmax.f32 %v165, 0.0
  %v168 = vmax.f32 %v166, 0.0
  %v169 = vpack.c.bf16 %v168, %v167
  %v171 = vunpack.c.l.b16 %v169
  %v172 = vunpack.c.h.b16 %v169
  %v173 = vpack.c.b16 %v171, %v171
  %v174 = vpack.c.b16 %v172, %v172
  %vm177 = vcmask 519168
  %178 = vst.msk [vmem:[%s3] sm:$0xf] %vm177, %v173
  %179 = vst.msk [vmem:[%s3 + $0x4] sm:$0xf] %vm177, %v174
  // Predicated region
  $region14: #{encoder_forward.12} parent=0 // pred_check
    _
  $region15: #{encoder_forward.12} parent=0 // pred_check_branch
    %181 = sbr.rel (0) target = $region17
  $region16: #{encoder_forward.12} parent=0 // pred_region
    _
  $region17: #{encoder_forward.12} parent=0 // pred_fallthru
    _
  // Predicated region
  $region18: #{encoder_forward.12} parent=0 // pred_check
    _
  $region19: #{encoder_forward.12} parent=0 // pred_check_branch
    %183 = sbr.rel (0) target = $region21
  $region20: #{encoder_forward.12} parent=0 // pred_region
    _
  $region21: #{encoder_forward.12} parent=0 // pred_fallthru
    _

// kernel: encoder_forward.13
$region0: #{encoder_forward.13}
  #allocation0 [shape = 'u32[]', space=smem, size = 0x4, offset = 0x4, fixed_abs, tag = 'smem constant byte address 0x4 - core index']
  #allocation1 [shape = 'u32[144,128]{1,0:T(1,128)}', space=vmem, size = 0x12000, scoped, tag = 'internal scratch']
  %s0 = inlined_call_operand.vmem [shape: bf16[144,64], index: 0, kind: input, shape index: {}]
  %s1 = inlined_call_operand.vmem [shape: bf16[32,144], index: 1, kind: input, shape index: {}]
  %s2 = inlined_call_operand.vmem [shape: f32[32,1], index: 2, kind: input, shape index: {}]
  %s3 = inlined_call_operand.vmem [shape: bf16[32,64], index: 3, kind: output, shape index: {}]
  %s4 = sld [smem:[#allocation0]]
  $region22: #{encoder_forward.13} parent=0
    _
  %s6 = ssub.s32 1, %s4
  %s7 = scalar_select 0, %s6, %s4
  // Predicated region
  $region2: #{encoder_forward.13} parent=0 // pred_check
    _
  $region3: #{encoder_forward.13} parent=0 // pred_check_branch
    %9 = sbr.rel (0) target = $region5
  $region4: #{encoder_forward.13} parent=0 // pred_region
    _
  $region5: #{encoder_forward.13} parent=0 // pred_fallthru
    _
  // Predicated region
  $region6: #{encoder_forward.13} parent=0 // pred_check
    _
  $region7: #{encoder_forward.13} parent=0 // pred_check_branch
    %11 = sbr.rel (0) target = $region9
  $region8: #{encoder_forward.13} parent=0 // pred_region
    _
  $region9: #{encoder_forward.13} parent=0 // pred_fallthru
    _
  // Predicated region
  $region10: #{encoder_forward.13} parent=0 // pred_check
    _
  $region11: #{encoder_forward.13} parent=0 // pred_check_branch
    %13 = sbr.rel (0) target = $region13
  $region12: #{encoder_forward.13} parent=0 // pred_region
    _
  $region13: #{encoder_forward.13} parent=0 // pred_fallthru
    _
  %v15 = vld [vmem:[%s1] sm:$0xff]
  %v16 = vld [vmem:[%s1 + $0x8] sm:$0xff]
  %v17 = vld [vmem:[%s1 + $0x10] sm:$0xff]
  %v18 = vld [vmem:[%s1 + $0x18] sm:$0xff]
  %v19 = vld [vmem:[%s0] sm:$0xf]
  %v20 = vld [vmem:[%s0 + $0x4] sm:$0xf]
  %v21 = vld [vmem:[%s0 + $0x8] sm:$0xf]
  %v22 = vld [vmem:[%s0 + $0xc] sm:$0xf]
  %v23 = vld [vmem:[%s0 + $0x10] sm:$0xf]
  %v24 = vld [vmem:[%s0 + $0x14] sm:$0xf]
  %v25 = vld [vmem:[%s0 + $0x18] sm:$0xf]
  %v26 = vld [vmem:[%s0 + $0x1c] sm:$0xf]
  %v27 = vld [vmem:[%s0 + $0x20] sm:$0xf]
  %v28 = vld [vmem:[%s0 + $0x24] sm:$0xf]
  %v29 = vld [vmem:[%s0 + $0x28] sm:$0xf]
  %v30 = vld [vmem:[%s0 + $0x2c] sm:$0xf]
  %v31 = vld [vmem:[%s0 + $0x30] sm:$0xf]
  %v32 = vld [vmem:[%s0 + $0x34] sm:$0xf]
  %v33 = vld [vmem:[%s0 + $0x38] sm:$0xf]
  %v34 = vld [vmem:[%s0 + $0x3c] sm:$0xf]
  %v35 = vld [vmem:[%s0 + $0x40] sm:$0xf]
  %v36 = vld [vmem:[%s0 + $0x44] sm:$0xf]
  %v37 = vld [vmem:[%s2] sm:$0xff]
  %v38 = vld [vmem:[%s2 + $0x8] sm:$0xff]
  %v39 = vld [vmem:[%s2 + $0x10] sm:$0xff]
  %v40 = vld [vmem:[%s2 + $0x18] sm:$0xff]
  %42 = vset.pattern.permute.xlu0 0
  %43 = vperm.xlu0 %42, %v37
  %v44 = vpop.permute.xlu0 %43
  %47 = vset.pattern.permute.xlu0 0
  %48 = vperm.xlu0 %47, %v38
  %v49 = vpop.permute.xlu0 %48
  %52 = vset.pattern.permute.xlu0 0
  %53 = vperm.xlu0 %52, %v39
  %v54 = vpop.permute.xlu0 %53
  %57 = vset.pattern.permute.xlu0 0
  %58 = vperm.xlu0 %57, %v40
  %v59 = vpop.permute.xlu0 %58
  %v65 = vunpack.c.l.b16 %v15
  %v66 = vunpack.c.h.b16 %v15
  %v67 = vunpack.c.l.b16 %v16
  %v68 = vunpack.c.h.b16 %v16
  %v69 = vunpack.c.l.b16 %v17
  %v70 = vunpack.c.h.b16 %v17
  %v71 = vunpack.c.l.b16 %v18
  %v72 = vunpack.c.h.b16 %v18
  %v73 = vpack.c.b16 %v67, %v65
  %v74 = vpack.c.b16 %v68, %v66
  %v75 = vpack.c.b16 %v71, %v69
  %v76 = vpack.c.b16 %v72, %v70
  %v97 = vunpack.c.l.b16 %v19
  %v98 = vunpack.c.l.b16 %v20
  %v99 = vunpack.c.l.b16 %v21
  %v100 = vunpack.c.l.b16 %v22
  %v101 = vunpack.c.l.b16 %v23
  %v102 = vunpack.c.l.b16 %v24
  %v103 = vunpack.c.l.b16 %v25
  %v104 = vunpack.c.l.b16 %v26
  %v105 = vunpack.c.l.b16 %v27
  %v106 = vunpack.c.l.b16 %v28
  %v107 = vunpack.c.l.b16 %v29
  %v108 = vunpack.c.l.b16 %v30
  %v109 = vunpack.c.l.b16 %v31
  %v110 = vunpack.c.l.b16 %v32
  %v111 = vunpack.c.l.b16 %v33
  %v112 = vunpack.c.l.b16 %v34
  %v113 = vunpack.c.l.b16 %v35
  %v114 = vunpack.c.l.b16 %v36
  %v115 = vpack.c.b16 %v98, %v97
  %v116 = vpack.c.b16 %v100, %v99
  %v117 = vpack.c.b16 %v102, %v101
  %v118 = vpack.c.b16 %v104, %v103
  %v119 = vpack.c.b16 %v106, %v105
  %v120 = vpack.c.b16 %v108, %v107
  %v121 = vpack.c.b16 %v110, %v109
  %v122 = vpack.c.b16 %v112, %v111
  %v123 = vpack.c.b16 %v114, %v113
  %vm133 = vcmask 130048
  %v135 = vsel %vm133, %v74, 0
  %v138 = vsel %vm133, %v76, 0
  %140 = vmatprep.subr.bf16.mxu0 0
  %141 = vmatpush1.bf16.msra.mxu0 %v115
  %142 = vmatprep.subr.bf16.mxu0 0
  %143 = vmatpush1.bf16.msra.mxu0 %v116
  %144 = vmatprep.subr.bf16.mxu0 0
  %145 = vmatpush1.bf16.msra.mxu0 %v117
  %146 = vmatprep.subr.bf16.mxu0 0
  %147 = vmatpush1.bf16.msra.mxu0 %v118
  %148 = vmatprep.subr.bf16.mxu0 0
  %149 = vmatpush1.bf16.msra.mxu0 %v119
  %150 = vmatprep.subr.bf16.mxu0 0
  %151 = vmatpush1.bf16.msra.mxu0 %v120
  %152 = vmatprep.subr.bf16.mxu0 0
  %153 = vmatpush1.bf16.msra.mxu0 %v121
  %154 = vmatprep.subr.bf16.mxu0 0
  %155 = vmatpush1.bf16.msra.mxu0 %v122
  %156 = vmatprep.subr.bf16.mxu0 0
  %157 = vmatpush1.bf16.msra.mxu0 %v123
  %158 = vmatprep.subr.bf16.mxu0 0
  %159 = vmatpush1.bf16.msra.mxu0 0
  %160 = vmatprep.subr.bf16.mxu0 0
  %161 = vmatpush1.bf16.msra.mxu0 0
  %162 = vmatprep.subr.bf16.mxu0 0
  %163 = vmatpush1.bf16.msra.mxu0 0
  %164 = vmatprep.subr.bf16.mxu0 0
  %165 = vmatpush1.bf16.msra.mxu0 0
  %166 = vmatprep.subr.bf16.mxu0 0
  %167 = vmatpush1.bf16.msra.mxu0 0
  %168 = vmatprep.subr.bf16.mxu0 0
  %169 = vmatpush1.bf16.msra.mxu0 0
  %170 = vmatprep.subr.bf16.mxu0 0
  %171 = vmatpush1.bf16.msra.mxu0 0
  %172 = vmatprep.mubr.bf16.mxu0 %v135
  %173 = vmatmul.mubr.bf16.gmra.mrb[0].mxu0 %v73
  %v174 = vpop.f32.mrb[0].mxu0
  %v175 = vadd.f32 %v44, %v174
  %v176 = vpop.f32.mrb[0].mxu0
  %v177 = vpop.f32.mrb[0].mxu0
  %v178 = vadd.f32 %v49, %v177
  %v179 = vpop.f32.mrb[0].mxu0
  %180 = vmatprep.mubr.bf16.mxu0 %v138
  %181 = vmatmul.mubr.bf16.gmra.mrb[0].mxu0 %v75
  %v182 = vpop.f32.mrb[0].mxu0
  %v183 = vadd.f32 %v54, %v182
  %v184 = vpop.f32.mrb[0].mxu0
  %v185 = vpop.f32.mrb[0].mxu0
  %v186 = vadd.f32 %v59, %v185
  %v187 = vpop.f32.mrb[0].mxu0
  %188 = vdwg.mxu0
  %v189 = vmax.f32 %v175, 0.0
  %v190 = vmax.f32 %v178, 0.0
  %v191 = vmax.f32 %v183, 0.0
  %v192 = vmax.f32 %v186, 0.0
  %v193 = vpack.c.bf16 %v190, %v189
  %v194 = vpack.c.bf16 %v192, %v191
  %v197 = vunpack.c.l.b16 %v193
  %v198 = vunpack.c.h.b16 %v193
  %v199 = vunpack.c.l.b16 %v194
  %v200 = vunpack.c.h.b16 %v194
  %v201 = vpack.c.b16 %v197, %v197
  %v202 = vpack.c.b16 %v198, %v198
  %v203 = vpack.c.b16 %v199, %v199
  %v204 = vpack.c.b16 %v200, %v200
  %vm209 = vcmask 519168
  %210 = vst.msk [vmem:[%s3] sm:$0xf] %vm209, %v201
  %211 = vst.msk [vmem:[%s3 + $0x4] sm:$0xf] %vm209, %v202
  %212 = vst.msk [vmem:[%s3 + $0x8] sm:$0xf] %vm209, %v203
  %213 = vst.msk [vmem:[%s3 + $0xc] sm:$0xf] %vm209, %v204
  // Predicated region
  $region14: #{encoder_forward.13} parent=0 // pred_check
    _
  $region15: #{encoder_forward.13} parent=0 // pred_check_branch
    %215 = sbr.rel (0) target = $region17
  $region16: #{encoder_forward.13} parent=0 // pred_region
    _
  $region17: #{encoder_forward.13} parent=0 // pred_fallthru
    _
  // Predicated region
  $region18: #{encoder_forward.13} parent=0 // pred_check
    _
  $region19: #{encoder_forward.13} parent=0 // pred_check_branch
    %217 = sbr.rel (0) target = $region21
  $region20: #{encoder_forward.13} parent=0 // pred_region
    _
  $region21: #{encoder_forward.13} parent=0 // pred_fallthru
    _

// kernel: encoder_forward.14
$region0: #{encoder_forward.14}
  #allocation0 [shape = 'u32[]', space=smem, size = 0x4, offset = 0x4, fixed_abs, tag = 'smem constant byte address 0x4 - core index']
  #allocation1 [shape = 'u32[144,128]{1,0:T(1,128)}', space=vmem, size = 0x12000, scoped, tag = 'internal scratch']
  %s0 = inlined_call_operand.vmem [shape: bf16[288,64], index: 0, kind: input, shape index: {}]
  %s1 = inlined_call_operand.vmem [shape: bf16[32,288], index: 1, kind: input, shape index: {}]
  %s2 = inlined_call_operand.vmem [shape: f32[32,1], index: 2, kind: input, shape index: {}]
  %s3 = inlined_call_operand.vmem [shape: bf16[32,32], index: 3, kind: output, shape index: {}]
  %s4 = sld [smem:[#allocation0]]
  $region22: #{encoder_forward.14} parent=0
    _
  %s6 = ssub.s32 1, %s4
  %s7 = scalar_select 0, %s6, %s4
  // Predicated region
  $region2: #{encoder_forward.14} parent=0 // pred_check
    _
  $region3: #{encoder_forward.14} parent=0 // pred_check_branch
    %9 = sbr.rel (0) target = $region5
  $region4: #{encoder_forward.14} parent=0 // pred_region
    _
  $region5: #{encoder_forward.14} parent=0 // pred_fallthru
    _
  // Predicated region
  $region6: #{encoder_forward.14} parent=0 // pred_check
    _
  $region7: #{encoder_forward.14} parent=0 // pred_check_branch
    %11 = sbr.rel (0) target = $region9
  $region8: #{encoder_forward.14} parent=0 // pred_region
    _
  $region9: #{encoder_forward.14} parent=0 // pred_fallthru
    _
  // Predicated region
  $region10: #{encoder_forward.14} parent=0 // pred_check
    _
  $region11: #{encoder_forward.14} parent=0 // pred_check_branch
    %13 = sbr.rel (0) target = $region13
  $region12: #{encoder_forward.14} parent=0 // pred_region
    _
  $region13: #{encoder_forward.14} parent=0 // pred_fallthru
    _
  %v15 = vld [vmem:[%s1] sm:$0xff]
  %v16 = vld [vmem:[%s1 + $0x8] sm:$0xf]
  %v17 = vld [vmem:[%s1 + $0xc] sm:$0xff]
  %v18 = vld [vmem:[%s1 + $0x14] sm:$0xf]
  %v19 = vld [vmem:[%s1 + $0x18] sm:$0xff]
  %v20 = vld [vmem:[%s1 + $0x20] sm:$0xf]
  %v21 = vld [vmem:[%s1 + $0x24] sm:$0xff]
  %v22 = vld [vmem:[%s1 + $0x2c] sm:$0xf]
  %v23 = vld [vmem:[%s0] sm:$0xf]
  %v24 = vld [vmem:[%s0 + $0x4] sm:$0xf]
  %v25 = vld [vmem:[%s0 + $0x8] sm:$0xf]
  %v26 = vld [vmem:[%s0 + $0xc] sm:$0xf]
  %v27 = vld [vmem:[%s0 + $0x10] sm:$0xf]
  %v28 = vld [vmem:[%s0 + $0x14] sm:$0xf]
  %v29 = vld [vmem:[%s0 + $0x18] sm:$0xf]
  %v30 = vld [vmem:[%s0 + $0x1c] sm:$0xf]
  %v31 = vld [vmem:[%s0 + $0x20] sm:$0xf]
  %v32 = vld [vmem:[%s0 + $0x24] sm:$0xf]
  %v33 = vld [vmem:[%s0 + $0x28] sm:$0xf]
  %v34 = vld [vmem:[%s0 + $0x2c] sm:$0xf]
  %v35 = vld [vmem:[%s0 + $0x30] sm:$0xf]
  %v36 = vld [vmem:[%s0 + $0x34] sm:$0xf]
  %v37 = vld [vmem:[%s0 + $0x38] sm:$0xf]
  %v38 = vld [vmem:[%s0 + $0x3c] sm:$0xf]
  %v39 = vld [vmem:[%s0 + $0x40] sm:$0xf]
  %v40 = vld [vmem:[%s0 + $0x44] sm:$0xf]
  %v41 = vld [vmem:[%s0 + $0x48] sm:$0xf]
  %v42 = vld [vmem:[%s0 + $0x4c] sm:$0xf]
  %v43 = vld [vmem:[%s0 + $0x50] sm:$0xf]
  %v44 = vld [vmem:[%s0 + $0x54] sm:$0xf]
  %v45 = vld [vmem:[%s0 + $0x58] sm:$0xf]
  %v46 = vld [vmem:[%s0 + $0x5c] sm:$0xf]
  %v47 = vld [vmem:[%s0 + $0x60] sm:$0xf]
  %v48 = vld [vmem:[%s0 + $0x64] sm:$0xf]
  %v49 = vld [vmem:[%s0 + $0x68] sm:$0xf]
  %v50 = vld [vmem:[%s0 + $0x6c] sm:$0xf]
  %v51 = vld [vmem:[%s0 + $0x70] sm:$0xf]
  %v52 = vld [vmem:[%s0 + $0x74] sm:$0xf]
  %v53 = vld [vmem:[%s0 + $0x78] sm:$0xf]
  %v54 = vld [vmem:[%s0 + $0x7c] sm:$0xf]
  %v55 = vld [vmem:[%s0 + $0x80] sm:$0xf]
  %v56 = vld [vmem:[%s0 + $0x84] sm:$0xf]
  %v57 = vld [vmem:[%s0 + $0x88] sm:$0xf]
  %v58 = vld [vmem:[%s0 + $0x8c] sm:$0xf]
  %v67 = vunpack.c.l.b16 %v15
  %v68 = vunpack.c.h.b16 %v15
  %v69 = vunpack.c.l.b16 %v16
  %v70 = vunpack.c.l.b16 %v17
  %v71 = vunpack.c.h.b16 %v17
  %v72 = vunpack.c.l.b16 %v18
  %v73 = vunpack.c.l.b16 %v19
  %v74 = vunpack.c.h.b16 %v19
  %v75 = vunpack.c.l.b16 %v20
  %v76 = vunpack.c.l.b16 %v21
  %v77 = vunpack.c.h.b16 %v21
  %v78 = vunpack.c.l.b16 %v22
  %v79 = vpack.c.b16 %v70, %v67
  %v80 = vpack.c.b16 %v71, %v68
  %v81 = vpack.c.b16 %v72, %v69
  %v82 = vpack.c.b16 %v76, %v73
  %v83 = vpack.c.b16 %v77, %v74
  %v84 = vpack.c.b16 %v78, %v75
  %v125 = vunpack.c.l.b16 %v23
  %v126 = vunpack.c.l.b16 %v24
  %v127 = vunpack.c.l.b16 %v25
  %v128 = vunpack.c.l.b16 %v26
  %v129 = vunpack.c.l.b16 %v27
  %v130 = vunpack.c.l.b16 %v28
  %v131 = vunpack.c.l.b16 %v29
  %v132 = vunpack.c.l.b16 %v30
  %v133 = vunpack.c.l.b16 %v31
  %v134 = vunpack.c.l.b16 %v32
  %v135 = vunpack.c.l.b16 %v33
  %v136 = vunpack.c.l.b16 %v34
  %v137 = vunpack.c.l.b16 %v35
  %v138 = vunpack.c.l.b16 %v36
  %v139 = vunpack.c.l.b16 %v37
  %v140 = vunpack.c.l.b16 %v38
  %v141 = vunpack.c.l.b16 %v39
  %v142 = vunpack.c.l.b16 %v40
  %v143 = vunpack.c.l.b16 %v41
  %v144 = vunpack.c.l.b16 %v42
  %v145 = vunpack.c.l.b16 %v43
  %v146 = vunpack.c.l.b16 %v44
  %v147 = vunpack.c.l.b16 %v45
  %v148 = vunpack.c.l.b16 %v46
  %v149 = vunpack.c.l.b16 %v47
  %v150 = vunpack.c.l.b16 %v48
  %v151 = vunpack.c.l.b16 %v49
  %v152 = vunpack.c.l.b16 %v50
  %v153 = vunpack.c.l.b16 %v51
  %v154 = vunpack.c.l.b16 %v52
  %v155 = vunpack.c.l.b16 %v53
  %v156 = vunpack.c.l.b16 %v54
  %v157 = vunpack.c.l.b16 %v55
  %v158 = vunpack.c.l.b16 %v56
  %v159 = vunpack.c.l.b16 %v57
  %v160 = vunpack.c.l.b16 %v58
  %v161 = vpack.c.b16 %v126, %v125
  %v162 = vpack.c.b16 %v128, %v127
  %v163 = vpack.c.b16 %v130, %v129
  %v164 = vpack.c.b16 %v132, %v131
  %v165 = vpack.c.b16 %v134, %v133
  %v166 = vpack.c.b16 %v136, %v135
  %v167 = vpack.c.b16 %v138, %v137
  %v168 = vpack.c.b16 %v140, %v139
  %v169 = vpack.c.b16 %v142, %v141
  %v170 = vpack.c.b16 %v144, %v143
  %v171 = vpack.c.b16 %v146, %v145
  %v172 = vpack.c.b16 %v148, %v147
  %v173 = vpack.c.b16 %v150, %v149
  %v174 = vpack.c.b16 %v152, %v151
  %v175 = vpack.c.b16 %v154, %v153
  %v176 = vpack.c.b16 %v156, %v155
  %v177 = vpack.c.b16 %v158, %v157
  %v178 = vpack.c.b16 %v160, %v159
  %vm197 = vcmask 261120
  %v199 = vsel %vm197, %v81, 0
  %v202 = vsel %vm197, %v84, 0
  %204 = vmatprep.subr.bf16.mxu0 0
  %205 = vmatpush1.bf16.msra.mxu0 %v161
  %206 = vmatprep.subr.bf16.mxu0 0
  %207 = vmatpush1.bf16.msra.mxu0 %v162
  %208 = vmatprep.subr.bf16.mxu0 0
  %209 = vmatpush1.bf16.msra.mxu0 %v163
  %210 = vmatprep.subr.bf16.mxu0 0
  %211 = vmatpush1.bf16.msra.mxu0 %v164
  %212 = vmatprep.subr.bf16.mxu0 0
  %213 = vmatpush1.bf16.msra.mxu0 %v165
  %214 = vmatprep.subr.bf16.mxu0 0
  %215 = vmatpush1.bf16.msra.mxu0 %v166
  %216 = vmatprep.subr.bf16.mxu0 0
  %217 = vmatpush1.bf16.msra.mxu0 %v167
  %218 = vmatprep.subr.bf16.mxu0 0
  %219 = vmatpush1.bf16.msra.mxu0 %v168
  %220 = vmatprep.subr.bf16.mxu0 0
  %221 = vmatpush1.bf16.msra.mxu0 %v169
  %222 = vmatprep.subr.bf16.mxu0 0
  %223 = vmatpush1.bf16.msra.mxu0 %v170
  %224 = vmatprep.subr.bf16.mxu0 0
  %225 = vmatpush1.bf16.msra.mxu0 %v171
  %226 = vmatprep.subr.bf16.mxu0 0
  %227 = vmatpush1.bf16.msra.mxu0 %v172
  %228 = vmatprep.subr.bf16.mxu0 0
  %229 = vmatpush1.bf16.msra.mxu0 %v173
  %230 = vmatprep.subr.bf16.mxu0 0
  %231 = vmatpush1.bf16.msra.mxu0 %v174
  %232 = vmatprep.subr.bf16.mxu0 0
  %233 = vmatpush1.bf16.msra.mxu0 %v175
  %234 = vmatprep.subr.bf16.mxu0 0
  %235 = vmatpush1.bf16.msra.mxu0 %v176
  %236 = vmatprep.mubr.bf16.mxu0 %v80
  %237 = vmatmul.mubr.bf16.gmra.mrb[0].mxu0 %v79
  %v238 = vpop.f32.mrb[0].mxu0
  %v239 = vadd.f32 0.0, %v238
  %v240 = vpop.f32.mrb[0].mxu0
  %v241 = vpop.f32.mrb[0].mxu0
  %v242 = vadd.f32 0.0, %v241
  %v243 = vpop.f32.mrb[0].mxu0
  %244 = vmatprep.mubr.bf16.mxu0 %v83
  %245 = vmatmul.mubr.bf16.gmra.mrb[0].mxu0 %v82
  %v246 = vpop.f32.mrb[0].mxu0
  %v247 = vadd.f32 0.0, %v246
  %v248 = vpop.f32.mrb[0].mxu0
  %v249 = vpop.f32.mrb[0].mxu0
  %v250 = vadd.f32 0.0, %v249
  %v251 = vpop.f32.mrb[0].mxu0
  %252 = vdwg.mxu0
  %253 = vmatprep.subr.bf16.mxu0 0
  %254 = vmatpush1.bf16.msra.mxu0 %v177
  %255 = vmatprep.subr.bf16.mxu0 0
  %256 = vmatpush1.bf16.msra.mxu0 %v178
  %257 = vmatprep.subr.bf16.mxu0 0
  %258 = vmatpush1.bf16.msra.mxu0 0
  %259 = vmatprep.subr.bf16.mxu0 0
  %260 = vmatpush1.bf16.msra.mxu0 0
  %261 = vmatprep.subr.bf16.mxu0 0
  %262 = vmatpush1.bf16.msra.mxu0 0
  %263 = vmatprep.subr.bf16.mxu0 0
  %264 = vmatpush1.bf16.msra.mxu0 0
  %265 = vmatprep.subr.bf16.mxu0 0
  %266 = vmatpush1.bf16.msra.mxu0 0
  %267 = vmatprep.subr.bf16.mxu0 0
  %268 = vmatpush1.bf16.msra.mxu0 0
  %269 = vmatprep.subr.bf16.mxu0 0
  %270 = vmatpush1.bf16.msra.mxu0 0
  %271 = vmatprep.subr.bf16.mxu0 0
  %272 = vmatpush1.bf16.msra.mxu0 0
  %273 = vmatprep.subr.bf16.mxu0 0
  %274 = vmatpush1.bf16.msra.mxu0 0
  %275 = vmatprep.subr.bf16.mxu0 0
  %276 = vmatpush1.bf16.msra.mxu0 0
  %277 = vmatprep.subr.bf16.mxu0 0
  %278 = vmatpush1.bf16.msra.mxu0 0
  %279 = vmatprep.subr.bf16.mxu0 0
  %280 = vmatpush1.bf16.msra.mxu0 0
  %281 = vmatprep.subr.bf16.mxu0 0
  %282 = vmatpush1.bf16.msra.mxu0 0
  %283 = vmatprep.subr.bf16.mxu0 0
  %284 = vmatpush1.bf16.msra.mxu0 0
  %285 = vmatprep.mubr.bf16.mxu0 0
  %286 = vmatmul.mubr.bf16.gmra.mrb[0].mxu0 %v199
  %v287 = vpop.f32.mrb[0].mxu0
  %v288 = vadd.f32 %v239, %v287
  %v289 = vpop.f32.mrb[0].mxu0
  %v290 = vpop.f32.mrb[0].mxu0
  %v291 = vadd.f32 %v242, %v290
  %v292 = vpop.f32.mrb[0].mxu0
  %293 = vmatprep.mubr.bf16.mxu0 0
  %294 = vmatmul.mubr.bf16.gmra.mrb[0].mxu0 %v202
  %v295 = vpop.f32.mrb[0].mxu0
  %v296 = vadd.f32 %v247, %v295
  %v297 = vpop.f32.mrb[0].mxu0
  %v298 = vpop.f32.mrb[0].mxu0
  %v299 = vadd.f32 %v250, %v298
  %v300 = vpop.f32.mrb[0].mxu0
  %301 = vdwg.mxu0
  %306 = vrot.lane.b32.xlu0 %v288, 96
  %v307 = vpop.permute.xlu0 %306
  %308 = vrot.lane.b32.xlu0 %v291, 96
  %v309 = vpop.permute.xlu0 %308
  %310 = vrot.lane.b32.xlu0 %v296, 96
  %v311 = vpop.permute.xlu0 %310
  %312 = vrot.lane.b32.xlu0 %v299, 96
  %v313 = vpop.permute.xlu0 %312
  %v318 = vmax.f32 %v288, %v307
  %v319 = vmax.f32 %v291, %v309
  %v320 = vmax.f32 %v296, %v311
  %v321 = vmax.f32 %v299, %v313
  %v322 = vld [vmem:[%s2] sm:$0xff]
  %v323 = vld [vmem:[%s2 + $0x8] sm:$0xff]
  %v324 = vld [vmem:[%s2 + $0x10] sm:$0xff]
  %v325 = vld [vmem:[%s2 + $0x18] sm:$0xff]
  %327 = vset.pattern.permute.xlu0 0
  %328 = vperm.xlu0 %327, %v322
  %v329 = vpop.permute.xlu0 %328
  %332 = vset.pattern.permute.xlu0 0
  %333 = vperm.xlu0 %332, %v323
  %v334 = vpop.permute.xlu0 %333
  %337 = vset.pattern.permute.xlu0 0
  %338 = vperm.xlu0 %337, %v324
  %v339 = vpop.permute.xlu0 %338
  %342 = vset.pattern.permute.xlu0 0
  %343 = vperm.xlu0 %342, %v325
  %v344 = vpop.permute.xlu0 %343
  %v346 = vadd.f32 %v318, %v329
  %v347 = vadd.f32 %v319, %v334
  %v348 = vadd.f32 %v320, %v339
  %v349 = vadd.f32 %v321, %v344
  %v350 = vmax.f32 %v346, 0.0
  %v351 = vmax.f32 %v347, 0.0
  %v352 = vmax.f32 %v348, 0.0
  %v353 = vmax.f32 %v349, 0.0
  %v354 = vpack.c.bf16 %v351, %v350
  %v355 = vpack.c.bf16 %v353, %v352
  %v358 = vunpack.c.l.b16 %v354
  %v359 = vunpack.c.h.b16 %v354
  %v360 = vunpack.c.l.b16 %v355
  %v361 = vunpack.c.h.b16 %v355
  %v362 = vpack.c.b16 %v358, %v358
  %v363 = vpack.c.b16 %v359, %v359
  %v364 = vpack.c.b16 %v360, %v360
  %v365 = vpack.c.b16 %v361, %v361
  %vm370 = vcmask 257024
  %371 = vst.msk [vmem:[%s3] sm:$0xf] %vm370, %v362
  %372 = vst.msk [vmem:[%s3 + $0x4] sm:$0xf] %vm370, %v363
  %373 = vst.msk [vmem:[%s3 + $0x8] sm:$0xf] %vm370, %v364
  %374 = vst.msk [vmem:[%s3 + $0xc] sm:$0xf] %vm370, %v365
  // Predicated region
  $region14: #{encoder_forward.14} parent=0 // pred_check
    _
  $region15: #{encoder_forward.14} parent=0 // pred_check_branch
    %376 = sbr.rel (0) target = $region17
  $region16: #{encoder_forward.14} parent=0 // pred_region
    _
  $region17: #{encoder_forward.14} parent=0 // pred_fallthru
    _
  // Predicated region
  $region18: #{encoder_forward.14} parent=0 // pred_check
    _
  $region19: #{encoder_forward.14} parent=0 // pred_check_branch
    %378 = sbr.rel (0) target = $region21
  $region20: #{encoder_forward.14} parent=0 // pred_region
    _
  $region21: #{encoder_forward.14} parent=0 // pred_fallthru
    _

// kernel: encoder_forward.15
$region0: #{encoder_forward.15}
  #allocation0 [shape = 'u32[]', space=smem, size = 0x4, offset = 0x4, fixed_abs, tag = 'smem constant byte address 0x4 - core index']
  #allocation1 [shape = 'u32[144,128]{1,0:T(1,128)}', space=vmem, size = 0x12000, scoped, tag = 'internal scratch']
  %s0 = inlined_call_operand.vmem [shape: bf16[128,14], index: 0, kind: input, shape index: {}]
  %s1 = inlined_call_operand.vmem [shape: bf16[32,128], index: 1, kind: input, shape index: {}]
  %s2 = inlined_call_operand.vmem [shape: f32[32,1], index: 2, kind: input, shape index: {}]
  %s3 = inlined_call_operand.vmem [shape: bf16[32,14], index: 3, kind: output, shape index: {}]
  %s4 = sld [smem:[#allocation0]]
  $region22: #{encoder_forward.15} parent=0
    _
  %s6 = ssub.s32 1, %s4
  %s7 = scalar_select 0, %s6, %s4
  // Predicated region
  $region2: #{encoder_forward.15} parent=0 // pred_check
    _
  $region3: #{encoder_forward.15} parent=0 // pred_check_branch
    %9 = sbr.rel (0) target = $region5
  $region4: #{encoder_forward.15} parent=0 // pred_region
    _
  $region5: #{encoder_forward.15} parent=0 // pred_fallthru
    _
  // Predicated region
  $region6: #{encoder_forward.15} parent=0 // pred_check
    _
  $region7: #{encoder_forward.15} parent=0 // pred_check_branch
    %11 = sbr.rel (0) target = $region9
  $region8: #{encoder_forward.15} parent=0 // pred_region
    _
  $region9: #{encoder_forward.15} parent=0 // pred_fallthru
    _
  // Predicated region
  $region10: #{encoder_forward.15} parent=0 // pred_check
    _
  $region11: #{encoder_forward.15} parent=0 // pred_check_branch
    %13 = sbr.rel (0) target = $region13
  $region12: #{encoder_forward.15} parent=0 // pred_region
    _
  $region13: #{encoder_forward.15} parent=0 // pred_fallthru
    _
  %v15 = vld [vmem:[%s1] sm:$0xf]
  %v16 = vld [vmem:[%s1 + $0x4] sm:$0xf]
  %v17 = vld [vmem:[%s1 + $0x8] sm:$0xf]
  %v18 = vld [vmem:[%s1 + $0xc] sm:$0xf]
  %v19 = vld [vmem:[%s0] sm:$0xf]
  %v20 = vld [vmem:[%s0 + $0x4] sm:$0xf]
  %v21 = vld [vmem:[%s0 + $0x8] sm:$0xf]
  %v22 = vld [vmem:[%s0 + $0xc] sm:$0xf]
  %v23 = vld [vmem:[%s0 + $0x10] sm:$0xf]
  %v24 = vld [vmem:[%s0 + $0x14] sm:$0xf]
  %v25 = vld [vmem:[%s0 + $0x18] sm:$0xf]
  %v26 = vld [vmem:[%s0 + $0x1c] sm:$0xf]
  %v27 = vld [vmem:[%s0 + $0x20] sm:$0xf]
  %v28 = vld [vmem:[%s0 + $0x24] sm:$0xf]
  %v29 = vld [vmem:[%s0 + $0x28] sm:$0xf]
  %v30 = vld [vmem:[%s0 + $0x2c] sm:$0xf]
  %v31 = vld [vmem:[%s0 + $0x30] sm:$0xf]
  %v32 = vld [vmem:[%s0 + $0x34] sm:$0xf]
  %v33 = vld [vmem:[%s0 + $0x38] sm:$0xf]
  %v34 = vld [vmem:[%s0 + $0x3c] sm:$0xf]
  %v35 = vld [vmem:[%s2] sm:$0xff]
  %v36 = vld [vmem:[%s2 + $0x8] sm:$0xff]
  %v37 = vld [vmem:[%s2 + $0x10] sm:$0xff]
  %v38 = vld [vmem:[%s2 + $0x18] sm:$0xff]
  %40 = vset.pattern.permute.xlu0 0
  %41 = vperm.xlu0 %40, %v35
  %v42 = vpop.permute.xlu0 %41
  %45 = vset.pattern.permute.xlu0 0
  %46 = vperm.xlu0 %45, %v36
  %v47 = vpop.permute.xlu0 %46
  %50 = vset.pattern.permute.xlu0 0
  %51 = vperm.xlu0 %50, %v37
  %v52 = vpop.permute.xlu0 %51
  %55 = vset.pattern.permute.xlu0 0
  %56 = vperm.xlu0 %55, %v38
  %v57 = vpop.permute.xlu0 %56
  %v63 = vunpack.c.l.b16 %v15
  %v64 = vunpack.c.l.b16 %v16
  %v65 = vunpack.c.l.b16 %v17
  %v66 = vunpack.c.l.b16 %v18
  %v67 = vpack.c.b16 %v64, %v63
  %v68 = vpack.c.b16 %v66, %v65
  %v87 = vunpack.c.l.b16 %v19
  %v88 = vunpack.c.l.b16 %v20
  %v89 = vunpack.c.l.b16 %v21
  %v90 = vunpack.c.l.b16 %v22
  %v91 = vunpack.c.l.b16 %v23
  %v92 = vunpack.c.l.b16 %v24
  %v93 = vunpack.c.l.b16 %v25
  %v94 = vunpack.c.l.b16 %v26
  %v95 = vunpack.c.l.b16 %v27
  %v96 = vunpack.c.l.b16 %v28
  %v97 = vunpack.c.l.b16 %v29
  %v98 = vunpack.c.l.b16 %v30
  %v99 = vunpack.c.l.b16 %v31
  %v100 = vunpack.c.l.b16 %v32
  %v101 = vunpack.c.l.b16 %v33
  %v102 = vunpack.c.l.b16 %v34
  %v103 = vpack.c.b16 %v88, %v87
  %v104 = vpack.c.b16 %v90, %v89
  %v105 = vpack.c.b16 %v92, %v91
  %v106 = vpack.c.b16 %v94, %v93
  %v107 = vpack.c.b16 %v96, %v95
  %v108 = vpack.c.b16 %v98, %v97
  %v109 = vpack.c.b16 %v100, %v99
  %v110 = vpack.c.b16 %v102, %v101
  %119 = vmatprep.subr.bf16.mxu0 0
  %120 = vmatpush1.bf16.msra.mxu0 %v103
  %121 = vmatprep.subr.bf16.mxu0 0
  %122 = vmatpush1.bf16.msra.mxu0 %v104
  %123 = vmatprep.subr.bf16.mxu0 0
  %124 = vmatpush1.bf16.msra.mxu0 %v105
  %125 = vmatprep.subr.bf16.mxu0 0
  %126 = vmatpush1.bf16.msra.mxu0 %v106
  %127 = vmatprep.subr.bf16.mxu0 0
  %128 = vmatpush1.bf16.msra.mxu0 %v107
  %129 = vmatprep.subr.bf16.mxu0 0
  %130 = vmatpush1.bf16.msra.mxu0 %v108
  %131 = vmatprep.subr.bf16.mxu0 0
  %132 = vmatpush1.bf16.msra.mxu0 %v109
  %133 = vmatprep.subr.bf16.mxu0 0
  %134 = vmatpush1.bf16.msra.mxu0 %v110
  %135 = vmatprep.subr.bf16.mxu0 0
  %136 = vmatpush1.bf16.msra.mxu0 0
  %137 = vmatprep.subr.bf16.mxu0 0
  %138 = vmatpush1.bf16.msra.mxu0 0
  %139 = vmatprep.subr.bf16.mxu0 0
  %140 = vmatpush1.bf16.msra.mxu0 0
  %141 = vmatprep.subr.bf16.mxu0 0
  %142 = vmatpush1.bf16.msra.mxu0 0
  %143 = vmatprep.subr.bf16.mxu0 0
  %144 = vmatpush1.bf16.msra.mxu0 0
  %145 = vmatprep.subr.bf16.mxu0 0
  %146 = vmatpush1.bf16.msra.mxu0 0
  %147 = vmatprep.subr.bf16.mxu0 0
  %148 = vmatpush1.bf16.msra.mxu0 0
  %149 = vmatprep.subr.bf16.mxu0 0
  %150 = vmatpush1.bf16.msra.mxu0 0
  %151 = vmatprep.mubr.bf16.mxu0 0
  %152 = vmatmul.mubr.bf16.gmra.mrb[0].mxu0 %v67
  %v153 = vpop.f32.mrb[0].mxu0
  %v154 = vadd.f32 %v42, %v153
  %v155 = vpop.f32.mrb[0].mxu0
  %v156 = vpop.f32.mrb[0].mxu0
  %v157 = vadd.f32 %v47, %v156
  %v158 = vpop.f32.mrb[0].mxu0
  %159 = vmatprep.mubr.bf16.mxu0 0
  %160 = vmatmul.mubr.bf16.gmra.mrb[0].mxu0 %v68
  %v161 = vpop.f32.mrb[0].mxu0
  %v162 = vadd.f32 %v52, %v161
  %v163 = vpop.f32.mrb[0].mxu0
  %v164 = vpop.f32.mrb[0].mxu0
  %v165 = vadd.f32 %v57, %v164
  %v166 = vpop.f32.mrb[0].mxu0
  %167 = vdwg.mxu0
  %v168 = vmax.f32 %v154, 0.0
  %v169 = vmax.f32 %v157, 0.0
  %v170 = vmax.f32 %v162, 0.0
  %v171 = vmax.f32 %v165, 0.0
  %v172 = vpack.c.bf16 %v169, %v168
  %v173 = vpack.c.bf16 %v171, %v170
  %v176 = vunpack.c.l.b16 %v172
  %v177 = vunpack.c.h.b16 %v172
  %v178 = vunpack.c.l.b16 %v173
  %v179 = vunpack.c.h.b16 %v173
  %v180 = vpack.c.b16 %v176, %v176
  %v181 = vpack.c.b16 %v177, %v177
  %v182 = vpack.c.b16 %v178, %v178
  %v183 = vpack.c.b16 %v179, %v179
  %vm188 = vcmask 109568
  %189 = vst.msk [vmem:[%s3] sm:$0xf] %vm188, %v180
  %190 = vst.msk [vmem:[%s3 + $0x4] sm:$0xf] %vm188, %v181
  %191 = vst.msk [vmem:[%s3 + $0x8] sm:$0xf] %vm188, %v182
  %192 = vst.msk [vmem:[%s3 + $0xc] sm:$0xf] %vm188, %v183
  // Predicated region
  $region14: #{encoder_forward.15} parent=0 // pred_check
    _
  $region15: #{encoder_forward.15} parent=0 // pred_check_branch
    %194 = sbr.rel (0) target = $region17
  $region16: #{encoder_forward.15} parent=0 // pred_region
    _
  $region17: #{encoder_forward.15} parent=0 // pred_fallthru
    _
  // Predicated region
  $region18: #{encoder_forward.15} parent=0 // pred_check
    _
  $region19: #{encoder_forward.15} parent=0 // pred_check_branch
    %196 = sbr.rel (0) target = $region21
  $region20: #{encoder_forward.15} parent=0 // pred_region
    _
  $region21: #{encoder_forward.15} parent=0 // pred_fallthru
    _

// kernel: encoder_forward.16
$region0: #{encoder_forward.16}
  #allocation0 [shape = 'u32[]', space=smem, size = 0x4, offset = 0x4, fixed_abs, tag = 'smem constant byte address 0x4 - core index']
  #allocation1 [shape = 'u32[144,128]{1,0:T(1,128)}', space=vmem, size = 0x12000, scoped, tag = 'internal scratch']
  #allocation2 [shape = 'f32[14,256]{1,0:T(8,128)}', space=vmem, size = 0x4000, scoped, tag = 'scratch operand']
  #allocation3 [shape = 'f32[2,2,32]{2,1,0:T(2,128)}', space=vmem, size = 0x800, scoped, tag = 'scratch operand']
  #allocation4 [shape = 'f32[2,2,32]{2,1,0:T(2,128)}', space=vmem, size = 0x800, scoped, tag = 'scratch operand']
  #allocation5 [shape = 'f32[14,32]{1,0:T(8,128)}', space=vmem, size = 0x2000, scoped, tag = 'scratch operand']
  #allocation6 [shape = 'f32[14,32]{1,0:T(8,128)}', space=vmem, size = 0x2000, scoped, tag = 'scratch operand']
  %s0 = inlined_call_operand.vmem [shape: bf16[14,32], index: 0, kind: input, shape index: {}]
  %s1 = inlined_call_operand.vmem [shape: bf16[32,256], index: 1, kind: input, shape index: {}]
  %s2 = inlined_call_operand.vmem [shape: bf16[2,32,128], index: 2, kind: input, shape index: {}]
  %s3 = inlined_call_operand.vmem [shape: f32[1,256], index: 3, kind: input, shape index: {}]
  %s4 = inlined_call_operand.vmem [shape: bf16[2,32,32], index: 4, kind: input, shape index: {}]
  %s5 = inlined_call_operand.vmem [shape: f32[1,32], index: 5, kind: input, shape index: {}]
  %s6 = inlined_call_operand.vmem [shape: f32[14,32], index: 6, kind: output, shape index: {}]
  %s7 = sld [smem:[#allocation0]]
  $region34: #{encoder_forward.16} parent=0
    _
  %s9 = ssub.s32 1, %s7
  %s10 = scalar_select 0, %s9, %s7
  // Predicated region
  $region2: #{encoder_forward.16} parent=0 // pred_check
    _
  $region3: #{encoder_forward.16} parent=0 // pred_check_branch
    %12 = sbr.rel (0) target = $region5
  $region4: #{encoder_forward.16} parent=0 // pred_region
    _
  $region5: #{encoder_forward.16} parent=0 // pred_fallthru
    _
  // Predicated region
  $region6: #{encoder_forward.16} parent=0 // pred_check
    _
  $region7: #{encoder_forward.16} parent=0 // pred_check_branch
    %14 = sbr.rel (0) target = $region9
  $region8: #{encoder_forward.16} parent=0 // pred_region
    _
  $region9: #{encoder_forward.16} parent=0 // pred_fallthru
    _
  // Predicated region
  $region10: #{encoder_forward.16} parent=0 // pred_check
    _
  $region11: #{encoder_forward.16} parent=0 // pred_check_branch
    %16 = sbr.rel (0) target = $region13
  $region12: #{encoder_forward.16} parent=0 // pred_region
    _
  $region13: #{encoder_forward.16} parent=0 // pred_fallthru
    _
  // Predicated region
  $region14: #{encoder_forward.16} parent=0 // pred_check
    _
  $region15: #{encoder_forward.16} parent=0 // pred_check_branch
    %18 = sbr.rel (0) target = $region17
  $region16: #{encoder_forward.16} parent=0 // pred_region
    _
  $region17: #{encoder_forward.16} parent=0 // pred_fallthru
    _
  // Predicated region
  $region18: #{encoder_forward.16} parent=0 // pred_check
    _
  $region19: #{encoder_forward.16} parent=0 // pred_check_branch
    %20 = sbr.rel (0) target = $region21
  $region20: #{encoder_forward.16} parent=0 // pred_region
    _
  $region21: #{encoder_forward.16} parent=0 // pred_fallthru
    _
  // Predicated region
  $region22: #{encoder_forward.16} parent=0 // pred_check
    _
  $region23: #{encoder_forward.16} parent=0 // pred_check_branch
    %22 = sbr.rel (0) target = $region25
  $region24: #{encoder_forward.16} parent=0 // pred_region
    _
  $region25: #{encoder_forward.16} parent=0 // pred_fallthru
    _
  %v24 = vld [vmem:[%s0] sm:$0xf]
  %v25 = vld [vmem:[%s0 + $0x4] sm:$0x7]
  %v26 = vld [vmem:[%s1] sm:$0xff]
  %v27 = vld [vmem:[%s1 + $0x8] sm:$0xff]
  %v28 = vld [vmem:[%s1 + $0x10] sm:$0xff]
  %v29 = vld [vmem:[%s1 + $0x18] sm:$0xff]
  %v30 = vld [vmem:[%s3] sm:$0x3]
  %v32 = vlaneseq
  %v33 = vshrl.u32 %v32, 7
  %v34 = vsub.s32 0, %v33
  %v35 = vrot.slane %v30, %v34
  %v36 = vlaneseq
  %v37 = vshrl.u32 %v36, 7
  %v38 = vsub.s32 1, %v37
  %v39 = vrot.slane %v30, %v38
  %v44 = vunpack.c.l.b16 %v24
  %v45 = vunpack.c.l.b16 %v25
  %v46 = vpack.c.b16 %v45, %v44
  %v51 = vunpack.c.l.b16 %v26
  %v52 = vunpack.c.h.b16 %v26
  %v53 = vunpack.c.l.b16 %v27
  %v54 = vunpack.c.h.b16 %v27
  %v55 = vunpack.c.l.b16 %v28
  %v56 = vunpack.c.h.b16 %v28
  %v57 = vunpack.c.l.b16 %v29
  %v58 = vunpack.c.h.b16 %v29
  %v59 = vpack.c.b16 %v53, %v51
  %v60 = vpack.c.b16 %v54, %v52
  %v61 = vpack.c.b16 %v57, %v55
  %v62 = vpack.c.b16 %v58, %v56
  %vm67 = vcmask 261120
  %v69 = vsel %vm67, %v46, 0
  %71 = vmatprep.subr.bf16.mxu0 %v60
  %72 = vmatpush1.bf16.msra.mxu0 %v59
  %73 = vmatprep.subr.bf16.mxu0 %v62
  %74 = vmatpush1.bf16.msra.mxu0 %v61
  %75 = vmatprep.subr.bf16.mxu0 0
  %76 = vmatpush1.bf16.msra.mxu0 0
  %77 = vmatprep.subr.bf16.mxu0 0
  %78 = vmatpush1.bf16.msra.mxu0 0
  %79 = vmatprep.subr.bf16.mxu0 0
  %80 = vmatpush1.bf16.msra.mxu0 0
  %81 = vmatprep.subr.bf16.mxu0 0
  %82 = vmatpush1.bf16.msra.mxu0 0
  %83 = vmatprep.subr.bf16.mxu0 0
  %84 = vmatpush1.bf16.msra.mxu0 0
  %85 = vmatprep.subr.bf16.mxu0 0
  %86 = vmatpush1.bf16.msra.mxu0 0
  %87 = vmatprep.subr.bf16.mxu0 0
  %88 = vmatpush1.bf16.msra.mxu0 0
  %89 = vmatprep.subr.bf16.mxu0 0
  %90 = vmatpush1.bf16.msra.mxu0 0
  %91 = vmatprep.subr.bf16.mxu0 0
  %92 = vmatpush1.bf16.msra.mxu0 0
  %93 = vmatprep.subr.bf16.mxu0 0
  %94 = vmatpush1.bf16.msra.mxu0 0
  %95 = vmatprep.subr.bf16.mxu0 0
  %96 = vmatpush1.bf16.msra.mxu0 0
  %97 = vmatprep.subr.bf16.mxu0 0
  %98 = vmatpush1.bf16.msra.mxu0 0
  %99 = vmatprep.subr.bf16.mxu0 0
  %100 = vmatpush1.bf16.msra.mxu0 0
  %101 = vmatprep.subr.bf16.mxu0 0
  %102 = vmatpush1.bf16.msra.mxu0 0
  %103 = vmatprep.mubr.bf16.mxu0 0
  %104 = vmatmul.mubr.bf16.gmra.mrb[0].mxu0 %v69
  %v105 = vpop.f32.mrb[0].mxu0
  %v106 = vadd.f32 %v35, %v105
  %v107 = vpop.f32.mrb[0].mxu0
  %v108 = vadd.f32 %v39, %v107
  %v109 = vpop.f32.mrb[0].mxu0
  %v110 = vadd.f32 %v35, %v109
  %v111 = vpop.f32.mrb[0].mxu0
  %v112 = vadd.f32 %v39, %v111
  %113 = vdwg.mxu0
  %114 = vst [vmem:[#allocation2] sm:$0xff] %v106
  %115 = vst [vmem:[#allocation2 + $0x8] sm:$0xff] %v108
  %116 = vst [vmem:[#allocation2 + $0x10] sm:$0x3f] %v110
  %117 = vst [vmem:[#allocation2 + $0x18] sm:$0x3f] %v112
  %vm118 = vcmask 254976
  %119 = vst.msk [vmem:[#allocation3] sm:$0x3] %vm118, 0.0
  %120 = vst.msk [vmem:[#allocation3 + $0x2] sm:$0x3] %vm118, 0.0
  %121 = vst.msk [vmem:[#allocation4] sm:$0x3] %vm118, 0.0
  %122 = vst.msk [vmem:[#allocation4 + $0x2] sm:$0x3] %vm118, 0.0
  %v123 = vlaneseq
  %v124 = vand.u32 %v123, 127
  %vm125 = vcmp.ge.s32.totalorder %v124, 64
  %vm126 = vcmp.lt.s32.totalorder %v124, 96
  %vm127 = vmand %vm125, %vm126
  %v128 = vsel %vm127, 2.0, 1.0
  %v129 = vsel %vm127, 1.0, 0.0
  %v130 = vld [vmem:[#allocation2] sm:$0x3]
  %v131 = vld [vmem:[#allocation3] sm:$0x3]
  %v132 = vpack.c.bf16 %v131, %v131
  %v133 = vld [vmem:[%s2] sm:$0xf]
  %v134 = vld [vmem:[%s2 + $0x4] sm:$0xf]
  %v135 = vld [vmem:[%s2 + $0x8] sm:$0xf]
  %v136 = vld [vmem:[%s2 + $0xc] sm:$0xf]
  %v141 = vunpack.c.l.b16 %v133
  %v142 = vunpack.c.l.b16 %v134
  %v143 = vunpack.c.l.b16 %v135
  %v144 = vunpack.c.l.b16 %v136
  %v145 = vpack.c.b16 %v142, %v141
  %v146 = vpack.c.b16 %v144, %v143
  %v150 = vsel %vm67, %v132, 0
  %152 = vmatprep.subr.bf16.mxu0 0
  %153 = vmatpush1.bf16.msra.mxu0 %v145
  %154 = vmatprep.subr.bf16.mxu0 0
  %155 = vmatpush1.bf16.msra.mxu0 %v146
  %156 = vmatprep.subr.bf16.mxu0 0
  %157 = vmatpush1.bf16.msra.mxu0 0
  %158 = vmatprep.subr.bf16.mxu0 0
  %159 = vmatpush1.bf16.msra.mxu0 0
  %160 = vmatprep.subr.bf16.mxu0 0
  %161 = vmatpush1.bf16.msra.mxu0 0
  %162 = vmatprep.subr.bf16.mxu0 0
  %163 = vmatpush1.bf16.msra.mxu0 0
  %164 = vmatprep.subr.bf16.mxu0 0
  %165 = vmatpush1.bf16.msra.mxu0 0
  %166 = vmatprep.subr.bf16.mxu0 0
  %167 = vmatpush1.bf16.msra.mxu0 0
  %168 = vmatprep.subr.bf16.mxu0 0
  %169 = vmatpush1.bf16.msra.mxu0 0
  %170 = vmatprep.subr.bf16.mxu0 0
  %171 = vmatpush1.bf16.msra.mxu0 0
  %172 = vmatprep.subr.bf16.mxu0 0
  %173 = vmatpush1.bf16.msra.mxu0 0
  %174 = vmatprep.subr.bf16.mxu0 0
  %175 = vmatpush1.bf16.msra.mxu0 0
  %176 = vmatprep.subr.bf16.mxu0 0
  %177 = vmatpush1.bf16.msra.mxu0 0
  %178 = vmatprep.subr.bf16.mxu0 0
  %179 = vmatpush1.bf16.msra.mxu0 0
  %180 = vmatprep.subr.bf16.mxu0 0
  %181 = vmatpush1.bf16.msra.mxu0 0
  %182 = vmatprep.subr.bf16.mxu0 0
  %183 = vmatpush1.bf16.msra.mxu0 0
  %184 = vmatprep.mubr.bf16.mxu0 0
  %185 = vmatmul.mubr.bf16.gmra.mrb[0].mxu0 %v150
  %v186 = vpop.f32.mrb[0].mxu0
  %v187 = vadd.f32 0.0, %v186
  %v188 = vpop.f32.mrb[0].mxu0
  %v189 = vpop.f32.mrb[0].mxu0
  %v190 = vpop.f32.mrb[0].mxu0
  %191 = vdwg.mxu0
  %v192 = vadd.f32 %v130, %v187
  %v193 = vsub.f32 0.0, %v192
  %v194 = vmul.f32 %v193, %v128
  %v195 = vmul.f32 %v194, 1.442695
  %v196 = vpow.pop %v195
  %v197 = vadd.f32 %v196, 1.0
  %v198 = vrcp.pop %v197
  %v199 = vmul.f32 1.0, %v198
  %v200 = vmul.f32 %v199, %v128
  %v201 = vsub.f32 %v200, %v129
  %v202 = vld [vmem:[#allocation4] sm:$0x3]
  %204 = vrot.lane.b32.xlu0 %v202, 32
  %v205 = vpop.permute.xlu0 %204
  %v207 = vmul.f32 %v201, %v205
  %209 = vrot.lane.b32.xlu0 %v201, 64
  %v210 = vpop.permute.xlu0 %209
  %v212 = vmul.f32 %v201, %v210
  %214 = vrot.lane.b32.xlu0 %v212, 32
  %v215 = vpop.permute.xlu0 %214
  %v217 = vadd.f32 %v207, %v215
  %v218 = vtanh.pop %v217
  %220 = vrot.lane.b32.xlu0 %v218, 64
  %v221 = vpop.permute.xlu0 %220
  %v223 = vmul.f32 %v201, %v221
  %225 = vrot.lane.b32.xlu0 %v217, 96
  %v226 = vpop.permute.xlu0 %225
  %228 = vst.msk [vmem:[#allocation4] sm:$0x3] %vm118, %v226
  %230 = vrot.lane.b32.xlu0 %v223, 32
  %v231 = vpop.permute.xlu0 %230
  %233 = vst.msk [vmem:[#allocation3] sm:$0x3] %vm118, %v231
  %234 = vst.msk [vmem:[#allocation5] sm:$0x3] %vm118, %v231
  %v235 = vld [vmem:[#allocation2 + $0x18] sm:$0x30]
  %s236 = scalar_lea.vmem [#allocation3], 2
  %v237 = vld [vmem:[%s236] sm:$0x3]
  %v238 = vpack.c.bf16 %v237, %v237
  %s239 = scalar_lea.vmem %s2, 16
  %v240 = vld [vmem:[%s239] sm:$0xf]
  %v241 = vld [vmem:[%s239 + $0x4] sm:$0xf]
  %v242 = vld [vmem:[%s239 + $0x8] sm:$0xf]
  %v243 = vld [vmem:[%s239 + $0xc] sm:$0xf]
  %v248 = vunpack.c.l.b16 %v240
  %v249 = vunpack.c.l.b16 %v241
  %v250 = vunpack.c.l.b16 %v242
  %v251 = vunpack.c.l.b16 %v243
  %v252 = vpack.c.b16 %v249, %v248
  %v253 = vpack.c.b16 %v251, %v250
  %v257 = vsel %vm67, %v238, 0
  %259 = vmatprep.subr.bf16.mxu0 0
  %260 = vmatpush1.bf16.msra.mxu0 %v252
  %261 = vmatprep.subr.bf16.mxu0 0
  %262 = vmatpush1.bf16.msra.mxu0 %v253
  %263 = vmatprep.subr.bf16.mxu0 0
  %264 = vmatpush1.bf16.msra.mxu0 0
  %265 = vmatprep.subr.bf16.mxu0 0
  %266 = vmatpush1.bf16.msra.mxu0 0
  %267 = vmatprep.subr.bf16.mxu0 0
  %268 = vmatpush1.bf16.msra.mxu0 0
  %269 = vmatprep.subr.bf16.mxu0 0
  %270 = vmatpush1.bf16.msra.mxu0 0
  %271 = vmatprep.subr.bf16.mxu0 0
  %272 = vmatpush1.bf16.msra.mxu0 0
  %273 = vmatprep.subr.bf16.mxu0 0
  %274 = vmatpush1.bf16.msra.mxu0 0
  %275 = vmatprep.subr.bf16.mxu0 0
  %276 = vmatpush1.bf16.msra.mxu0 0
  %277 = vmatprep.subr.bf16.mxu0 0
  %278 = vmatpush1.bf16.msra.mxu0 0
  %279 = vmatprep.subr.bf16.mxu0 0
  %280 = vmatpush1.bf16.msra.mxu0 0
  %281 = vmatprep.subr.bf16.mxu0 0
  %282 = vmatpush1.bf16.msra.mxu0 0
  %283 = vmatprep.subr.bf16.mxu0 0
  %284 = vmatpush1.bf16.msra.mxu0 0
  %285 = vmatprep.subr.bf16.mxu0 0
  %286 = vmatpush1.bf16.msra.mxu0 0
  %287 = vmatprep.subr.bf16.mxu0 0
  %288 = vmatpush1.bf16.msra.mxu0 0
  %289 = vmatprep.subr.bf16.mxu0 0
  %290 = vmatpush1.bf16.msra.mxu0 0
  %291 = vmatprep.mubr.bf16.mxu0 0
  %292 = vmatmul.mubr.bf16.gmra.mrb[0].mxu0 %v257
  %v293 = vpop.f32.mrb[0].mxu0
  %v294 = vadd.f32 0.0, %v293
  %v295 = vpop.f32.mrb[0].mxu0
  %v296 = vpop.f32.mrb[0].mxu0
  %v297 = vpop.f32.mrb[0].mxu0
  %298 = vdwg.mxu0
  %v300 = vrot.slane %v294, 4
  %v302 = vadd.f32 %v235, %v300
  %v303 = vsub.f32 0.0, %v302
  %v304 = vmul.f32 %v303, %v128
  %v305 = vmul.f32 %v304, 1.442695
  %v306 = vpow.pop %v305
  %v307 = vadd.f32 %v306, 1.0
  %v308 = vrcp.pop %v307
  %v309 = vmul.f32 1.0, %v308
  %v310 = vmul.f32 %v309, %v128
  %v311 = vsub.f32 %v310, %v129
  %s312 = scalar_lea.vmem [#allocation4], 2
  %v313 = vld [vmem:[%s312] sm:$0x3]
  %v315 = vrot.slane %v313, 4
  %316 = vrot.lane.b32.xlu0 %v315, 32
  %v317 = vpop.permute.xlu0 %316
  %v319 = vmul.f32 %v311, %v317
  %321 = vrot.lane.b32.xlu0 %v311, 64
  %v322 = vpop.permute.xlu0 %321
  %v324 = vmul.f32 %v311, %v322
  %326 = vrot.lane.b32.xlu0 %v324, 32
  %v327 = vpop.permute.xlu0 %326
  %v329 = vadd.f32 %v319, %v327
  %v330 = vtanh.pop %v329
  %332 = vrot.lane.b32.xlu0 %v330, 64
  %v333 = vpop.permute.xlu0 %332
  %v335 = vmul.f32 %v311, %v333
  %337 = vrot.lane.b32.xlu0 %v329, 96
  %v338 = vpop.permute.xlu0 %337
  %vm340 = vcmask 259076
  %341 = vst.msk [vmem:[%s312 - $0x4] sm:$0x30] %vm340, %v338
  %343 = vrot.lane.b32.xlu0 %v335, 32
  %v344 = vpop.permute.xlu0 %343
  %346 = vst.msk [vmem:[%s236 - $0x4] sm:$0x30] %vm340, %v344
  %347 = vst.msk [vmem:[#allocation6 + $0x8] sm:$0x30] %vm340, %v344
  %v348 = vld [vmem:[#allocation2] sm:$0xc]
  %v349 = vld [vmem:[#allocation3] sm:$0x3]
  %v350 = vpack.c.bf16 %v349, %v349
  %v351 = vld [vmem:[%s2] sm:$0xf]
  %v352 = vld [vmem:[%s2 + $0x4] sm:$0xf]
  %v353 = vld [vmem:[%s2 + $0x8] sm:$0xf]
  %v354 = vld [vmem:[%s2 + $0xc] sm:$0xf]
  %v359 = vunpack.c.l.b16 %v351
  %v360 = vunpack.c.l.b16 %v352
  %v361 = vunpack.c.l.b16 %v353
  %v362 = vunpack.c.l.b16 %v354
  %v363 = vpack.c.b16 %v360, %v359
  %v364 = vpack.c.b16 %v362, %v361
  %v368 = vsel %vm67, %v350, 0
  %370 = vmatprep.subr.bf16.mxu0 0
  %371 = vmatpush1.bf16.msra.mxu0 %v363
  %372 = vmatprep.subr.bf16.mxu0 0
  %373 = vmatpush1.bf16.msra.mxu0 %v364
  %374 = vmatprep.subr.bf16.mxu0 0
  %375 = vmatpush1.bf16.msra.mxu0 0
  %376 = vmatprep.subr.bf16.mxu0 0
  %377 = vmatpush1.bf16.msra.mxu0 0
  %378 = vmatprep.subr.bf16.mxu0 0
  %379 = vmatpush1.bf16.msra.mxu0 0
  %380 = vmatprep.subr.bf16.mxu0 0
  %381 = vmatpush1.bf16.msra.mxu0 0
  %382 = vmatprep.subr.bf16.mxu0 0
  %383 = vmatpush1.bf16.msra.mxu0 0
  %384 = vmatprep.subr.bf16.mxu0 0
  %385 = vmatpush1.bf16.msra.mxu0 0
  %386 = vmatprep.subr.bf16.mxu0 0
  %387 = vmatpush1.bf16.msra.mxu0 0
  %388 = vmatprep.subr.bf16.mxu0 0
  %389 = vmatpush1.bf16.msra.mxu0 0
  %390 = vmatprep.subr.bf16.mxu0 0
  %391 = vmatpush1.bf16.msra.mxu0 0
  %392 = vmatprep.subr.bf16.mxu0 0
  %393 = vmatpush1.bf16.msra.mxu0 0
  %394 = vmatprep.subr.bf16.mxu0 0
  %395 = vmatpush1.bf16.msra.mxu0 0
  %396 = vmatprep.subr.bf16.mxu0 0
  %397 = vmatpush1.bf16.msra.mxu0 0
  %398 = vmatprep.subr.bf16.mxu0 0
  %399 = vmatpush1.bf16.msra.mxu0 0
  %400 = vmatprep.subr.bf16.mxu0 0
  %401 = vmatpush1.bf16.msra.mxu0 0
  %402 = vmatprep.mubr.bf16.mxu0 0
  %403 = vmatmul.mubr.bf16.gmra.mrb[0].mxu0 %v368
  %v404 = vpop.f32.mrb[0].mxu0
  %v405 = vadd.f32 0.0, %v404
  %v406 = vpop.f32.mrb[0].mxu0
  %v407 = vpop.f32.mrb[0].mxu0
  %v408 = vpop.f32.mrb[0].mxu0
  %409 = vdwg.mxu0
  %v411 = vrot.slane %v405, 6
  %v413 = vadd.f32 %v348, %v411
  %v414 = vsub.f32 0.0, %v413
  %v415 = vmul.f32 %v414, %v128
  %v416 = vmul.f32 %v415, 1.442695
  %v417 = vpow.pop %v416
  %v418 = vadd.f32 %v417, 1.0
  %v419 = vrcp.pop %v418
  %v420 = vmul.f32 1.0, %v419
  %v421 = vmul.f32 %v420, %v128
  %v422 = vsub.f32 %v421, %v129
  %v423 = vld [vmem:[#allocation4] sm:$0x3]
  %v425 = vrot.slane %v423, 6
  %426 = vrot.lane.b32.xlu0 %v425, 32
  %v427 = vpop.permute.xlu0 %426
  %v429 = vmul.f32 %v422, %v427
  %431 = vrot.lane.b32.xlu0 %v422, 64
  %v432 = vpop.permute.xlu0 %431
  %v434 = vmul.f32 %v422, %v432
  %436 = vrot.lane.b32.xlu0 %v434, 32
  %v437 = vpop.permute.xlu0 %436
  %v439 = vadd.f32 %v429, %v437
  %v440 = vtanh.pop %v439
  %442 = vrot.lane.b32.xlu0 %v440, 64
  %v443 = vpop.permute.xlu0 %442
  %v445 = vmul.f32 %v422, %v443
  %447 = vrot.lane.b32.xlu0 %v439, 96
  %v448 = vpop.permute.xlu0 %447
  %vm450 = vcmask 257026
  %451 = vst.msk [vmem:[#allocation4 - $0x2] sm:$0xc] %vm450, %v448
  %453 = vrot.lane.b32.xlu0 %v445, 32
  %v454 = vpop.permute.xlu0 %453
  %456 = vst.msk [vmem:[#allocation3 - $0x2] sm:$0xc] %vm450, %v454
  %457 = vst.msk [vmem:[#allocation5] sm:$0xc] %vm450, %v454
  %v458 = vld [vmem:[#allocation2 + $0x18] sm:$0xc]
  %v459 = vld [vmem:[%s236] sm:$0x3]
  %v460 = vpack.c.bf16 %v459, %v459
  %v461 = vld [vmem:[%s239] sm:$0xf]
  %v462 = vld [vmem:[%s239 + $0x4] sm:$0xf]
  %v463 = vld [vmem:[%s239 + $0x8] sm:$0xf]
  %v464 = vld [vmem:[%s239 + $0xc] sm:$0xf]
  %v469 = vunpack.c.l.b16 %v461
  %v470 = vunpack.c.l.b16 %v462
  %v471 = vunpack.c.l.b16 %v463
  %v472 = vunpack.c.l.b16 %v464
  %v473 = vpack.c.b16 %v470, %v469
  %v474 = vpack.c.b16 %v472, %v471
  %v478 = vsel %vm67, %v460, 0
  %480 = vmatprep.subr.bf16.mxu0 0
  %481 = vmatpush1.bf16.msra.mxu0 %v473
  %482 = vmatprep.subr.bf16.mxu0 0
  %483 = vmatpush1.bf16.msra.mxu0 %v474
  %484 = vmatprep.subr.bf16.mxu0 0
  %485 = vmatpush1.bf16.msra.mxu0 0
  %486 = vmatprep.subr.bf16.mxu0 0
  %487 = vmatpush1.bf16.msra.mxu0 0
  %488 = vmatprep.subr.bf16.mxu0 0
  %489 = vmatpush1.bf16.msra.mxu0 0
  %490 = vmatprep.subr.bf16.mxu0 0
  %491 = vmatpush1.bf16.msra.mxu0 0
  %492 = vmatprep.subr.bf16.mxu0 0
  %493 = vmatpush1.bf16.msra.mxu0 0
  %494 = vmatprep.subr.bf16.mxu0 0
  %495 = vmatpush1.bf16.msra.mxu0 0
  %496 = vmatprep.subr.bf16.mxu0 0
  %497 = vmatpush1.bf16.msra.mxu0 0
  %498 = vmatprep.subr.bf16.mxu0 0
  %499 = vmatpush1.bf16.msra.mxu0 0
  %500 = vmatprep.subr.bf16.mxu0 0
  %501 = vmatpush1.bf16.msra.mxu0 0
  %502 = vmatprep.subr.bf16.mxu0 0
  %503 = vmatpush1.bf16.msra.mxu0 0
  %504 = vmatprep.subr.bf16.mxu0 0
  %505 = vmatpush1.bf16.msra.mxu0 0
  %506 = vmatprep.subr.bf16.mxu0 0
  %507 = vmatpush1.bf16.msra.mxu0 0
  %508 = vmatprep.subr.bf16.mxu0 0
  %509 = vmatpush1.bf16.msra.mxu0 0
  %510 = vmatprep.subr.bf16.mxu0 0
  %511 = vmatpush1.bf16.msra.mxu0 0
  %512 = vmatprep.mubr.bf16.mxu0 0
  %513 = vmatmul.mubr.bf16.gmra.mrb[0].mxu0 %v478
  %v514 = vpop.f32.mrb[0].mxu0
  %v515 = vadd.f32 0.0, %v514
  %v516 = vpop.f32.mrb[0].mxu0
  %v517 = vpop.f32.mrb[0].mxu0
  %v518 = vpop.f32.mrb[0].mxu0
  %519 = vdwg.mxu0
  %v521 = vrot.slane %v515, 6
  %v523 = vadd.f32 %v458, %v521
  %v524 = vsub.f32 0.0, %v523
  %v525 = vmul.f32 %v524, %v128
  %v526 = vmul.f32 %v525, 1.442695
  %v527 = vpow.pop %v526
  %v528 = vadd.f32 %v527, 1.0
  %v529 = vrcp.pop %v528
  %v530 = vmul.f32 1.0, %v529
  %v531 = vmul.f32 %v530, %v128
  %v532 = vsub.f32 %v531, %v129
  %v533 = vld [vmem:[%s312] sm:$0x3]
  %v535 = vrot.slane %v533, 6
  %536 = vrot.lane.b32.xlu0 %v535, 32
  %v537 = vpop.permute.xlu0 %536
  %v539 = vmul.f32 %v532, %v537
  %541 = vrot.lane.b32.xlu0 %v532, 64
  %v542 = vpop.permute.xlu0 %541
  %v544 = vmul.f32 %v532, %v542
  %546 = vrot.lane.b32.xlu0 %v544, 32
  %v547 = vpop.permute.xlu0 %546
  %v549 = vadd.f32 %v539, %v547
  %v550 = vtanh.pop %v549
  %552 = vrot.lane.b32.xlu0 %v550, 64
  %v553 = vpop.permute.xlu0 %552
  %v555 = vmul.f32 %v532, %v553
  %557 = vrot.lane.b32.xlu0 %v549, 96
  %v558 = vpop.permute.xlu0 %557
  %560 = vst.msk [vmem:[%s312 - $0x2] sm:$0xc] %vm450, %v558
  %562 = vrot.lane.b32.xlu0 %v555, 32
  %v563 = vpop.permute.xlu0 %562
  %565 = vst.msk [vmem:[%s236 - $0x2] sm:$0xc] %vm450, %v563
  %566 = vst.msk [vmem:[#allocation6 + $0x8] sm:$0xc] %vm450, %v563
  %v567 = vld [vmem:[#allocation2] sm:$0x30]
  %v568 = vld [vmem:[#allocation3] sm:$0x3]
  %v569 = vpack.c.bf16 %v568, %v568
  %v570 = vld [vmem:[%s2] sm:$0xf]
  %v571 = vld [vmem:[%s2 + $0x4] sm:$0xf]
  %v572 = vld [vmem:[%s2 + $0x8] sm:$0xf]
  %v573 = vld [vmem:[%s2 + $0xc] sm:$0xf]
  %v578 = vunpack.c.l.b16 %v570
  %v579 = vunpack.c.l.b16 %v571
  %v580 = vunpack.c.l.b16 %v572
  %v581 = vunpack.c.l.b16 %v573
  %v582 = vpack.c.b16 %v579, %v578
  %v583 = vpack.c.b16 %v581, %v580
  %v587 = vsel %vm67, %v569, 0
  %589 = vmatprep.subr.bf16.mxu0 0
  %590 = vmatpush1.bf16.msra.mxu0 %v582
  %591 = vmatprep.subr.bf16.mxu0 0
  %592 = vmatpush1.bf16.msra.mxu0 %v583
  %593 = vmatprep.subr.bf16.mxu0 0
  %594 = vmatpush1.bf16.msra.mxu0 0
  %595 = vmatprep.subr.bf16.mxu0 0
  %596 = vmatpush1.bf16.msra.mxu0 0
  %597 = vmatprep.subr.bf16.mxu0 0
  %598 = vmatpush1.bf16.msra.mxu0 0
  %599 = vmatprep.subr.bf16.mxu0 0
  %600 = vmatpush1.bf16.msra.mxu0 0
  %601 = vmatprep.subr.bf16.mxu0 0
  %602 = vmatpush1.bf16.msra.mxu0 0
  %603 = vmatprep.subr.bf16.mxu0 0
  %604 = vmatpush1.bf16.msra.mxu0 0
  %605 = vmatprep.subr.bf16.mxu0 0
  %606 = vmatpush1.bf16.msra.mxu0 0
  %607 = vmatprep.subr.bf16.mxu0 0
  %608 = vmatpush1.bf16.msra.mxu0 0
  %609 = vmatprep.subr.bf16.mxu0 0
  %610 = vmatpush1.bf16.msra.mxu0 0
  %611 = vmatprep.subr.bf16.mxu0 0
  %612 = vmatpush1.bf16.msra.mxu0 0
  %613 = vmatprep.subr.bf16.mxu0 0
  %614 = vmatpush1.bf16.msra.mxu0 0
  %615 = vmatprep.subr.bf16.mxu0 0
  %616 = vmatpush1.bf16.msra.mxu0 0
  %617 = vmatprep.subr.bf16.mxu0 0
  %618 = vmatpush1.bf16.msra.mxu0 0
  %619 = vmatprep.subr.bf16.mxu0 0
  %620 = vmatpush1.bf16.msra.mxu0 0
  %621 = vmatprep.mubr.bf16.mxu0 0
  %622 = vmatmul.mubr.bf16.gmra.mrb[0].mxu0 %v587
  %v623 = vpop.f32.mrb[0].mxu0
  %v624 = vadd.f32 0.0, %v623
  %v625 = vpop.f32.mrb[0].mxu0
  %v626 = vpop.f32.mrb[0].mxu0
  %v627 = vpop.f32.mrb[0].mxu0
  %628 = vdwg.mxu0
  %v630 = vrot.slane %v624, 4
  %v632 = vadd.f32 %v567, %v630
  %v633 = vsub.f32 0.0, %v632
  %v634 = vmul.f32 %v633, %v128
  %v635 = vmul.f32 %v634, 1.442695
  %v636 = vpow.pop %v635
  %v637 = vadd.f32 %v636, 1.0
  %v638 = vrcp.pop %v637
  %v639 = vmul.f32 1.0, %v638
  %v640 = vmul.f32 %v639, %v128
  %v641 = vsub.f32 %v640, %v129
  %v642 = vld [vmem:[#allocation4] sm:$0x3]
  %v644 = vrot.slane %v642, 4
  %645 = vrot.lane.b32.xlu0 %v644, 32
  %v646 = vpop.permute.xlu0 %645
  %v648 = vmul.f32 %v641, %v646
  %650 = vrot.lane.b32.xlu0 %v641, 64
  %v651 = vpop.permute.xlu0 %650
  %v653 = vmul.f32 %v641, %v651
  %655 = vrot.lane.b32.xlu0 %v653, 32
  %v656 = vpop.permute.xlu0 %655
  %v658 = vadd.f32 %v648, %v656
  %v659 = vtanh.pop %v658
  %661 = vrot.lane.b32.xlu0 %v659, 64
  %v662 = vpop.permute.xlu0 %661
  %v664 = vmul.f32 %v641, %v662
  %666 = vrot.lane.b32.xlu0 %v658, 96
  %v667 = vpop.permute.xlu0 %666
  %669 = vst.msk [vmem:[#allocation4 - $0x4] sm:$0x30] %vm340, %v667
  %671 = vrot.lane.b32.xlu0 %v664, 32
  %v672 = vpop.permute.xlu0 %671
  %674 = vst.msk [vmem:[#allocation3 - $0x4] sm:$0x30] %vm340, %v672
  %675 = vst.msk [vmem:[#allocation5] sm:$0x30] %vm340, %v672
  %v676 = vld [vmem:[#allocation2 + $0x18] sm:$0x3]
  %v677 = vld [vmem:[%s236] sm:$0x3]
  %v678 = vpack.c.bf16 %v677, %v677
  %v679 = vld [vmem:[%s239] sm:$0xf]
  %v680 = vld [vmem:[%s239 + $0x4] sm:$0xf]
  %v681 = vld [vmem:[%s239 + $0x8] sm:$0xf]
  %v682 = vld [vmem:[%s239 + $0xc] sm:$0xf]
  %v687 = vunpack.c.l.b16 %v679
  %v688 = vunpack.c.l.b16 %v680
  %v689 = vunpack.c.l.b16 %v681
  %v690 = vunpack.c.l.b16 %v682
  %v691 = vpack.c.b16 %v688, %v687
  %v692 = vpack.c.b16 %v690, %v689
  %v696 = vsel %vm67, %v678, 0
  %698 = vmatprep.subr.bf16.mxu0 0
  %699 = vmatpush1.bf16.msra.mxu0 %v691
  %700 = vmatprep.subr.bf16.mxu0 0
  %701 = vmatpush1.bf16.msra.mxu0 %v692
  %702 = vmatprep.subr.bf16.mxu0 0
  %703 = vmatpush1.bf16.msra.mxu0 0
  %704 = vmatprep.subr.bf16.mxu0 0
  %705 = vmatpush1.bf16.msra.mxu0 0
  %706 = vmatprep.subr.bf16.mxu0 0
  %707 = vmatpush1.bf16.msra.mxu0 0
  %708 = vmatprep.subr.bf16.mxu0 0
  %709 = vmatpush1.bf16.msra.mxu0 0
  %710 = vmatprep.subr.bf16.mxu0 0
  %711 = vmatpush1.bf16.msra.mxu0 0
  %712 = vmatprep.subr.bf16.mxu0 0
  %713 = vmatpush1.bf16.msra.mxu0 0
  %714 = vmatprep.subr.bf16.mxu0 0
  %715 = vmatpush1.bf16.msra.mxu0 0
  %716 = vmatprep.subr.bf16.mxu0 0
  %717 = vmatpush1.bf16.msra.mxu0 0
  %718 = vmatprep.subr.bf16.mxu0 0
  %719 = vmatpush1.bf16.msra.mxu0 0
  %720 = vmatprep.subr.bf16.mxu0 0
  %721 = vmatpush1.bf16.msra.mxu0 0
  %722 = vmatprep.subr.bf16.mxu0 0
  %723 = vmatpush1.bf16.msra.mxu0 0
  %724 = vmatprep.subr.bf16.mxu0 0
  %725 = vmatpush1.bf16.msra.mxu0 0
  %726 = vmatprep.subr.bf16.mxu0 0
  %727 = vmatpush1.bf16.msra.mxu0 0
  %728 = vmatprep.subr.bf16.mxu0 0
  %729 = vmatpush1.bf16.msra.mxu0 0
  %730 = vmatprep.mubr.bf16.mxu0 0
  %731 = vmatmul.mubr.bf16.gmra.mrb[0].mxu0 %v696
  %v732 = vpop.f32.mrb[0].mxu0
  %v733 = vadd.f32 0.0, %v732
  %v734 = vpop.f32.mrb[0].mxu0
  %v735 = vpop.f32.mrb[0].mxu0
  %v736 = vpop.f32.mrb[0].mxu0
  %737 = vdwg.mxu0
  %v738 = vadd.f32 %v676, %v733
  %v739 = vsub.f32 0.0, %v738
  %v740 = vmul.f32 %v739, %v128
  %v741 = vmul.f32 %v740, 1.442695
  %v742 = vpow.pop %v741
  %v743 = vadd.f32 %v742, 1.0
  %v744 = vrcp.pop %v743
  %v745 = vmul.f32 1.0, %v744
  %v746 = vmul.f32 %v745, %v128
  %v747 = vsub.f32 %v746, %v129
  %v748 = vld [vmem:[%s312] sm:$0x3]
  %750 = vrot.lane.b32.xlu0 %v748, 32
  %v751 = vpop.permute.xlu0 %750
  %v753 = vmul.f32 %v747, %v751
  %755 = vrot.lane.b32.xlu0 %v747, 64
  %v756 = vpop.permute.xlu0 %755
  %v758 = vmul.f32 %v747, %v756
  %760 = vrot.lane.b32.xlu0 %v758, 32
  %v761 = vpop.permute.xlu0 %760
  %v763 = vadd.f32 %v753, %v761
  %v764 = vtanh.pop %v763
  %766 = vrot.lane.b32.xlu0 %v764, 64
  %v767 = vpop.permute.xlu0 %766
  %v769 = vmul.f32 %v747, %v767
  %771 = vrot.lane.b32.xlu0 %v763, 96
  %v772 = vpop.permute.xlu0 %771
  %774 = vst.msk [vmem:[%s312] sm:$0x3] %vm118, %v772
  %776 = vrot.lane.b32.xlu0 %v769, 32
  %v777 = vpop.permute.xlu0 %776
  %779 = vst.msk [vmem:[%s236] sm:$0x3] %vm118, %v777
  %780 = vst.msk [vmem:[#allocation6 + $0x8] sm:$0x3] %vm118, %v777
  %v781 = vld [vmem:[#allocation2] sm:$0xc0]
  %v782 = vld [vmem:[#allocation3] sm:$0x3]
  %v783 = vpack.c.bf16 %v782, %v782
  %v784 = vld [vmem:[%s2] sm:$0xf]
  %v785 = vld [vmem:[%s2 + $0x4] sm:$0xf]
  %v786 = vld [vmem:[%s2 + $0x8] sm:$0xf]
  %v787 = vld [vmem:[%s2 + $0xc] sm:$0xf]
  %v792 = vunpack.c.l.b16 %v784
  %v793 = vunpack.c.l.b16 %v785
  %v794 = vunpack.c.l.b16 %v786
  %v795 = vunpack.c.l.b16 %v787
  %v796 = vpack.c.b16 %v793, %v792
  %v797 = vpack.c.b16 %v795, %v794
  %v801 = vsel %vm67, %v783, 0
  %803 = vmatprep.subr.bf16.mxu0 0
  %804 = vmatpush1.bf16.msra.mxu0 %v796
  %805 = vmatprep.subr.bf16.mxu0 0
  %806 = vmatpush1.bf16.msra.mxu0 %v797
  %807 = vmatprep.subr.bf16.mxu0 0
  %808 = vmatpush1.bf16.msra.mxu0 0
  %809 = vmatprep.subr.bf16.mxu0 0
  %810 = vmatpush1.bf16.msra.mxu0 0
  %811 = vmatprep.subr.bf16.mxu0 0
  %812 = vmatpush1.bf16.msra.mxu0 0
  %813 = vmatprep.subr.bf16.mxu0 0
  %814 = vmatpush1.bf16.msra.mxu0 0
  %815 = vmatprep.subr.bf16.mxu0 0
  %816 = vmatpush1.bf16.msra.mxu0 0
  %817 = vmatprep.subr.bf16.mxu0 0
  %818 = vmatpush1.bf16.msra.mxu0 0
  %819 = vmatprep.subr.bf16.mxu0 0
  %820 = vmatpush1.bf16.msra.mxu0 0
  %821 = vmatprep.subr.bf16.mxu0 0
  %822 = vmatpush1.bf16.msra.mxu0 0
  %823 = vmatprep.subr.bf16.mxu0 0
  %824 = vmatpush1.bf16.msra.mxu0 0
  %825 = vmatprep.subr.bf16.mxu0 0
  %826 = vmatpush1.bf16.msra.mxu0 0
  %827 = vmatprep.subr.bf16.mxu0 0
  %828 = vmatpush1.bf16.msra.mxu0 0
  %829 = vmatprep.subr.bf16.mxu0 0
  %830 = vmatpush1.bf16.msra.mxu0 0
  %831 = vmatprep.subr.bf16.mxu0 0
  %832 = vmatpush1.bf16.msra.mxu0 0
  %833 = vmatprep.subr.bf16.mxu0 0
  %834 = vmatpush1.bf16.msra.mxu0 0
  %835 = vmatprep.mubr.bf16.mxu0 0
  %836 = vmatmul.mubr.bf16.gmra.mrb[0].mxu0 %v801
  %v837 = vpop.f32.mrb[0].mxu0
  %v838 = vadd.f32 0.0, %v837
  %v839 = vpop.f32.mrb[0].mxu0
  %v840 = vpop.f32.mrb[0].mxu0
  %v841 = vpop.f32.mrb[0].mxu0
  %842 = vdwg.mxu0
  %v844 = vrot.slane %v838, 2
  %v846 = vadd.f32 %v781, %v844
  %v847 = vsub.f32 0.0, %v846
  %v848 = vmul.f32 %v847, %v128
  %v849 = vmul.f32 %v848, 1.442695
  %v850 = vpow.pop %v849
  %v851 = vadd.f32 %v850, 1.0
  %v852 = vrcp.pop %v851
  %v853 = vmul.f32 1.0, %v852
  %v854 = vmul.f32 %v853, %v128
  %v855 = vsub.f32 %v854, %v129
  %v856 = vld [vmem:[#allocation4] sm:$0x3]
  %v858 = vrot.slane %v856, 2
  %859 = vrot.lane.b32.xlu0 %v858, 32
  %v860 = vpop.permute.xlu0 %859
  %v862 = vmul.f32 %v855, %v860
  %864 = vrot.lane.b32.xlu0 %v855, 64
  %v865 = vpop.permute.xlu0 %864
  %v867 = vmul.f32 %v855, %v865
  %869 = vrot.lane.b32.xlu0 %v867, 32
  %v870 = vpop.permute.xlu0 %869
  %v872 = vadd.f32 %v862, %v870
  %v873 = vtanh.pop %v872
  %875 = vrot.lane.b32.xlu0 %v873, 64
  %v876 = vpop.permute.xlu0 %875
  %v878 = vmul.f32 %v855, %v876
  %880 = vrot.lane.b32.xlu0 %v872, 96
  %v881 = vpop.permute.xlu0 %880
  %vm883 = vcmask 261126
  %884 = vst.msk [vmem:[#allocation4 - $0x6] sm:$0xc0] %vm883, %v881
  %886 = vrot.lane.b32.xlu0 %v878, 32
  %v887 = vpop.permute.xlu0 %886
  %889 = vst.msk [vmem:[#allocation3 - $0x6] sm:$0xc0] %vm883, %v887
  %890 = vst.msk [vmem:[#allocation5] sm:$0xc0] %vm883, %v887
  %v891 = vld [vmem:[#allocation2 + $0x8] sm:$0xc0]
  %v892 = vld [vmem:[%s236] sm:$0x3]
  %v893 = vpack.c.bf16 %v892, %v892
  %v894 = vld [vmem:[%s239] sm:$0xf]
  %v895 = vld [vmem:[%s239 + $0x4] sm:$0xf]
  %v896 = vld [vmem:[%s239 + $0x8] sm:$0xf]
  %v897 = vld [vmem:[%s239 + $0xc] sm:$0xf]
  %v902 = vunpack.c.l.b16 %v894
  %v903 = vunpack.c.l.b16 %v895
  %v904 = vunpack.c.l.b16 %v896
  %v905 = vunpack.c.l.b16 %v897
  %v906 = vpack.c.b16 %v903, %v902
  %v907 = vpack.c.b16 %v905, %v904
  %v911 = vsel %vm67, %v893, 0
  %913 = vmatprep.subr.bf16.mxu0 0
  %914 = vmatpush1.bf16.msra.mxu0 %v906
  %915 = vmatprep.subr.bf16.mxu0 0
  %916 = vmatpush1.bf16.msra.mxu0 %v907
  %917 = vmatprep.subr.bf16.mxu0 0
  %918 = vmatpush1.bf16.msra.mxu0 0
  %919 = vmatprep.subr.bf16.mxu0 0
  %920 = vmatpush1.bf16.msra.mxu0 0
  %921 = vmatprep.subr.bf16.mxu0 0
  %922 = vmatpush1.bf16.msra.mxu0 0
  %923 = vmatprep.subr.bf16.mxu0 0
  %924 = vmatpush1.bf16.msra.mxu0 0
  %925 = vmatprep.subr.bf16.mxu0 0
  %926 = vmatpush1.bf16.msra.mxu0 0
  %927 = vmatprep.subr.bf16.mxu0 0
  %928 = vmatpush1.bf16.msra.mxu0 0
  %929 = vmatprep.subr.bf16.mxu0 0
  %930 = vmatpush1.bf16.msra.mxu0 0
  %931 = vmatprep.subr.bf16.mxu0 0
  %932 = vmatpush1.bf16.msra.mxu0 0
  %933 = vmatprep.subr.bf16.mxu0 0
  %934 = vmatpush1.bf16.msra.mxu0 0
  %935 = vmatprep.subr.bf16.mxu0 0
  %936 = vmatpush1.bf16.msra.mxu0 0
  %937 = vmatprep.subr.bf16.mxu0 0
  %938 = vmatpush1.bf16.msra.mxu0 0
  %939 = vmatprep.subr.bf16.mxu0 0
  %940 = vmatpush1.bf16.msra.mxu0 0
  %941 = vmatprep.subr.bf16.mxu0 0
  %942 = vmatpush1.bf16.msra.mxu0 0
  %943 = vmatprep.subr.bf16.mxu0 0
  %944 = vmatpush1.bf16.msra.mxu0 0
  %945 = vmatprep.mubr.bf16.mxu0 0
  %946 = vmatmul.mubr.bf16.gmra.mrb[0].mxu0 %v911
  %v947 = vpop.f32.mrb[0].mxu0
  %v948 = vadd.f32 0.0, %v947
  %v949 = vpop.f32.mrb[0].mxu0
  %v950 = vpop.f32.mrb[0].mxu0
  %v951 = vpop.f32.mrb[0].mxu0
  %952 = vdwg.mxu0
  %v954 = vrot.slane %v948, 2
  %v956 = vadd.f32 %v891, %v954
  %v957 = vsub.f32 0.0, %v956
  %v958 = vmul.f32 %v957, %v128
  %v959 = vmul.f32 %v958, 1.442695
  %v960 = vpow.pop %v959
  %v961 = vadd.f32 %v960, 1.0
  %v962 = vrcp.pop %v961
  %v963 = vmul.f32 1.0, %v962
  %v964 = vmul.f32 %v963, %v128
  %v965 = vsub.f32 %v964, %v129
  %v966 = vld [vmem:[%s312] sm:$0x3]
  %v968 = vrot.slane %v966, 2
  %969 = vrot.lane.b32.xlu0 %v968, 32
  %v970 = vpop.permute.xlu0 %969
  %v972 = vmul.f32 %v965, %v970
  %974 = vrot.lane.b32.xlu0 %v965, 64
  %v975 = vpop.permute.xlu0 %974
  %v977 = vmul.f32 %v965, %v975
  %979 = vrot.lane.b32.xlu0 %v977, 32
  %v980 = vpop.permute.xlu0 %979
  %v982 = vadd.f32 %v972, %v980
  %v983 = vtanh.pop %v982
  %985 = vrot.lane.b32.xlu0 %v983, 64
  %v986 = vpop.permute.xlu0 %985
  %v988 = vmul.f32 %v965, %v986
  %990 = vrot.lane.b32.xlu0 %v982, 96
  %v991 = vpop.permute.xlu0 %990
  %993 = vst.msk [vmem:[%s312 - $0x6] sm:$0xc0] %vm883, %v991
  %995 = vrot.lane.b32.xlu0 %v988, 32
  %v996 = vpop.permute.xlu0 %995
  %998 = vst.msk [vmem:[%s236 - $0x6] sm:$0xc0] %vm883, %v996
  %999 = vst.msk [vmem:[#allocation6] sm:$0xc0] %vm883, %v996
  %v1000 = vld [vmem:[#allocation2 + $0x10] sm:$0x3]
  %v1001 = vld [vmem:[#allocation3] sm:$0x3]
  %v1002 = vpack.c.bf16 %v1001, %v1001
  %v1003 = vld [vmem:[%s2] sm:$0xf]
  %v1004 = vld [vmem:[%s2 + $0x4] sm:$0xf]
  %v1005 = vld [vmem:[%s2 + $0x8] sm:$0xf]
  %v1006 = vld [vmem:[%s2 + $0xc] sm:$0xf]
  %v1011 = vunpack.c.l.b16 %v1003
  %v1012 = vunpack.c.l.b16 %v1004
  %v1013 = vunpack.c.l.b16 %v1005
  %v1014 = vunpack.c.l.b16 %v1006
  %v1015 = vpack.c.b16 %v1012, %v1011
  %v1016 = vpack.c.b16 %v1014, %v1013
  %v1020 = vsel %vm67, %v1002, 0
  %1022 = vmatprep.subr.bf16.mxu0 0
  %1023 = vmatpush1.bf16.msra.mxu0 %v1015
  %1024 = vmatprep.subr.bf16.mxu0 0
  %1025 = vmatpush1.bf16.msra.mxu0 %v1016
  %1026 = vmatprep.subr.bf16.mxu0 0
  %1027 = vmatpush1.bf16.msra.mxu0 0
  %1028 = vmatprep.subr.bf16.mxu0 0
  %1029 = vmatpush1.bf16.msra.mxu0 0
  %1030 = vmatprep.subr.bf16.mxu0 0
  %1031 = vmatpush1.bf16.msra.mxu0 0
  %1032 = vmatprep.subr.bf16.mxu0 0
  %1033 = vmatpush1.bf16.msra.mxu0 0
  %1034 = vmatprep.subr.bf16.mxu0 0
  %1035 = vmatpush1.bf16.msra.mxu0 0
  %1036 = vmatprep.subr.bf16.mxu0 0
  %1037 = vmatpush1.bf16.msra.mxu0 0
  %1038 = vmatprep.subr.bf16.mxu0 0
  %1039 = vmatpush1.bf16.msra.mxu0 0
  %1040 = vmatprep.subr.bf16.mxu0 0
  %1041 = vmatpush1.bf16.msra.mxu0 0
  %1042 = vmatprep.subr.bf16.mxu0 0
  %1043 = vmatpush1.bf16.msra.mxu0 0
  %1044 = vmatprep.subr.bf16.mxu0 0
  %1045 = vmatpush1.bf16.msra.mxu0 0
  %1046 = vmatprep.subr.bf16.mxu0 0
  %1047 = vmatpush1.bf16.msra.mxu0 0
  %1048 = vmatprep.subr.bf16.mxu0 0
  %1049 = vmatpush1.bf16.msra.mxu0 0
  %1050 = vmatprep.subr.bf16.mxu0 0
  %1051 = vmatpush1.bf16.msra.mxu0 0
  %1052 = vmatprep.subr.bf16.mxu0 0
  %1053 = vmatpush1.bf16.msra.mxu0 0
  %1054 = vmatprep.mubr.bf16.mxu0 0
  %1055 = vmatmul.mubr.bf16.gmra.mrb[0].mxu0 %v1020
  %v1056 = vpop.f32.mrb[0].mxu0
  %v1057 = vadd.f32 0.0, %v1056
  %v1058 = vpop.f32.mrb[0].mxu0
  %v1059 = vpop.f32.mrb[0].mxu0
  %v1060 = vpop.f32.mrb[0].mxu0
  %1061 = vdwg.mxu0
  %v1062 = vadd.f32 %v1000, %v1057
  %v1063 = vsub.f32 0.0, %v1062
  %v1064 = vmul.f32 %v1063, %v128
  %v1065 = vmul.f32 %v1064, 1.442695
  %v1066 = vpow.pop %v1065
  %v1067 = vadd.f32 %v1066, 1.0
  %v1068 = vrcp.pop %v1067
  %v1069 = vmul.f32 1.0, %v1068
  %v1070 = vmul.f32 %v1069, %v128
  %v1071 = vsub.f32 %v1070, %v129
  %v1072 = vld [vmem:[#allocation4] sm:$0x3]
  %1074 = vrot.lane.b32.xlu0 %v1072, 32
  %v1075 = vpop.permute.xlu0 %1074
  %v1077 = vmul.f32 %v1071, %v1075
  %1079 = vrot.lane.b32.xlu0 %v1071, 64
  %v1080 = vpop.permute.xlu0 %1079
  %v1082 = vmul.f32 %v1071, %v1080
  %1084 = vrot.lane.b32.xlu0 %v1082, 32
  %v1085 = vpop.permute.xlu0 %1084
  %v1087 = vadd.f32 %v1077, %v1085
  %v1088 = vtanh.pop %v1087
  %1090 = vrot.lane.b32.xlu0 %v1088, 64
  %v1091 = vpop.permute.xlu0 %1090
  %v1093 = vmul.f32 %v1071, %v1091
  %1095 = vrot.lane.b32.xlu0 %v1087, 96
  %v1096 = vpop.permute.xlu0 %1095
  %1098 = vst.msk [vmem:[#allocation4] sm:$0x3] %vm118, %v1096
  %1100 = vrot.lane.b32.xlu0 %v1093, 32
  %v1101 = vpop.permute.xlu0 %1100
  %1103 = vst.msk [vmem:[#allocation3] sm:$0x3] %vm118, %v1101
  %1104 = vst.msk [vmem:[#allocation5 + $0x8] sm:$0x3] %vm118, %v1101
  %v1105 = vld [vmem:[#allocation2 + $0x8] sm:$0x30]
  %v1106 = vld [vmem:[%s236] sm:$0x3]
  %v1107 = vpack.c.bf16 %v1106, %v1106
  %v1108 = vld [vmem:[%s239] sm:$0xf]
  %v1109 = vld [vmem:[%s239 + $0x4] sm:$0xf]
  %v1110 = vld [vmem:[%s239 + $0x8] sm:$0xf]
  %v1111 = vld [vmem:[%s239 + $0xc] sm:$0xf]
  %v1116 = vunpack.c.l.b16 %v1108
  %v1117 = vunpack.c.l.b16 %v1109
  %v1118 = vunpack.c.l.b16 %v1110
  %v1119 = vunpack.c.l.b16 %v1111
  %v1120 = vpack.c.b16 %v1117, %v1116
  %v1121 = vpack.c.b16 %v1119, %v1118
  %v1125 = vsel %vm67, %v1107, 0
  %1127 = vmatprep.subr.bf16.mxu0 0
  %1128 = vmatpush1.bf16.msra.mxu0 %v1120
  %1129 = vmatprep.subr.bf16.mxu0 0
  %1130 = vmatpush1.bf16.msra.mxu0 %v1121
  %1131 = vmatprep.subr.bf16.mxu0 0
  %1132 = vmatpush1.bf16.msra.mxu0 0
  %1133 = vmatprep.subr.bf16.mxu0 0
  %1134 = vmatpush1.bf16.msra.mxu0 0
  %1135 = vmatprep.subr.bf16.mxu0 0
  %1136 = vmatpush1.bf16.msra.mxu0 0
  %1137 = vmatprep.subr.bf16.mxu0 0
  %1138 = vmatpush1.bf16.msra.mxu0 0
  %1139 = vmatprep.subr.bf16.mxu0 0
  %1140 = vmatpush1.bf16.msra.mxu0 0
  %1141 = vmatprep.subr.bf16.mxu0 0
  %1142 = vmatpush1.bf16.msra.mxu0 0
  %1143 = vmatprep.subr.bf16.mxu0 0
  %1144 = vmatpush1.bf16.msra.mxu0 0
  %1145 = vmatprep.subr.bf16.mxu0 0
  %1146 = vmatpush1.bf16.msra.mxu0 0
  %1147 = vmatprep.subr.bf16.mxu0 0
  %1148 = vmatpush1.bf16.msra.mxu0 0
  %1149 = vmatprep.subr.bf16.mxu0 0
  %1150 = vmatpush1.bf16.msra.mxu0 0
  %1151 = vmatprep.subr.bf16.mxu0 0
  %1152 = vmatpush1.bf16.msra.mxu0 0
  %1153 = vmatprep.subr.bf16.mxu0 0
  %1154 = vmatpush1.bf16.msra.mxu0 0
  %1155 = vmatprep.subr.bf16.mxu0 0
  %1156 = vmatpush1.bf16.msra.mxu0 0
  %1157 = vmatprep.subr.bf16.mxu0 0
  %1158 = vmatpush1.bf16.msra.mxu0 0
  %1159 = vmatprep.mubr.bf16.mxu0 0
  %1160 = vmatmul.mubr.bf16.gmra.mrb[0].mxu0 %v1125
  %v1161 = vpop.f32.mrb[0].mxu0
  %v1162 = vadd.f32 0.0, %v1161
  %v1163 = vpop.f32.mrb[0].mxu0
  %v1164 = vpop.f32.mrb[0].mxu0
  %v1165 = vpop.f32.mrb[0].mxu0
  %1166 = vdwg.mxu0
  %v1168 = vrot.slane %v1162, 4
  %v1170 = vadd.f32 %v1105, %v1168
  %v1171 = vsub.f32 0.0, %v1170
  %v1172 = vmul.f32 %v1171, %v128
  %v1173 = vmul.f32 %v1172, 1.442695
  %v1174 = vpow.pop %v1173
  %v1175 = vadd.f32 %v1174, 1.0
  %v1176 = vrcp.pop %v1175
  %v1177 = vmul.f32 1.0, %v1176
  %v1178 = vmul.f32 %v1177, %v128
  %v1179 = vsub.f32 %v1178, %v129
  %v1180 = vld [vmem:[%s312] sm:$0x3]
  %v1182 = vrot.slane %v1180, 4
  %1183 = vrot.lane.b32.xlu0 %v1182, 32
  %v1184 = vpop.permute.xlu0 %1183
  %v1186 = vmul.f32 %v1179, %v1184
  %1188 = vrot.lane.b32.xlu0 %v1179, 64
  %v1189 = vpop.permute.xlu0 %1188
  %v1191 = vmul.f32 %v1179, %v1189
  %1193 = vrot.lane.b32.xlu0 %v1191, 32
  %v1194 = vpop.permute.xlu0 %1193
  %v1196 = vadd.f32 %v1186, %v1194
  %v1197 = vtanh.pop %v1196
  %1199 = vrot.lane.b32.xlu0 %v1197, 64
  %v1200 = vpop.permute.xlu0 %1199
  %v1202 = vmul.f32 %v1179, %v1200
  %1204 = vrot.lane.b32.xlu0 %v1196, 96
  %v1205 = vpop.permute.xlu0 %1204
  %1207 = vst.msk [vmem:[%s312 - $0x4] sm:$0x30] %vm340, %v1205
  %1209 = vrot.lane.b32.xlu0 %v1202, 32
  %v1210 = vpop.permute.xlu0 %1209
  %1212 = vst.msk [vmem:[%s236 - $0x4] sm:$0x30] %vm340, %v1210
  %1213 = vst.msk [vmem:[#allocation6] sm:$0x30] %vm340, %v1210
  %v1214 = vld [vmem:[#allocation2 + $0x10] sm:$0xc]
  %v1215 = vld [vmem:[#allocation3] sm:$0x3]
  %v1216 = vpack.c.bf16 %v1215, %v1215
  %v1217 = vld [vmem:[%s2] sm:$0xf]
  %v1218 = vld [vmem:[%s2 + $0x4] sm:$0xf]
  %v1219 = vld [vmem:[%s2 + $0x8] sm:$0xf]
  %v1220 = vld [vmem:[%s2 + $0xc] sm:$0xf]
  %v1225 = vunpack.c.l.b16 %v1217
  %v1226 = vunpack.c.l.b16 %v1218
  %v1227 = vunpack.c.l.b16 %v1219
  %v1228 = vunpack.c.l.b16 %v1220
  %v1229 = vpack.c.b16 %v1226, %v1225
  %v1230 = vpack.c.b16 %v1228, %v1227
  %v1234 = vsel %vm67, %v1216, 0
  %1236 = vmatprep.subr.bf16.mxu0 0
  %1237 = vmatpush1.bf16.msra.mxu0 %v1229
  %1238 = vmatprep.subr.bf16.mxu0 0
  %1239 = vmatpush1.bf16.msra.mxu0 %v1230
  %1240 = vmatprep.subr.bf16.mxu0 0
  %1241 = vmatpush1.bf16.msra.mxu0 0
  %1242 = vmatprep.subr.bf16.mxu0 0
  %1243 = vmatpush1.bf16.msra.mxu0 0
  %1244 = vmatprep.subr.bf16.mxu0 0
  %1245 = vmatpush1.bf16.msra.mxu0 0
  %1246 = vmatprep.subr.bf16.mxu0 0
  %1247 = vmatpush1.bf16.msra.mxu0 0
  %1248 = vmatprep.subr.bf16.mxu0 0
  %1249 = vmatpush1.bf16.msra.mxu0 0
  %1250 = vmatprep.subr.bf16.mxu0 0
  %1251 = vmatpush1.bf16.msra.mxu0 0
  %1252 = vmatprep.subr.bf16.mxu0 0
  %1253 = vmatpush1.bf16.msra.mxu0 0
  %1254 = vmatprep.subr.bf16.mxu0 0
  %1255 = vmatpush1.bf16.msra.mxu0 0
  %1256 = vmatprep.subr.bf16.mxu0 0
  %1257 = vmatpush1.bf16.msra.mxu0 0
  %1258 = vmatprep.subr.bf16.mxu0 0
  %1259 = vmatpush1.bf16.msra.mxu0 0
  %1260 = vmatprep.subr.bf16.mxu0 0
  %1261 = vmatpush1.bf16.msra.mxu0 0
  %1262 = vmatprep.subr.bf16.mxu0 0
  %1263 = vmatpush1.bf16.msra.mxu0 0
  %1264 = vmatprep.subr.bf16.mxu0 0
  %1265 = vmatpush1.bf16.msra.mxu0 0
  %1266 = vmatprep.subr.bf16.mxu0 0
  %1267 = vmatpush1.bf16.msra.mxu0 0
  %1268 = vmatprep.mubr.bf16.mxu0 0
  %1269 = vmatmul.mubr.bf16.gmra.mrb[0].mxu0 %v1234
  %v1270 = vpop.f32.mrb[0].mxu0
  %v1271 = vadd.f32 0.0, %v1270
  %v1272 = vpop.f32.mrb[0].mxu0
  %v1273 = vpop.f32.mrb[0].mxu0
  %v1274 = vpop.f32.mrb[0].mxu0
  %1275 = vdwg.mxu0
  %v1277 = vrot.slane %v1271, 6
  %v1279 = vadd.f32 %v1214, %v1277
  %v1280 = vsub.f32 0.0, %v1279
  %v1281 = vmul.f32 %v1280, %v128
  %v1282 = vmul.f32 %v1281, 1.442695
  %v1283 = vpow.pop %v1282
  %v1284 = vadd.f32 %v1283, 1.0
  %v1285 = vrcp.pop %v1284
  %v1286 = vmul.f32 1.0, %v1285
  %v1287 = vmul.f32 %v1286, %v128
  %v1288 = vsub.f32 %v1287, %v129
  %v1289 = vld [vmem:[#allocation4] sm:$0x3]
  %v1291 = vrot.slane %v1289, 6
  %1292 = vrot.lane.b32.xlu0 %v1291, 32
  %v1293 = vpop.permute.xlu0 %1292
  %v1295 = vmul.f32 %v1288, %v1293
  %1297 = vrot.lane.b32.xlu0 %v1288, 64
  %v1298 = vpop.permute.xlu0 %1297
  %v1300 = vmul.f32 %v1288, %v1298
  %1302 = vrot.lane.b32.xlu0 %v1300, 32
  %v1303 = vpop.permute.xlu0 %1302
  %v1305 = vadd.f32 %v1295, %v1303
  %v1306 = vtanh.pop %v1305
  %1308 = vrot.lane.b32.xlu0 %v1306, 64
  %v1309 = vpop.permute.xlu0 %1308
  %v1311 = vmul.f32 %v1288, %v1309
  %1313 = vrot.lane.b32.xlu0 %v1305, 96
  %v1314 = vpop.permute.xlu0 %1313
  %1316 = vst.msk [vmem:[#allocation4 - $0x2] sm:$0xc] %vm450, %v1314
  %1318 = vrot.lane.b32.xlu0 %v1311, 32
  %v1319 = vpop.permute.xlu0 %1318
  %1321 = vst.msk [vmem:[#allocation3 - $0x2] sm:$0xc] %vm450, %v1319
  %1322 = vst.msk [vmem:[#allocation5 + $0x8] sm:$0xc] %vm450, %v1319
  %v1323 = vld [vmem:[#allocation2 + $0x8] sm:$0xc]
  %v1324 = vld [vmem:[%s236] sm:$0x3]
  %v1325 = vpack.c.bf16 %v1324, %v1324
  %v1326 = vld [vmem:[%s239] sm:$0xf]
  %v1327 = vld [vmem:[%s239 + $0x4] sm:$0xf]
  %v1328 = vld [vmem:[%s239 + $0x8] sm:$0xf]
  %v1329 = vld [vmem:[%s239 + $0xc] sm:$0xf]
  %v1334 = vunpack.c.l.b16 %v1326
  %v1335 = vunpack.c.l.b16 %v1327
  %v1336 = vunpack.c.l.b16 %v1328
  %v1337 = vunpack.c.l.b16 %v1329
  %v1338 = vpack.c.b16 %v1335, %v1334
  %v1339 = vpack.c.b16 %v1337, %v1336
  %v1343 = vsel %vm67, %v1325, 0
  %1345 = vmatprep.subr.bf16.mxu0 0
  %1346 = vmatpush1.bf16.msra.mxu0 %v1338
  %1347 = vmatprep.subr.bf16.mxu0 0
  %1348 = vmatpush1.bf16.msra.mxu0 %v1339
  %1349 = vmatprep.subr.bf16.mxu0 0
  %1350 = vmatpush1.bf16.msra.mxu0 0
  %1351 = vmatprep.subr.bf16.mxu0 0
  %1352 = vmatpush1.bf16.msra.mxu0 0
  %1353 = vmatprep.subr.bf16.mxu0 0
  %1354 = vmatpush1.bf16.msra.mxu0 0
  %1355 = vmatprep.subr.bf16.mxu0 0
  %1356 = vmatpush1.bf16.msra.mxu0 0
  %1357 = vmatprep.subr.bf16.mxu0 0
  %1358 = vmatpush1.bf16.msra.mxu0 0
  %1359 = vmatprep.subr.bf16.mxu0 0
  %1360 = vmatpush1.bf16.msra.mxu0 0
  %1361 = vmatprep.subr.bf16.mxu0 0
  %1362 = vmatpush1.bf16.msra.mxu0 0
  %1363 = vmatprep.subr.bf16.mxu0 0
  %1364 = vmatpush1.bf16.msra.mxu0 0
  %1365 = vmatprep.subr.bf16.mxu0 0
  %1366 = vmatpush1.bf16.msra.mxu0 0
  %1367 = vmatprep.subr.bf16.mxu0 0
  %1368 = vmatpush1.bf16.msra.mxu0 0
  %1369 = vmatprep.subr.bf16.mxu0 0
  %1370 = vmatpush1.bf16.msra.mxu0 0
  %1371 = vmatprep.subr.bf16.mxu0 0
  %1372 = vmatpush1.bf16.msra.mxu0 0
  %1373 = vmatprep.subr.bf16.mxu0 0
  %1374 = vmatpush1.bf16.msra.mxu0 0
  %1375 = vmatprep.subr.bf16.mxu0 0
  %1376 = vmatpush1.bf16.msra.mxu0 0
  %1377 = vmatprep.mubr.bf16.mxu0 0
  %1378 = vmatmul.mubr.bf16.gmra.mrb[0].mxu0 %v1343
  %v1379 = vpop.f32.mrb[0].mxu0
  %v1380 = vadd.f32 0.0, %v1379
  %v1381 = vpop.f32.mrb[0].mxu0
  %v1382 = vpop.f32.mrb[0].mxu0
  %v1383 = vpop.f32.mrb[0].mxu0
  %1384 = vdwg.mxu0
  %v1386 = vrot.slane %v1380, 6
  %v1388 = vadd.f32 %v1323, %v1386
  %v1389 = vsub.f32 0.0, %v1388
  %v1390 = vmul.f32 %v1389, %v128
  %v1391 = vmul.f32 %v1390, 1.442695
  %v1392 = vpow.pop %v1391
  %v1393 = vadd.f32 %v1392, 1.0
  %v1394 = vrcp.pop %v1393
  %v1395 = vmul.f32 1.0, %v1394
  %v1396 = vmul.f32 %v1395, %v128
  %v1397 = vsub.f32 %v1396, %v129
  %v1398 = vld [vmem:[%s312] sm:$0x3]
  %v1400 = vrot.slane %v1398, 6
  %1401 = vrot.lane.b32.xlu0 %v1400, 32
  %v1402 = vpop.permute.xlu0 %1401
  %v1404 = vmul.f32 %v1397, %v1402
  %1406 = vrot.lane.b32.xlu0 %v1397, 64
  %v1407 = vpop.permute.xlu0 %1406
  %v1409 = vmul.f32 %v1397, %v1407
  %1411 = vrot.lane.b32.xlu0 %v1409, 32
  %v1412 = vpop.permute.xlu0 %1411
  %v1414 = vadd.f32 %v1404, %v1412
  %v1415 = vtanh.pop %v1414
  %1417 = vrot.lane.b32.xlu0 %v1415, 64
  %v1418 = vpop.permute.xlu0 %1417
  %v1420 = vmul.f32 %v1397, %v1418
  %1422 = vrot.lane.b32.xlu0 %v1414, 96
  %v1423 = vpop.permute.xlu0 %1422
  %1425 = vst.msk [vmem:[%s312 - $0x2] sm:$0xc] %vm450, %v1423
  %1427 = vrot.lane.b32.xlu0 %v1420, 32
  %v1428 = vpop.permute.xlu0 %1427
  %1430 = vst.msk [vmem:[%s236 - $0x2] sm:$0xc] %vm450, %v1428
  %1431 = vst.msk [vmem:[#allocation6] sm:$0xc] %vm450, %v1428
  %v1432 = vld [vmem:[#allocation2 + $0x10] sm:$0x30]
  %v1433 = vld [vmem:[#allocation3] sm:$0x3]
  %v1434 = vpack.c.bf16 %v1433, %v1433
  %v1435 = vld [vmem:[%s2] sm:$0xf]
  %v1436 = vld [vmem:[%s2 + $0x4] sm:$0xf]
  %v1437 = vld [vmem:[%s2 + $0x8] sm:$0xf]
  %v1438 = vld [vmem:[%s2 + $0xc] sm:$0xf]
  %v1443 = vunpack.c.l.b16 %v1435
  %v1444 = vunpack.c.l.b16 %v1436
  %v1445 = vunpack.c.l.b16 %v1437
  %v1446 = vunpack.c.l.b16 %v1438
  %v1447 = vpack.c.b16 %v1444, %v1443
  %v1448 = vpack.c.b16 %v1446, %v1445
  %v1452 = vsel %vm67, %v1434, 0
  %1454 = vmatprep.subr.bf16.mxu0 0
  %1455 = vmatpush1.bf16.msra.mxu0 %v1447
  %1456 = vmatprep.subr.bf16.mxu0 0
  %1457 = vmatpush1.bf16.msra.mxu0 %v1448
  %1458 = vmatprep.subr.bf16.mxu0 0
  %1459 = vmatpush1.bf16.msra.mxu0 0
  %1460 = vmatprep.subr.bf16.mxu0 0
  %1461 = vmatpush1.bf16.msra.mxu0 0
  %1462 = vmatprep.subr.bf16.mxu0 0
  %1463 = vmatpush1.bf16.msra.mxu0 0
  %1464 = vmatprep.subr.bf16.mxu0 0
  %1465 = vmatpush1.bf16.msra.mxu0 0
  %1466 = vmatprep.subr.bf16.mxu0 0
  %1467 = vmatpush1.bf16.msra.mxu0 0
  %1468 = vmatprep.subr.bf16.mxu0 0
  %1469 = vmatpush1.bf16.msra.mxu0 0
  %1470 = vmatprep.subr.bf16.mxu0 0
  %1471 = vmatpush1.bf16.msra.mxu0 0
  %1472 = vmatprep.subr.bf16.mxu0 0
  %1473 = vmatpush1.bf16.msra.mxu0 0
  %1474 = vmatprep.subr.bf16.mxu0 0
  %1475 = vmatpush1.bf16.msra.mxu0 0
  %1476 = vmatprep.subr.bf16.mxu0 0
  %1477 = vmatpush1.bf16.msra.mxu0 0
  %1478 = vmatprep.subr.bf16.mxu0 0
  %1479 = vmatpush1.bf16.msra.mxu0 0
  %1480 = vmatprep.subr.bf16.mxu0 0
  %1481 = vmatpush1.bf16.msra.mxu0 0
  %1482 = vmatprep.subr.bf16.mxu0 0
  %1483 = vmatpush1.bf16.msra.mxu0 0
  %1484 = vmatprep.subr.bf16.mxu0 0
  %1485 = vmatpush1.bf16.msra.mxu0 0
  %1486 = vmatprep.mubr.bf16.mxu0 0
  %1487 = vmatmul.mubr.bf16.gmra.mrb[0].mxu0 %v1452
  %v1488 = vpop.f32.mrb[0].mxu0
  %v1489 = vadd.f32 0.0, %v1488
  %v1490 = vpop.f32.mrb[0].mxu0
  %v1491 = vpop.f32.mrb[0].mxu0
  %v1492 = vpop.f32.mrb[0].mxu0
  %1493 = vdwg.mxu0
  %v1495 = vrot.slane %v1489, 4
  %v1497 = vadd.f32 %v1432, %v1495
  %v1498 = vsub.f32 0.0, %v1497
  %v1499 = vmul.f32 %v1498, %v128
  %v1500 = vmul.f32 %v1499, 1.442695
  %v1501 = vpow.pop %v1500
  %v1502 = vadd.f32 %v1501, 1.0
  %v1503 = vrcp.pop %v1502
  %v1504 = vmul.f32 1.0, %v1503
  %v1505 = vmul.f32 %v1504, %v128
  %v1506 = vsub.f32 %v1505, %v129
  %v1507 = vld [vmem:[#allocation4] sm:$0x3]
  %v1509 = vrot.slane %v1507, 4
  %1510 = vrot.lane.b32.xlu0 %v1509, 32
  %v1511 = vpop.permute.xlu0 %1510
  %v1513 = vmul.f32 %v1506, %v1511
  %1515 = vrot.lane.b32.xlu0 %v1506, 64
  %v1516 = vpop.permute.xlu0 %1515
  %v1518 = vmul.f32 %v1506, %v1516
  %1520 = vrot.lane.b32.xlu0 %v1518, 32
  %v1521 = vpop.permute.xlu0 %1520
  %v1523 = vadd.f32 %v1513, %v1521
  %v1524 = vtanh.pop %v1523
  %1526 = vrot.lane.b32.xlu0 %v1524, 64
  %v1527 = vpop.permute.xlu0 %1526
  %v1529 = vmul.f32 %v1506, %v1527
  %1531 = vrot.lane.b32.xlu0 %v1523, 96
  %v1532 = vpop.permute.xlu0 %1531
  %1534 = vst.msk [vmem:[#allocation4 - $0x4] sm:$0x30] %vm340, %v1532
  %1536 = vrot.lane.b32.xlu0 %v1529, 32
  %v1537 = vpop.permute.xlu0 %1536
  %1539 = vst.msk [vmem:[#allocation3 - $0x4] sm:$0x30] %vm340, %v1537
  %1540 = vst.msk [vmem:[#allocation5 + $0x8] sm:$0x30] %vm340, %v1537
  %v1541 = vld [vmem:[#allocation2 + $0x8] sm:$0x3]
  %v1542 = vld [vmem:[%s236] sm:$0x3]
  %v1543 = vpack.c.bf16 %v1542, %v1542
  %v1544 = vld [vmem:[%s239] sm:$0xf]
  %v1545 = vld [vmem:[%s239 + $0x4] sm:$0xf]
  %v1546 = vld [vmem:[%s239 + $0x8] sm:$0xf]
  %v1547 = vld [vmem:[%s239 + $0xc] sm:$0xf]
  %v1552 = vunpack.c.l.b16 %v1544
  %v1553 = vunpack.c.l.b16 %v1545
  %v1554 = vunpack.c.l.b16 %v1546
  %v1555 = vunpack.c.l.b16 %v1547
  %v1556 = vpack.c.b16 %v1553, %v1552
  %v1557 = vpack.c.b16 %v1555, %v1554
  %v1561 = vsel %vm67, %v1543, 0
  %1563 = vmatprep.subr.bf16.mxu0 0
  %1564 = vmatpush1.bf16.msra.mxu0 %v1556
  %1565 = vmatprep.subr.bf16.mxu0 0
  %1566 = vmatpush1.bf16.msra.mxu0 %v1557
  %1567 = vmatprep.subr.bf16.mxu0 0
  %1568 = vmatpush1.bf16.msra.mxu0 0
  %1569 = vmatprep.subr.bf16.mxu0 0
  %1570 = vmatpush1.bf16.msra.mxu0 0
  %1571 = vmatprep.subr.bf16.mxu0 0
  %1572 = vmatpush1.bf16.msra.mxu0 0
  %1573 = vmatprep.subr.bf16.mxu0 0
  %1574 = vmatpush1.bf16.msra.mxu0 0
  %1575 = vmatprep.subr.bf16.mxu0 0
  %1576 = vmatpush1.bf16.msra.mxu0 0
  %1577 = vmatprep.subr.bf16.mxu0 0
  %1578 = vmatpush1.bf16.msra.mxu0 0
  %1579 = vmatprep.subr.bf16.mxu0 0
  %1580 = vmatpush1.bf16.msra.mxu0 0
  %1581 = vmatprep.subr.bf16.mxu0 0
  %1582 = vmatpush1.bf16.msra.mxu0 0
  %1583 = vmatprep.subr.bf16.mxu0 0
  %1584 = vmatpush1.bf16.msra.mxu0 0
  %1585 = vmatprep.subr.bf16.mxu0 0
  %1586 = vmatpush1.bf16.msra.mxu0 0
  %1587 = vmatprep.subr.bf16.mxu0 0
  %1588 = vmatpush1.bf16.msra.mxu0 0
  %1589 = vmatprep.subr.bf16.mxu0 0
  %1590 = vmatpush1.bf16.msra.mxu0 0
  %1591 = vmatprep.subr.bf16.mxu0 0
  %1592 = vmatpush1.bf16.msra.mxu0 0
  %1593 = vmatprep.subr.bf16.mxu0 0
  %1594 = vmatpush1.bf16.msra.mxu0 0
  %1595 = vmatprep.mubr.bf16.mxu0 0
  %1596 = vmatmul.mubr.bf16.gmra.mrb[0].mxu0 %v1561
  %v1597 = vpop.f32.mrb[0].mxu0
  %v1598 = vadd.f32 0.0, %v1597
  %v1599 = vpop.f32.mrb[0].mxu0
  %v1600 = vpop.f32.mrb[0].mxu0
  %v1601 = vpop.f32.mrb[0].mxu0
  %1602 = vdwg.mxu0
  %v1603 = vadd.f32 %v1541, %v1598
  %v1604 = vsub.f32 0.0, %v1603
  %v1605 = vmul.f32 %v1604, %v128
  %v1606 = vmul.f32 %v1605, 1.442695
  %v1607 = vpow.pop %v1606
  %v1608 = vadd.f32 %v1607, 1.0
  %v1609 = vrcp.pop %v1608
  %v1610 = vmul.f32 1.0, %v1609
  %v1611 = vmul.f32 %v1610, %v128
  %v1612 = vsub.f32 %v1611, %v129
  %v1613 = vld [vmem:[%s312] sm:$0x3]
  %1615 = vrot.lane.b32.xlu0 %v1613, 32
  %v1616 = vpop.permute.xlu0 %1615
  %v1618 = vmul.f32 %v1612, %v1616
  %1620 = vrot.lane.b32.xlu0 %v1612, 64
  %v1621 = vpop.permute.xlu0 %1620
  %v1623 = vmul.f32 %v1612, %v1621
  %1625 = vrot.lane.b32.xlu0 %v1623, 32
  %v1626 = vpop.permute.xlu0 %1625
  %v1628 = vadd.f32 %v1618, %v1626
  %v1629 = vtanh.pop %v1628
  %1631 = vrot.lane.b32.xlu0 %v1629, 64
  %v1632 = vpop.permute.xlu0 %1631
  %v1634 = vmul.f32 %v1612, %v1632
  %1636 = vrot.lane.b32.xlu0 %v1628, 96
  %v1637 = vpop.permute.xlu0 %1636
  %1639 = vst.msk [vmem:[%s312] sm:$0x3] %vm118, %v1637
  %1641 = vrot.lane.b32.xlu0 %v1634, 32
  %v1642 = vpop.permute.xlu0 %1641
  %1644 = vst.msk [vmem:[%s236] sm:$0x3] %vm118, %v1642
  %1645 = vst.msk [vmem:[#allocation6] sm:$0x3] %vm118, %v1642
  %v1646 = vld [vmem:[#allocation5] sm:$0xff]
  %v1647 = vld [vmem:[#allocation5 + $0x8] sm:$0x3f]
  %v1648 = vpack.c.bf16 %v1647, %v1646
  %v1649 = vld [vmem:[%s4] sm:$0xf]
  %v1650 = vld [vmem:[%s4 + $0x4] sm:$0xf]
  %v1651 = vld [vmem:[%s4 + $0x8] sm:$0xf]
  %v1652 = vld [vmem:[%s4 + $0xc] sm:$0xf]
  %v1653 = vld [vmem:[#allocation6] sm:$0xff]
  %v1654 = vld [vmem:[#allocation6 + $0x8] sm:$0x3f]
  %v1655 = vpack.c.bf16 %v1654, %v1653
  %s1656 = scalar_lea.vmem %s4, 16
  %v1657 = vld [vmem:[%s1656] sm:$0xf]
  %v1658 = vld [vmem:[%s1656 + $0x4] sm:$0xf]
  %v1659 = vld [vmem:[%s1656 + $0x8] sm:$0xf]
  %v1660 = vld [vmem:[%s1656 + $0xc] sm:$0xf]
  %v1665 = vunpack.c.l.b16 %v1657
  %v1666 = vunpack.c.l.b16 %v1658
  %v1667 = vunpack.c.l.b16 %v1659
  %v1668 = vunpack.c.l.b16 %v1660
  %v1669 = vpack.c.b16 %v1666, %v1665
  %v1670 = vpack.c.b16 %v1668, %v1667
  %v1674 = vsel %vm67, %v1655, 0
  %1676 = vmatprep.subr.bf16.mxu0 0
  %1677 = vmatpush1.bf16.msra.mxu0 %v1669
  %1678 = vmatprep.subr.bf16.mxu0 0
  %1679 = vmatpush1.bf16.msra.mxu0 %v1670
  %1680 = vmatprep.subr.bf16.mxu0 0
  %1681 = vmatpush1.bf16.msra.mxu0 0
  %1682 = vmatprep.subr.bf16.mxu0 0
  %1683 = vmatpush1.bf16.msra.mxu0 0
  %1684 = vmatprep.subr.bf16.mxu0 0
  %1685 = vmatpush1.bf16.msra.mxu0 0
  %1686 = vmatprep.subr.bf16.mxu0 0
  %1687 = vmatpush1.bf16.msra.mxu0 0
  %1688 = vmatprep.subr.bf16.mxu0 0
  %1689 = vmatpush1.bf16.msra.mxu0 0
  %1690 = vmatprep.subr.bf16.mxu0 0
  %1691 = vmatpush1.bf16.msra.mxu0 0
  %1692 = vmatprep.subr.bf16.mxu0 0
  %1693 = vmatpush1.bf16.msra.mxu0 0
  %1694 = vmatprep.subr.bf16.mxu0 0
  %1695 = vmatpush1.bf16.msra.mxu0 0
  %1696 = vmatprep.subr.bf16.mxu0 0
  %1697 = vmatpush1.bf16.msra.mxu0 0
  %1698 = vmatprep.subr.bf16.mxu0 0
  %1699 = vmatpush1.bf16.msra.mxu0 0
  %1700 = vmatprep.subr.bf16.mxu0 0
  %1701 = vmatpush1.bf16.msra.mxu0 0
  %1702 = vmatprep.subr.bf16.mxu0 0
  %1703 = vmatpush1.bf16.msra.mxu0 0
  %1704 = vmatprep.subr.bf16.mxu0 0
  %1705 = vmatpush1.bf16.msra.mxu0 0
  %1706 = vmatprep.subr.bf16.mxu0 0
  %1707 = vmatpush1.bf16.msra.mxu0 0
  %1708 = vmatprep.mubr.bf16.mxu0 0
  %1709 = vmatmul.mubr.bf16.gmra.mrb[0].mxu0 %v1674
  %v1710 = vpop.f32.mrb[0].mxu0
  %v1711 = vadd.f32 0.0, %v1710
  %v1712 = vpop.f32.mrb[0].mxu0
  %v1713 = vpop.f32.mrb[0].mxu0
  %v1714 = vadd.f32 0.0, %v1713
  %v1715 = vpop.f32.mrb[0].mxu0
  %1716 = vdwg.mxu0
  %v1721 = vunpack.c.l.b16 %v1649
  %v1722 = vunpack.c.l.b16 %v1650
  %v1723 = vunpack.c.l.b16 %v1651
  %v1724 = vunpack.c.l.b16 %v1652
  %v1725 = vpack.c.b16 %v1722, %v1721
  %v1726 = vpack.c.b16 %v1724, %v1723
  %v1730 = vsel %vm67, %v1648, 0
  %1732 = vmatprep.subr.bf16.mxu0 0
  %1733 = vmatpush1.bf16.msra.mxu0 %v1725
  %1734 = vmatprep.subr.bf16.mxu0 0
  %1735 = vmatpush1.bf16.msra.mxu0 %v1726
  %1736 = vmatprep.subr.bf16.mxu0 0
  %1737 = vmatpush1.bf16.msra.mxu0 0
  %1738 = vmatprep.subr.bf16.mxu0 0
  %1739 = vmatpush1.bf16.msra.mxu0 0
  %1740 = vmatprep.subr.bf16.mxu0 0
  %1741 = vmatpush1.bf16.msra.mxu0 0
  %1742 = vmatprep.subr.bf16.mxu0 0
  %1743 = vmatpush1.bf16.msra.mxu0 0
  %1744 = vmatprep.subr.bf16.mxu0 0
  %1745 = vmatpush1.bf16.msra.mxu0 0
  %1746 = vmatprep.subr.bf16.mxu0 0
  %1747 = vmatpush1.bf16.msra.mxu0 0
  %1748 = vmatprep.subr.bf16.mxu0 0
  %1749 = vmatpush1.bf16.msra.mxu0 0
  %1750 = vmatprep.subr.bf16.mxu0 0
  %1751 = vmatpush1.bf16.msra.mxu0 0
  %1752 = vmatprep.subr.bf16.mxu0 0
  %1753 = vmatpush1.bf16.msra.mxu0 0
  %1754 = vmatprep.subr.bf16.mxu0 0
  %1755 = vmatpush1.bf16.msra.mxu0 0
  %1756 = vmatprep.subr.bf16.mxu0 0
  %1757 = vmatpush1.bf16.msra.mxu0 0
  %1758 = vmatprep.subr.bf16.mxu0 0
  %1759 = vmatpush1.bf16.msra.mxu0 0
  %1760 = vmatprep.subr.bf16.mxu0 0
  %1761 = vmatpush1.bf16.msra.mxu0 0
  %1762 = vmatprep.subr.bf16.mxu0 0
  %1763 = vmatpush1.bf16.msra.mxu0 0
  %1764 = vmatprep.mubr.bf16.mxu0 0
  %1765 = vmatmul.mubr.bf16.gmra.mrb[0].mxu0 %v1730
  %v1766 = vpop.f32.mrb[0].mxu0
  %v1767 = vadd.f32 %v1711, %v1766
  %v1768 = vpop.f32.mrb[0].mxu0
  %v1769 = vpop.f32.mrb[0].mxu0
  %v1770 = vadd.f32 %v1714, %v1769
  %v1771 = vpop.f32.mrb[0].mxu0
  %1772 = vdwg.mxu0
  %v1773 = vld [vmem:[%s5] sm:$0x1]
  %v1775 = vlaneseq
  %v1776 = vshrl.u32 %v1775, 7
  %v1777 = vsub.s32 0, %v1776
  %v1778 = vrot.slane %v1773, %v1777
  %v1780 = vadd.f32 %v1767, %v1778
  %v1781 = vadd.f32 %v1770, %v1778
  %1782 = vst.msk [vmem:[%s6] sm:$0xff] %vm67, %v1780
  %vm1783 = vcmask 259072
  %1784 = vst.msk [vmem:[%s6 + $0x8] sm:$0x3f] %vm1783, %v1781
  // Predicated region
  $region26: #{encoder_forward.16} parent=0 // pred_check
    _
  $region27: #{encoder_forward.16} parent=0 // pred_check_branch
    %1786 = sbr.rel (0) target = $region29
  $region28: #{encoder_forward.16} parent=0 // pred_region
    _
  $region29: #{encoder_forward.16} parent=0 // pred_fallthru
    _
  // Predicated region
  $region30: #{encoder_forward.16} parent=0 // pred_check
    _
  $region31: #{encoder_forward.16} parent=0 // pred_check_branch
    %1788 = sbr.rel (0) target = $region33
  $region32: #{encoder_forward.16} parent=0 // pred_region
    _
  $region33: #{encoder_forward.16} parent=0 // pred_fallthru
    _

</llo_original>
